<compile_context>
chip_gen: v7x
topology: tpu7x:2x2x1
jax: 0.10.0
libtpu: 0.0.40
codegen_flags: <defaults>
</compile_context>

<pallas_src>
import math
from functools import partial

import numpy as np
import jax
import jax.numpy as jnp
from jax import lax
from jax.experimental import pallas as pl
from jax.experimental.pallas import tpu as pltpu


# ----------------------------------------------------------------------------
# Fused EncoderLayer kernel: one grid point = block_b batch elements.
# ----------------------------------------------------------------------------
def _encoder_layer_kernel(x_ref, wqkv_ref, bqkv_ref, wo_ref, bo_ref,
                          ln1_g_ref, ln1_b_ref, w1_ref, b1_ref,
                          w2_ref, b2_ref, ln2_g_ref, ln2_b_ref,
                          out_ref, qkv_scr, attn_scr,
                          *, num_heads, head_dim, eps):
    """Block views:
      x_ref   : (Bt, S, E) f32   Bt batch elements per grid step
      wqkv_ref: (E, 3E)  bf16/f32  block-diag per-head Wq|Wk|Wv, pre-transposed
      bqkv_ref: (1, 3E)  f32
      wo_ref  : (E, E)   bf16/f32  W_o^T
      bo_ref  : (1, E)   f32
      ln*_g/b : (1, E)   f32       LayerNorm gamma/beta
      w1_ref  : (E, F)   bf16/f32  FFN W1^T     b1_ref: (1, F) f32
      w2_ref  : (F, E)   bf16/f32  FFN W2^T     b2_ref: (1, E) f32
      out_ref : (Bt, S, E) f32
      qkv_scr : VMEM (Bt*S, 3E) f32 scratch (fused QKV, lane-dense store)
      attn_scr: VMEM (Bt*S, E)  f32 scratch (attention output, lane-dense store)
    """
    H, hd = num_heads, head_dim
    Bt, S, E = x_ref.shape
    cdt = wqkv_ref.dtype                      # matmul operand dtype (bf16 perf mode)
    exact = jnp.dtype(cdt) == jnp.dtype(jnp.float32)
    c = lambda a: a.astype(cdt)               # cast only at MXU inputs
    inv_sqrt_hd = 1.0 / math.sqrt(hd)

    # flatten Bt sequences into one [Bt*S, E] slab -> taller matmul M
    xf = x_ref[...].reshape(Bt * S, E)                                 # f32

    # ---- fused Q/K/V projection: single [Bt*S,E]@[E,3E] MXU matmul ---------
    qkv_scr[...] = (jnp.dot(c(xf), wqkv_ref[...],
                            preferred_element_type=jnp.float32)
                    + bqkv_ref[...])

    # ---- per (batch, head) attention; W_o folded into the head loop --------
    for b in range(Bt):
        r0, r1 = b * S, (b + 1) * S
        acc_b = jnp.zeros((S, E), jnp.float32)
        for h in range(H):
            lo, hi = h * hd, (h + 1) * hd
            # 1/sqrt(hd) folded into q ([S,hd]) instead of the [S,S] scores
            q_h = qkv_scr[r0:r1, lo:hi] * inv_sqrt_hd
            k_h = qkv_scr[r0:r1, E + lo:E + hi]
            v_h = qkv_scr[r0:r1, 2 * E + lo:2 * E + hi]

            # contract last dims directly -- no explicit k.T (no XLU transpose)
            s = lax.dot_general(c(q_h), c(k_h), (((1,), (1,)), ((), ())),
                                preferred_element_type=jnp.float32)    # [S,S]
            m = jnp.max(s, axis=-1, keepdims=True)
            e = jnp.exp(s - m)
            denom = jnp.sum(e, axis=-1, keepdims=True)
            # EUP reciprocal in bf16 perf mode; exact in f32 parity mode
            p = e * pl.reciprocal(denom, approx=not exact)
            pv = jnp.dot(c(p), c(v_h), preferred_element_type=jnp.float32)
            # fold this head's rows of W_o^T: no lane-sliced scratch store
            acc_b = acc_b + jnp.dot(c(pv), wo_ref[lo:hi, :],
                                    preferred_element_type=jnp.float32)
        attn_scr[r0:r1, :] = acc_b                       # full-lane-width store

    attn = attn_scr[...] + bo_ref[...]

    # dropout1: identity at inference
    # ---- residual + LayerNorm 1 (f32) ---------------------------------------
    h1 = attn + xf
    mu1 = jnp.mean(h1, axis=-1, keepdims=True)
    var1 = jnp.mean((h1 - mu1) ** 2, axis=-1, keepdims=True)
    y1 = (h1 - mu1) * lax.rsqrt(var1 + eps)
    y1 = ln1_g_ref[...] * y1 + ln1_b_ref[...]

    # ---- FeedForward: Linear -> ReLU -> (dropout=id) -> Linear --------------
    f = (jnp.dot(c(y1), w1_ref[...], preferred_element_type=jnp.float32)
         + b1_ref[...])
    f = jnp.maximum(f, 0.0)
    f = (jnp.dot(c(f), w2_ref[...], preferred_element_type=jnp.float32)
         + b2_ref[...])

    # dropout2: identity at inference
    # ---- residual + LayerNorm 2 (f32) ---------------------------------------
    h2 = f + y1
    mu2 = jnp.mean(h2, axis=-1, keepdims=True)
    var2 = jnp.mean((h2 - mu2) ** 2, axis=-1, keepdims=True)
    y2 = (h2 - mu2) * lax.rsqrt(var2 + eps)
    y2 = ln2_g_ref[...] * y2 + ln2_b_ref[...]

    out_ref[...] = y2.reshape(Bt, S, E)


def _vmem_limit_bytes():
    """Generation-aware VMEM budget (v7x: 64 MiB physical, v5e/v6e: 128 MiB)."""
    try:
        cap = int(pltpu.get_tpu_info().vmem_capacity_bytes)
    except Exception:
        cap = 64 * 1024 * 1024
    return int(min(cap * 3 // 4, 100 * 1024 * 1024))


def _pick_block_b(B, S, target_rows=256):
    """Pick how many sequences to process per grid step: raise the matmul M
    toward ~256 rows (MXU height on v6e/v7x) while keeping >=2 grid points
    (megacore / pipelining) when that still gives a reasonably tall M."""
    divs = [d for d in range(1, B + 1) if B % d == 0]
    best = max([d for d in divs if d * S <= target_rows], default=1)
    if B // best < 2:
        alts = [d for d in divs if B // d >= 2 and d * S >= 128]
        if alts:
            best = max(alts)
    return best


def encoder_layer(x, lp, *, num_heads, eps=1e-5, block_b=None):
    """x: [B, S, E] float32. lp: prepped (pre-transposed / fused) layer params."""
    B, S, E = x.shape
    hd = E // num_heads
    F = lp["w1_t"].shape[1]
    if block_b is None:
        block_b = _pick_block_b(B, S)
    assert B % block_b == 0
    nb = B // block_b
    rows = block_b * S

    kernel = partial(_encoder_layer_kernel,
                     num_heads=num_heads, head_dim=hd, eps=eps)
    per_b = lambda i: (i, 0, 0)            # activations: one batch chunk per step

    def build(single_buffer_weights):
        def wspec(shape):
            # weights/biases: constant block index -> resident in VMEM
            idx = lambda i, _shape=shape: tuple(0 for _ in _shape)
            if single_buffer_weights:
                return pl.BlockSpec(shape, idx, pipeline_mode=pl.Buffered(1))
            return pl.BlockSpec(shape, idx)

        return pl.pallas_call(
            kernel,
            out_shape=jax.ShapeDtypeStruct((B, S, E), jnp.float32),
            grid_spec=pltpu.PrefetchScalarGridSpec(
                num_scalar_prefetch=0,
                grid=(nb,),
                in_specs=[
                    pl.BlockSpec((block_b, S, E), per_b),   # x
                    wspec((E, 3 * E)),                      # fused block-diag QKV^T
                    wspec((1, 3 * E)),                      # fused QKV bias
                    wspec((E, E)),                          # W_o^T
                    wspec((1, E)),                          # b_o
                    wspec((1, E)),                          # LN1 gamma
                    wspec((1, E)),                          # LN1 beta
                    wspec((E, F)),                          # FFN W1^T
                    wspec((1, F)),                          # FFN b1
                    wspec((F, E)),                          # FFN W2^T
                    wspec((1, E)),                          # FFN b2
                    wspec((1, E)),                          # LN2 gamma
                    wspec((1, E)),                          # LN2 beta
                ],
                out_specs=pl.BlockSpec((block_b, S, E), per_b),
                scratch_shapes=[
                    pltpu.VMEM((rows, 3 * E), jnp.float32),   # fused qkv
                    pltpu.VMEM((rows, E), jnp.float32),       # attention output
                ],
            ),
            compiler_params=pltpu.CompilerParams(
                dimension_semantics=("parallel",),
                vmem_limit_bytes=_vmem_limit_bytes(),
            ),
        )

    args = (x, lp["wqkv_t"], lp["bqkv"], lp["wo_t"], lp["bo"],
            lp["ln1_g"], lp["ln1_b"], lp["w1_t"], lp["b1"],
            lp["w2_t"], lp["b2"], lp["ln2_g"], lp["ln2_b"])
    try:
        return build(True)(*args)
    except Exception:
        # this jax build rejects pipeline_mode=pl.Buffered(1); fall back to
        # default double-buffered weight specs (correctness unchanged).
        return build(False)(*args)


# ----------------------------------------------------------------------------
# Parameter prep (one-time glue): fuse per-head Q/K/V Linears into one
# block-diagonal [E, 3E] matrix; pre-transpose everything so kernels compute
# x @ W directly; weight matrices cast to the MXU operand dtype (bf16 default).
# ----------------------------------------------------------------------------
def _block_diag_linear_t(w):
    """w: [H, hd, hd] PyTorch Linear weights (out, in) per head.
    Returns W_t [E, E] with x @ W_t == concat_h(x[:, h-slice] @ w[h].T)."""
    H, hd, _ = w.shape
    eye = jnp.eye(H, dtype=w.dtype)
    return jnp.einsum("hoi,hg->higo", w, eye).reshape(H * hd, H * hd)


def prep_layer_params(raw, num_heads, matmul_dtype=jnp.bfloat16):
    E = raw["wo"].shape[0]
    wq_t = _block_diag_linear_t(raw["wq"])
    wk_t = _block_diag_linear_t(raw["wk"])
    wv_t = _block_diag_linear_t(raw["wv"])
    wqkv_t = jnp.concatenate([wq_t, wk_t, wv_t], axis=1)             # [E, 3E]
    bqkv = jnp.concatenate([raw["bq"].reshape(E), raw["bk"].reshape(E),
                            raw["bv"].reshape(E)]).reshape(1, 3 * E)
    return dict(
        wqkv_t=wqkv_t.astype(matmul_dtype), bqkv=bqkv,
        wo_t=raw["wo"].T.astype(matmul_dtype), bo=raw["bo"].reshape(1, E),
        ln1_g=raw["gamma1"].reshape(1, E), ln1_b=raw["beta1"].reshape(1, E),
        w1_t=raw["w1"].T.astype(matmul_dtype), b1=raw["b1"].reshape(1, -1),
        w2_t=raw["w2"].T.astype(matmul_dtype), b2=raw["b2"].reshape(1, E),
        ln2_g=raw["gamma2"].reshape(1, E), ln2_b=raw["beta2"].reshape(1, E),
    )


def _positional_encoding(seq_len, emb_dim):
    position = np.arange(seq_len)[:, np.newaxis]
    div_term = np.exp(np.arange(0, emb_dim, 2) * -(np.log(10000.0) / emb_dim))
    pe = np.zeros((seq_len, emb_dim), dtype=np.float32)
    pe[:, 0::2] = np.sin(position * div_term)
    pe[:, 1::2] = np.cos(position * div_term)
    return jnp.asarray(pe)[None]                                     # [1, S, E]


def transformer_encoder(x, layer_params, *, num_heads, pos_enc=True, block_b=None):
    """Matches TransformerEncoder.forward: optional positional encoding, then
    the stack of EncoderLayers (flatten/output_layer/sigmoid are not part of
    the module's forward and are intentionally not applied)."""
    B, S, E = x.shape
    if pos_enc:
        x = x + _positional_encoding(S, E)
    for lp in layer_params:
        x = encoder_layer(x, lp, num_heads=num_heads, block_b=block_b)
    return x


# ----------------------------------------------------------------------------
# Pure-JAX reference replicating the PyTorch module (eval mode, f32).
# ----------------------------------------------------------------------------
def _reference(x, raw_layers, *, num_heads, pos_enc=True, eps=1e-5):
    B, S, E = x.shape
    hd = E // num_heads
    if pos_enc:
        x = x + _positional_encoding(S, E)
    for raw in raw_layers:
        residual = x
        xs = x.reshape(B, S, num_heads, hd)
        q = jnp.einsum("bshi,hoi->bsho", xs, raw["wq"]) + raw["bq"][None, None]
        k = jnp.einsum("bshi,hoi->bsho", xs, raw["wk"]) + raw["bk"][None, None]
        v = jnp.einsum("bshi,hoi->bsho", xs, raw["wv"]) + raw["bv"][None, None]
        s = jnp.einsum("bqhd,bkhd->bhqk", q, k) / math.sqrt(hd)
        p = jax.nn.softmax(s, axis=-1)
        vals = jnp.einsum("bhqk,bkhd->bqhd", p, v).reshape(B, S, E)
        attn = vals @ raw["wo"].T + raw["bo"]
        h1 = attn + residual
        mu1 = h1.mean(-1, keepdims=True)
        var1 = ((h1 - mu1) ** 2).mean(-1, keepdims=True)
        y1 = raw["gamma1"] * (h1 - mu1) / jnp.sqrt(var1 + eps) + raw["beta1"]
        f = jnp.maximum(y1 @ raw["w1"].T + raw["b1"], 0.0)
        f = f @ raw["w2"].T + raw["b2"]
        h2 = f + y1
        mu2 = h2.mean(-1, keepdims=True)
        var2 = ((h2 - mu2) ** 2).mean(-1, keepdims=True)
        x = raw["gamma2"] * (h2 - mu2) / jnp.sqrt(var2 + eps) + raw["beta2"]
    return x


if __name__ == "__main__":
    B, S, E, H = 2, 8, 32, 4
    FFN_HIDDEN = 64
    NUM_LAYERS = 2
    hd = E // H

    key = jax.random.PRNGKey(0)

    def uni(k, shape, bound):
        return jax.random.uniform(k, shape, jnp.float32, -bound, bound)

    s_h = 1.0 / math.sqrt(hd)
    s_e = 1.0 / math.sqrt(E)
    s_f = 1.0 / math.sqrt(FFN_HIDDEN)

    raw_layers = []
    for _ in range(NUM_LAYERS):
        key, *ks = jax.random.split(key, 17)
        raw_layers.append({
            "wq": uni(ks[0], (H, hd, hd), s_h), "bq": uni(ks[1], (H, hd), s_h),
            "wk": uni(ks[2], (H, hd, hd), s_h), "bk": uni(ks[3], (H, hd), s_h),
            "wv": uni(ks[4], (H, hd, hd), s_h), "bv": uni(ks[5], (H, hd), s_h),
            "wo": uni(ks[6], (E, E), s_e), "bo": uni(ks[7], (E,), s_e),
            "w1": uni(ks[8], (FFN_HIDDEN, E), s_e), "b1": uni(ks[9], (FFN_HIDDEN,), s_e),
            "w2": uni(ks[10], (E, FFN_HIDDEN), s_f), "b2": uni(ks[11], (E,), s_f),
            "gamma1": 1.0 + 0.1 * uni(ks[12], (E,), 1.0),
            "beta1": 0.1 * uni(ks[13], (E,), 1.0),
            "gamma2": 1.0 + 0.1 * uni(ks[14], (E,), 1.0),
            "beta2": 0.1 * uni(ks[15], (E,), 1.0),
        })

    key, kx = jax.random.split(key)
    x = jax.random.normal(kx, (B, S, E), jnp.float32)

    ref = _reference(x, raw_layers, num_heads=H, pos_enc=True)

    # Performance path: bf16 MXU operands, f32 accumulation / softmax / LN.
    lp_bf16 = [prep_layer_params(r, H, matmul_dtype=jnp.bfloat16) for r in raw_layers]
    out_bf16 = transformer_encoder(x, lp_bf16, num_heads=H, pos_enc=True)
    out_bf16 = jax.block_until_ready(out_bf16)
    assert out_bf16.shape == (B, S, E)
    err_bf16 = float(jnp.max(jnp.abs(out_bf16 - ref)))
    assert jnp.allclose(out_bf16, ref, atol=3e-2, rtol=3e-2), \
        f"bf16-mode mismatch vs reference (max abs err {err_bf16})"

    # Parity path: f32 MXU operands, exact reciprocal, tight tolerance.
    lp_f32 = [prep_layer_params(r, H, matmul_dtype=jnp.float32) for r in raw_layers]
    out_f32 = jax.block_until_ready(
        transformer_encoder(x, lp_f32, num_heads=H, pos_enc=True))
    err_f32 = float(jnp.max(jnp.abs(out_f32 - ref)))
    assert jnp.allclose(out_f32, ref, atol=1e-4, rtol=1e-4), \
        f"f32-mode mismatch vs reference (max abs err {err_f32})"

    print("KERNEL_OK")
</pallas_src>

<mosaic_0001>
module attributes {stable_mosaic.version = 11 : i64} {
  func.func @_encoder_layer_kernel(%arg0: i32, %arg1: memref<2x8x32xf32, #tpu.memory_space<vmem>>, %arg2: memref<32x96xbf16, #tpu.memory_space<vmem>>, %arg3: memref<1x96xf32, #tpu.memory_space<vmem>>, %arg4: memref<32x32xbf16, #tpu.memory_space<vmem>>, %arg5: memref<1x32xf32, #tpu.memory_space<vmem>>, %arg6: memref<1x32xf32, #tpu.memory_space<vmem>>, %arg7: memref<1x32xf32, #tpu.memory_space<vmem>>, %arg8: memref<32x64xbf16, #tpu.memory_space<vmem>>, %arg9: memref<1x64xf32, #tpu.memory_space<vmem>>, %arg10: memref<64x32xbf16, #tpu.memory_space<vmem>>, %arg11: memref<1x32xf32, #tpu.memory_space<vmem>>, %arg12: memref<1x32xf32, #tpu.memory_space<vmem>>, %arg13: memref<1x32xf32, #tpu.memory_space<vmem>>, %arg14: memref<2x8x32xf32, #tpu.memory_space<vmem>>, %arg15: memref<16x96xf32, #tpu.memory_space<vmem>>, %arg16: memref<16x32xf32, #tpu.memory_space<vmem>>) attributes {dimension_semantics = [#tpu.dimension_semantics<parallel>], iteration_bounds = array<i64: 1>, scalar_prefetch = 0 : i64, scratch_operands = 2 : i64, tpu.core_type = #tpu.core_type<tc>, window_params = [{transform_indices = @transform_0, window_bounds = array<i64: 2, 8, 32>}, {pipeline_mode = #tpu.pipeline_mode<synchronous>, transform_indices = @transform_1, window_bounds = array<i64: 32, 96>}, {pipeline_mode = #tpu.pipeline_mode<synchronous>, transform_indices = @transform_2, window_bounds = array<i64: 1, 96>}, {pipeline_mode = #tpu.pipeline_mode<synchronous>, transform_indices = @transform_3, window_bounds = array<i64: 32, 32>}, {pipeline_mode = #tpu.pipeline_mode<synchronous>, transform_indices = @transform_4, window_bounds = array<i64: 1, 32>}, {pipeline_mode = #tpu.pipeline_mode<synchronous>, transform_indices = @transform_5, window_bounds = array<i64: 1, 32>}, {pipeline_mode = #tpu.pipeline_mode<synchronous>, transform_indices = @transform_6, window_bounds = array<i64: 1, 32>}, {pipeline_mode = #tpu.pipeline_mode<synchronous>, transform_indices = @transform_7, window_bounds = array<i64: 32, 64>}, {pipeline_mode = #tpu.pipeline_mode<synchronous>, transform_indices = @transform_8, window_bounds = array<i64: 1, 64>}, {pipeline_mode = #tpu.pipeline_mode<synchronous>, transform_indices = @transform_9, window_bounds = array<i64: 64, 32>}, {pipeline_mode = #tpu.pipeline_mode<synchronous>, transform_indices = @transform_10, window_bounds = array<i64: 1, 32>}, {pipeline_mode = #tpu.pipeline_mode<synchronous>, transform_indices = @transform_11, window_bounds = array<i64: 1, 32>}, {pipeline_mode = #tpu.pipeline_mode<synchronous>, transform_indices = @transform_12, window_bounds = array<i64: 1, 32>}, {transform_indices = @transform_13, window_bounds = array<i64: 2, 8, 32>}]} {
    %c0 = arith.constant 0 : index
    %c0_0 = arith.constant 0 : index
    %c0_1 = arith.constant 0 : index
    %0 = vector.load %arg1[%c0, %c0_0, %c0_1] : memref<2x8x32xf32, #tpu.memory_space<vmem>>, vector<2x8x32xf32>
    %1 = vector.shape_cast %0 : vector<2x8x32xf32> to vector<16x32xf32>
    %2 = arith.truncf %1 : vector<16x32xf32> to vector<16x32xbf16>
    %c0_2 = arith.constant 0 : index
    %c0_3 = arith.constant 0 : index
    %3 = vector.load %arg2[%c0_2, %c0_3] : memref<32x96xbf16, #tpu.memory_space<vmem>>, vector<32x96xbf16>
    %cst = arith.constant dense<0.000000e+00> : vector<16x96xf32>
    %4 = tpu.matmul %2, %3, %cst {dimension_numbers = #tpu.dot_dimension_numbers<[1], [0], [0], [1], [0, 0, 1, 1], [], []>} : vector<16x32xbf16>, vector<32x96xbf16>, vector<16x96xf32> -> vector<16x96xf32>
    %c0_4 = arith.constant 0 : index
    %c0_5 = arith.constant 0 : index
    %5 = vector.load %arg3[%c0_4, %c0_5] : memref<1x96xf32, #tpu.memory_space<vmem>>, vector<1x96xf32>
    %6 = vector.broadcast %5 : vector<1x96xf32> to vector<16x96xf32>
    %7 = arith.addf %4, %6 : vector<16x96xf32>
    %c0_6 = arith.constant 0 : index
    %c0_7 = arith.constant 0 : index
    %8 = vector.load %arg15[%c0_6, %c0_7] : memref<16x96xf32, #tpu.memory_space<vmem>>, vector<16x96xf32>
    tpu.vector_store %arg15[%c0_6, %c0_7], %7 {strides = array<i32>} : memref<16x96xf32, #tpu.memory_space<vmem>>, vector<16x96xf32>,
    %cst_8 = arith.constant 0.000000e+00 : f32
    %9 = vector.broadcast %cst_8 : f32 to vector<8x32xf32>
    %c0_9 = arith.constant 0 : index
    %c0_10 = arith.constant 0 : index
    %10 = vector.load %arg15[%c0_9, %c0_10] : memref<16x96xf32, #tpu.memory_space<vmem>>, vector<8x8xf32>
    %cst_11 = arith.constant 0.353553385 : f32
    %11 = vector.broadcast %cst_11 : f32 to vector<8x8xf32>
    %12 = arith.mulf %10, %11 : vector<8x8xf32>
    %c0_12 = arith.constant 0 : index
    %c32 = arith.constant 32 : index
    %13 = vector.load %arg15[%c0_12, %c32] : memref<16x96xf32, #tpu.memory_space<vmem>>, vector<8x8xf32>
    %c0_13 = arith.constant 0 : index
    %c64 = arith.constant 64 : index
    %14 = vector.load %arg15[%c0_13, %c64] : memref<16x96xf32, #tpu.memory_space<vmem>>, vector<8x8xf32>
    %15 = arith.truncf %12 : vector<8x8xf32> to vector<8x8xbf16>
    %16 = arith.truncf %13 : vector<8x8xf32> to vector<8x8xbf16>
    %cst_14 = arith.constant dense<0.000000e+00> : vector<8x8xf32>
    %17 = tpu.matmul %15, %16, %cst_14 {dimension_numbers = #tpu.dot_dimension_numbers<[1], [1], [0], [0], [0, 0, 1, 0], [], []>} : vector<8x8xbf16>, vector<8x8xbf16>, vector<8x8xf32> -> vector<8x8xf32>
    %cst_15 = arith.constant dense<0xFF800000> : vector<8xf32>
    %18 = vector.multi_reduction <maximumf>, %17, %cst_15 [1] : vector<8x8xf32> to vector<8xf32>
    %19 = vector.shape_cast %18 : vector<8xf32> to vector<8x1xf32>
    %20 = vector.broadcast %19 : vector<8x1xf32> to vector<8x8xf32>
    %21 = arith.subf %17, %20 : vector<8x8xf32>
    %22 = math.exp %21 : vector<8x8xf32>
    %cst_16 = arith.constant dense<0.000000e+00> : vector<8xf32>
    %23 = vector.multi_reduction <add>, %22, %cst_16 [1] : vector<8x8xf32> to vector<8xf32>
    %24 = vector.shape_cast %23 : vector<8xf32> to vector<8x1xf32>
    %25 = tpu.reciprocal %24 {approx = true} : vector<8x1xf32> -> vector<8x1xf32>
    %26 = vector.broadcast %25 : vector<8x1xf32> to vector<8x8xf32>
    %27 = arith.mulf %22, %26 : vector<8x8xf32>
    %28 = arith.truncf %27 : vector<8x8xf32> to vector<8x8xbf16>
    %29 = arith.truncf %14 : vector<8x8xf32> to vector<8x8xbf16>
    %cst_17 = arith.constant dense<0.000000e+00> : vector<8x8xf32>
    %30 = tpu.matmul %28, %29, %cst_17 {dimension_numbers = #tpu.dot_dimension_numbers<[1], [0], [0], [1], [0, 0, 1, 1], [], []>} : vector<8x8xbf16>, vector<8x8xbf16>, vector<8x8xf32> -> vector<8x8xf32>
    %31 = arith.truncf %30 : vector<8x8xf32> to vector<8x8xbf16>
    %c0_18 = arith.constant 0 : index
    %c0_19 = arith.constant 0 : index
    %32 = vector.load %arg4[%c0_18, %c0_19] : memref<32x32xbf16, #tpu.memory_space<vmem>>, vector<8x32xbf16>
    %cst_20 = arith.constant dense<0.000000e+00> : vector<8x32xf32>
    %33 = tpu.matmul %31, %32, %cst_20 {dimension_numbers = #tpu.dot_dimension_numbers<[1], [0], [0], [1], [0, 0, 1, 1], [], []>} : vector<8x8xbf16>, vector<8x32xbf16>, vector<8x32xf32> -> vector<8x32xf32>
    %34 = arith.addf %9, %33 : vector<8x32xf32>
    %c0_21 = arith.constant 0 : index
    %c8 = arith.constant 8 : index
    %35 = vector.load %arg15[%c0_21, %c8] : memref<16x96xf32, #tpu.memory_space<vmem>>, vector<8x8xf32>
    %cst_22 = arith.constant 0.353553385 : f32
    %36 = vector.broadcast %cst_22 : f32 to vector<8x8xf32>
    %37 = arith.mulf %35, %36 : vector<8x8xf32>
    %c0_23 = arith.constant 0 : index
    %c40 = arith.constant 40 : index
    %38 = vector.load %arg15[%c0_23, %c40] : memref<16x96xf32, #tpu.memory_space<vmem>>, vector<8x8xf32>
    %c0_24 = arith.constant 0 : index
    %c72 = arith.constant 72 : index
    %39 = vector.load %arg15[%c0_24, %c72] : memref<16x96xf32, #tpu.memory_space<vmem>>, vector<8x8xf32>
    %40 = arith.truncf %37 : vector<8x8xf32> to vector<8x8xbf16>
    %41 = arith.truncf %38 : vector<8x8xf32> to vector<8x8xbf16>
    %cst_25 = arith.constant dense<0.000000e+00> : vector<8x8xf32>
    %42 = tpu.matmul %40, %41, %cst_25 {dimension_numbers = #tpu.dot_dimension_numbers<[1], [1], [0], [0], [0, 0, 1, 0], [], []>} : vector<8x8xbf16>, vector<8x8xbf16>, vector<8x8xf32> -> vector<8x8xf32>
    %cst_26 = arith.constant dense<0xFF800000> : vector<8xf32>
    %43 = vector.multi_reduction <maximumf>, %42, %cst_26 [1] : vector<8x8xf32> to vector<8xf32>
    %44 = vector.shape_cast %43 : vector<8xf32> to vector<8x1xf32>
    %45 = vector.broadcast %44 : vector<8x1xf32> to vector<8x8xf32>
    %46 = arith.subf %42, %45 : vector<8x8xf32>
    %47 = math.exp %46 : vector<8x8xf32>
    %cst_27 = arith.constant dense<0.000000e+00> : vector<8xf32>
    %48 = vector.multi_reduction <add>, %47, %cst_27 [1] : vector<8x8xf32> to vector<8xf32>
    %49 = vector.shape_cast %48 : vector<8xf32> to vector<8x1xf32>
    %50 = tpu.reciprocal %49 {approx = true} : vector<8x1xf32> -> vector<8x1xf32>
    %51 = vector.broadcast %50 : vector<8x1xf32> to vector<8x8xf32>
    %52 = arith.mulf %47, %51 : vector<8x8xf32>
    %53 = arith.truncf %52 : vector<8x8xf32> to vector<8x8xbf16>
    %54 = arith.truncf %39 : vector<8x8xf32> to vector<8x8xbf16>
    %cst_28 = arith.constant dense<0.000000e+00> : vector<8x8xf32>
    %55 = tpu.matmul %53, %54, %cst_28 {dimension_numbers = #tpu.dot_dimension_numbers<[1], [0], [0], [1], [0, 0, 1, 1], [], []>} : vector<8x8xbf16>, vector<8x8xbf16>, vector<8x8xf32> -> vector<8x8xf32>
    %56 = arith.truncf %55 : vector<8x8xf32> to vector<8x8xbf16>
    %c8_29 = arith.constant 8 : index
    %c0_30 = arith.constant 0 : index
    %57 = vector.load %arg4[%c8_29, %c0_30] : memref<32x32xbf16, #tpu.memory_space<vmem>>, vector<8x32xbf16>
    %cst_31 = arith.constant dense<0.000000e+00> : vector<8x32xf32>
    %58 = tpu.matmul %56, %57, %cst_31 {dimension_numbers = #tpu.dot_dimension_numbers<[1], [0], [0], [1], [0, 0, 1, 1], [], []>} : vector<8x8xbf16>, vector<8x32xbf16>, vector<8x32xf32> -> vector<8x32xf32>
    %59 = arith.addf %34, %58 : vector<8x32xf32>
    %c0_32 = arith.constant 0 : index
    %c16 = arith.constant 16 : index
    %60 = vector.load %arg15[%c0_32, %c16] : memref<16x96xf32, #tpu.memory_space<vmem>>, vector<8x8xf32>
    %cst_33 = arith.constant 0.353553385 : f32
    %61 = vector.broadcast %cst_33 : f32 to vector<8x8xf32>
    %62 = arith.mulf %60, %61 : vector<8x8xf32>
    %c0_34 = arith.constant 0 : index
    %c48 = arith.constant 48 : index
    %63 = vector.load %arg15[%c0_34, %c48] : memref<16x96xf32, #tpu.memory_space<vmem>>, vector<8x8xf32>
    %c0_35 = arith.constant 0 : index
    %c80 = arith.constant 80 : index
    %64 = vector.load %arg15[%c0_35, %c80] : memref<16x96xf32, #tpu.memory_space<vmem>>, vector<8x8xf32>
    %65 = arith.truncf %62 : vector<8x8xf32> to vector<8x8xbf16>
    %66 = arith.truncf %63 : vector<8x8xf32> to vector<8x8xbf16>
    %cst_36 = arith.constant dense<0.000000e+00> : vector<8x8xf32>
    %67 = tpu.matmul %65, %66, %cst_36 {dimension_numbers = #tpu.dot_dimension_numbers<[1], [1], [0], [0], [0, 0, 1, 0], [], []>} : vector<8x8xbf16>, vector<8x8xbf16>, vector<8x8xf32> -> vector<8x8xf32>
    %cst_37 = arith.constant dense<0xFF800000> : vector<8xf32>
    %68 = vector.multi_reduction <maximumf>, %67, %cst_37 [1] : vector<8x8xf32> to vector<8xf32>
    %69 = vector.shape_cast %68 : vector<8xf32> to vector<8x1xf32>
    %70 = vector.broadcast %69 : vector<8x1xf32> to vector<8x8xf32>
    %71 = arith.subf %67, %70 : vector<8x8xf32>
    %72 = math.exp %71 : vector<8x8xf32>
    %cst_38 = arith.constant dense<0.000000e+00> : vector<8xf32>
    %73 = vector.multi_reduction <add>, %72, %cst_38 [1] : vector<8x8xf32> to vector<8xf32>
    %74 = vector.shape_cast %73 : vector<8xf32> to vector<8x1xf32>
    %75 = tpu.reciprocal %74 {approx = true} : vector<8x1xf32> -> vector<8x1xf32>
    %76 = vector.broadcast %75 : vector<8x1xf32> to vector<8x8xf32>
    %77 = arith.mulf %72, %76 : vector<8x8xf32>
    %78 = arith.truncf %77 : vector<8x8xf32> to vector<8x8xbf16>
    %79 = arith.truncf %64 : vector<8x8xf32> to vector<8x8xbf16>
    %cst_39 = arith.constant dense<0.000000e+00> : vector<8x8xf32>
    %80 = tpu.matmul %78, %79, %cst_39 {dimension_numbers = #tpu.dot_dimension_numbers<[1], [0], [0], [1], [0, 0, 1, 1], [], []>} : vector<8x8xbf16>, vector<8x8xbf16>, vector<8x8xf32> -> vector<8x8xf32>
    %81 = arith.truncf %80 : vector<8x8xf32> to vector<8x8xbf16>
    %c16_40 = arith.constant 16 : index
    %c0_41 = arith.constant 0 : index
    %82 = vector.load %arg4[%c16_40, %c0_41] : memref<32x32xbf16, #tpu.memory_space<vmem>>, vector<8x32xbf16>
    %cst_42 = arith.constant dense<0.000000e+00> : vector<8x32xf32>
    %83 = tpu.matmul %81, %82, %cst_42 {dimension_numbers = #tpu.dot_dimension_numbers<[1], [0], [0], [1], [0, 0, 1, 1], [], []>} : vector<8x8xbf16>, vector<8x32xbf16>, vector<8x32xf32> -> vector<8x32xf32>
    %84 = arith.addf %59, %83 : vector<8x32xf32>
    %c0_43 = arith.constant 0 : index
    %c24 = arith.constant 24 : index
    %85 = vector.load %arg15[%c0_43, %c24] : memref<16x96xf32, #tpu.memory_space<vmem>>, vector<8x8xf32>
    %cst_44 = arith.constant 0.353553385 : f32
    %86 = vector.broadcast %cst_44 : f32 to vector<8x8xf32>
    %87 = arith.mulf %85, %86 : vector<8x8xf32>
    %c0_45 = arith.constant 0 : index
    %c56 = arith.constant 56 : index
    %88 = vector.load %arg15[%c0_45, %c56] : memref<16x96xf32, #tpu.memory_space<vmem>>, vector<8x8xf32>
    %c0_46 = arith.constant 0 : index
    %c88 = arith.constant 88 : index
    %89 = vector.load %arg15[%c0_46, %c88] : memref<16x96xf32, #tpu.memory_space<vmem>>, vector<8x8xf32>
    %90 = arith.truncf %87 : vector<8x8xf32> to vector<8x8xbf16>
    %91 = arith.truncf %88 : vector<8x8xf32> to vector<8x8xbf16>
    %cst_47 = arith.constant dense<0.000000e+00> : vector<8x8xf32>
    %92 = tpu.matmul %90, %91, %cst_47 {dimension_numbers = #tpu.dot_dimension_numbers<[1], [1], [0], [0], [0, 0, 1, 0], [], []>} : vector<8x8xbf16>, vector<8x8xbf16>, vector<8x8xf32> -> vector<8x8xf32>
    %cst_48 = arith.constant dense<0xFF800000> : vector<8xf32>
    %93 = vector.multi_reduction <maximumf>, %92, %cst_48 [1] : vector<8x8xf32> to vector<8xf32>
    %94 = vector.shape_cast %93 : vector<8xf32> to vector<8x1xf32>
    %95 = vector.broadcast %94 : vector<8x1xf32> to vector<8x8xf32>
    %96 = arith.subf %92, %95 : vector<8x8xf32>
    %97 = math.exp %96 : vector<8x8xf32>
    %cst_49 = arith.constant dense<0.000000e+00> : vector<8xf32>
    %98 = vector.multi_reduction <add>, %97, %cst_49 [1] : vector<8x8xf32> to vector<8xf32>
    %99 = vector.shape_cast %98 : vector<8xf32> to vector<8x1xf32>
    %100 = tpu.reciprocal %99 {approx = true} : vector<8x1xf32> -> vector<8x1xf32>
    %101 = vector.broadcast %100 : vector<8x1xf32> to vector<8x8xf32>
    %102 = arith.mulf %97, %101 : vector<8x8xf32>
    %103 = arith.truncf %102 : vector<8x8xf32> to vector<8x8xbf16>
    %104 = arith.truncf %89 : vector<8x8xf32> to vector<8x8xbf16>
    %cst_50 = arith.constant dense<0.000000e+00> : vector<8x8xf32>
    %105 = tpu.matmul %103, %104, %cst_50 {dimension_numbers = #tpu.dot_dimension_numbers<[1], [0], [0], [1], [0, 0, 1, 1], [], []>} : vector<8x8xbf16>, vector<8x8xbf16>, vector<8x8xf32> -> vector<8x8xf32>
    %106 = arith.truncf %105 : vector<8x8xf32> to vector<8x8xbf16>
    %c24_51 = arith.constant 24 : index
    %c0_52 = arith.constant 0 : index
    %107 = vector.load %arg4[%c24_51, %c0_52] : memref<32x32xbf16, #tpu.memory_space<vmem>>, vector<8x32xbf16>
    %cst_53 = arith.constant dense<0.000000e+00> : vector<8x32xf32>
    %108 = tpu.matmul %106, %107, %cst_53 {dimension_numbers = #tpu.dot_dimension_numbers<[1], [0], [0], [1], [0, 0, 1, 1], [], []>} : vector<8x8xbf16>, vector<8x32xbf16>, vector<8x32xf32> -> vector<8x32xf32>
    %109 = arith.addf %84, %108 : vector<8x32xf32>
    %c0_54 = arith.constant 0 : index
    %c0_55 = arith.constant 0 : index
    %110 = vector.load %arg16[%c0_54, %c0_55] : memref<16x32xf32, #tpu.memory_space<vmem>>, vector<8x32xf32>
    tpu.vector_store %arg16[%c0_54, %c0_55], %109 {strides = array<i32>} : memref<16x32xf32, #tpu.memory_space<vmem>>, vector<8x32xf32>,
    %cst_56 = arith.constant 0.000000e+00 : f32
    %111 = vector.broadcast %cst_56 : f32 to vector<8x32xf32>
    %c8_57 = arith.constant 8 : index
    %c0_58 = arith.constant 0 : index
    %112 = vector.load %arg15[%c8_57, %c0_58] : memref<16x96xf32, #tpu.memory_space<vmem>>, vector<8x8xf32>
    %cst_59 = arith.constant 0.353553385 : f32
    %113 = vector.broadcast %cst_59 : f32 to vector<8x8xf32>
    %114 = arith.mulf %112, %113 : vector<8x8xf32>
    %c8_60 = arith.constant 8 : index
    %c32_61 = arith.constant 32 : index
    %115 = vector.load %arg15[%c8_60, %c32_61] : memref<16x96xf32, #tpu.memory_space<vmem>>, vector<8x8xf32>
    %c8_62 = arith.constant 8 : index
    %c64_63 = arith.constant 64 : index
    %116 = vector.load %arg15[%c8_62, %c64_63] : memref<16x96xf32, #tpu.memory_space<vmem>>, vector<8x8xf32>
    %117 = arith.truncf %114 : vector<8x8xf32> to vector<8x8xbf16>
    %118 = arith.truncf %115 : vector<8x8xf32> to vector<8x8xbf16>
    %cst_64 = arith.constant dense<0.000000e+00> : vector<8x8xf32>
    %119 = tpu.matmul %117, %118, %cst_64 {dimension_numbers = #tpu.dot_dimension_numbers<[1], [1], [0], [0], [0, 0, 1, 0], [], []>} : vector<8x8xbf16>, vector<8x8xbf16>, vector<8x8xf32> -> vector<8x8xf32>
    %cst_65 = arith.constant dense<0xFF800000> : vector<8xf32>
    %120 = vector.multi_reduction <maximumf>, %119, %cst_65 [1] : vector<8x8xf32> to vector<8xf32>
    %121 = vector.shape_cast %120 : vector<8xf32> to vector<8x1xf32>
    %122 = vector.broadcast %121 : vector<8x1xf32> to vector<8x8xf32>
    %123 = arith.subf %119, %122 : vector<8x8xf32>
    %124 = math.exp %123 : vector<8x8xf32>
    %cst_66 = arith.constant dense<0.000000e+00> : vector<8xf32>
    %125 = vector.multi_reduction <add>, %124, %cst_66 [1] : vector<8x8xf32> to vector<8xf32>
    %126 = vector.shape_cast %125 : vector<8xf32> to vector<8x1xf32>
    %127 = tpu.reciprocal %126 {approx = true} : vector<8x1xf32> -> vector<8x1xf32>
    %128 = vector.broadcast %127 : vector<8x1xf32> to vector<8x8xf32>
    %129 = arith.mulf %124, %128 : vector<8x8xf32>
    %130 = arith.truncf %129 : vector<8x8xf32> to vector<8x8xbf16>
    %131 = arith.truncf %116 : vector<8x8xf32> to vector<8x8xbf16>
    %cst_67 = arith.constant dense<0.000000e+00> : vector<8x8xf32>
    %132 = tpu.matmul %130, %131, %cst_67 {dimension_numbers = #tpu.dot_dimension_numbers<[1], [0], [0], [1], [0, 0, 1, 1], [], []>} : vector<8x8xbf16>, vector<8x8xbf16>, vector<8x8xf32> -> vector<8x8xf32>
    %133 = arith.truncf %132 : vector<8x8xf32> to vector<8x8xbf16>
    %c0_68 = arith.constant 0 : index
    %c0_69 = arith.constant 0 : index
    %134 = vector.load %arg4[%c0_68, %c0_69] : memref<32x32xbf16, #tpu.memory_space<vmem>>, vector<8x32xbf16>
    %cst_70 = arith.constant dense<0.000000e+00> : vector<8x32xf32>
    %135 = tpu.matmul %133, %134, %cst_70 {dimension_numbers = #tpu.dot_dimension_numbers<[1], [0], [0], [1], [0, 0, 1, 1], [], []>} : vector<8x8xbf16>, vector<8x32xbf16>, vector<8x32xf32> -> vector<8x32xf32>
    %136 = arith.addf %111, %135 : vector<8x32xf32>
    %c8_71 = arith.constant 8 : index
    %c8_72 = arith.constant 8 : index
    %137 = vector.load %arg15[%c8_71, %c8_72] : memref<16x96xf32, #tpu.memory_space<vmem>>, vector<8x8xf32>
    %cst_73 = arith.constant 0.353553385 : f32
    %138 = vector.broadcast %cst_73 : f32 to vector<8x8xf32>
    %139 = arith.mulf %137, %138 : vector<8x8xf32>
    %c8_74 = arith.constant 8 : index
    %c40_75 = arith.constant 40 : index
    %140 = vector.load %arg15[%c8_74, %c40_75] : memref<16x96xf32, #tpu.memory_space<vmem>>, vector<8x8xf32>
    %c8_76 = arith.constant 8 : index
    %c72_77 = arith.constant 72 : index
    %141 = vector.load %arg15[%c8_76, %c72_77] : memref<16x96xf32, #tpu.memory_space<vmem>>, vector<8x8xf32>
    %142 = arith.truncf %139 : vector<8x8xf32> to vector<8x8xbf16>
    %143 = arith.truncf %140 : vector<8x8xf32> to vector<8x8xbf16>
    %cst_78 = arith.constant dense<0.000000e+00> : vector<8x8xf32>
    %144 = tpu.matmul %142, %143, %cst_78 {dimension_numbers = #tpu.dot_dimension_numbers<[1], [1], [0], [0], [0, 0, 1, 0], [], []>} : vector<8x8xbf16>, vector<8x8xbf16>, vector<8x8xf32> -> vector<8x8xf32>
    %cst_79 = arith.constant dense<0xFF800000> : vector<8xf32>
    %145 = vector.multi_reduction <maximumf>, %144, %cst_79 [1] : vector<8x8xf32> to vector<8xf32>
    %146 = vector.shape_cast %145 : vector<8xf32> to vector<8x1xf32>
    %147 = vector.broadcast %146 : vector<8x1xf32> to vector<8x8xf32>
    %148 = arith.subf %144, %147 : vector<8x8xf32>
    %149 = math.exp %148 : vector<8x8xf32>
    %cst_80 = arith.constant dense<0.000000e+00> : vector<8xf32>
    %150 = vector.multi_reduction <add>, %149, %cst_80 [1] : vector<8x8xf32> to vector<8xf32>
    %151 = vector.shape_cast %150 : vector<8xf32> to vector<8x1xf32>
    %152 = tpu.reciprocal %151 {approx = true} : vector<8x1xf32> -> vector<8x1xf32>
    %153 = vector.broadcast %152 : vector<8x1xf32> to vector<8x8xf32>
    %154 = arith.mulf %149, %153 : vector<8x8xf32>
    %155 = arith.truncf %154 : vector<8x8xf32> to vector<8x8xbf16>
    %156 = arith.truncf %141 : vector<8x8xf32> to vector<8x8xbf16>
    %cst_81 = arith.constant dense<0.000000e+00> : vector<8x8xf32>
    %157 = tpu.matmul %155, %156, %cst_81 {dimension_numbers = #tpu.dot_dimension_numbers<[1], [0], [0], [1], [0, 0, 1, 1], [], []>} : vector<8x8xbf16>, vector<8x8xbf16>, vector<8x8xf32> -> vector<8x8xf32>
    %158 = arith.truncf %157 : vector<8x8xf32> to vector<8x8xbf16>
    %c8_82 = arith.constant 8 : index
    %c0_83 = arith.constant 0 : index
    %159 = vector.load %arg4[%c8_82, %c0_83] : memref<32x32xbf16, #tpu.memory_space<vmem>>, vector<8x32xbf16>
    %cst_84 = arith.constant dense<0.000000e+00> : vector<8x32xf32>
    %160 = tpu.matmul %158, %159, %cst_84 {dimension_numbers = #tpu.dot_dimension_numbers<[1], [0], [0], [1], [0, 0, 1, 1], [], []>} : vector<8x8xbf16>, vector<8x32xbf16>, vector<8x32xf32> -> vector<8x32xf32>
    %161 = arith.addf %136, %160 : vector<8x32xf32>
    %c8_85 = arith.constant 8 : index
    %c16_86 = arith.constant 16 : index
    %162 = vector.load %arg15[%c8_85, %c16_86] : memref<16x96xf32, #tpu.memory_space<vmem>>, vector<8x8xf32>
    %cst_87 = arith.constant 0.353553385 : f32
    %163 = vector.broadcast %cst_87 : f32 to vector<8x8xf32>
    %164 = arith.mulf %162, %163 : vector<8x8xf32>
    %c8_88 = arith.constant 8 : index
    %c48_89 = arith.constant 48 : index
    %165 = vector.load %arg15[%c8_88, %c48_89] : memref<16x96xf32, #tpu.memory_space<vmem>>, vector<8x8xf32>
    %c8_90 = arith.constant 8 : index
    %c80_91 = arith.constant 80 : index
    %166 = vector.load %arg15[%c8_90, %c80_91] : memref<16x96xf32, #tpu.memory_space<vmem>>, vector<8x8xf32>
    %167 = arith.truncf %164 : vector<8x8xf32> to vector<8x8xbf16>
    %168 = arith.truncf %165 : vector<8x8xf32> to vector<8x8xbf16>
    %cst_92 = arith.constant dense<0.000000e+00> : vector<8x8xf32>
    %169 = tpu.matmul %167, %168, %cst_92 {dimension_numbers = #tpu.dot_dimension_numbers<[1], [1], [0], [0], [0, 0, 1, 0], [], []>} : vector<8x8xbf16>, vector<8x8xbf16>, vector<8x8xf32> -> vector<8x8xf32>
    %cst_93 = arith.constant dense<0xFF800000> : vector<8xf32>
    %170 = vector.multi_reduction <maximumf>, %169, %cst_93 [1] : vector<8x8xf32> to vector<8xf32>
    %171 = vector.shape_cast %170 : vector<8xf32> to vector<8x1xf32>
    %172 = vector.broadcast %171 : vector<8x1xf32> to vector<8x8xf32>
    %173 = arith.subf %169, %172 : vector<8x8xf32>
    %174 = math.exp %173 : vector<8x8xf32>
    %cst_94 = arith.constant dense<0.000000e+00> : vector<8xf32>
    %175 = vector.multi_reduction <add>, %174, %cst_94 [1] : vector<8x8xf32> to vector<8xf32>
    %176 = vector.shape_cast %175 : vector<8xf32> to vector<8x1xf32>
    %177 = tpu.reciprocal %176 {approx = true} : vector<8x1xf32> -> vector<8x1xf32>
    %178 = vector.broadcast %177 : vector<8x1xf32> to vector<8x8xf32>
    %179 = arith.mulf %174, %178 : vector<8x8xf32>
    %180 = arith.truncf %179 : vector<8x8xf32> to vector<8x8xbf16>
    %181 = arith.truncf %166 : vector<8x8xf32> to vector<8x8xbf16>
    %cst_95 = arith.constant dense<0.000000e+00> : vector<8x8xf32>
    %182 = tpu.matmul %180, %181, %cst_95 {dimension_numbers = #tpu.dot_dimension_numbers<[1], [0], [0], [1], [0, 0, 1, 1], [], []>} : vector<8x8xbf16>, vector<8x8xbf16>, vector<8x8xf32> -> vector<8x8xf32>
    %183 = arith.truncf %182 : vector<8x8xf32> to vector<8x8xbf16>
    %c16_96 = arith.constant 16 : index
    %c0_97 = arith.constant 0 : index
    %184 = vector.load %arg4[%c16_96, %c0_97] : memref<32x32xbf16, #tpu.memory_space<vmem>>, vector<8x32xbf16>
    %cst_98 = arith.constant dense<0.000000e+00> : vector<8x32xf32>
    %185 = tpu.matmul %183, %184, %cst_98 {dimension_numbers = #tpu.dot_dimension_numbers<[1], [0], [0], [1], [0, 0, 1, 1], [], []>} : vector<8x8xbf16>, vector<8x32xbf16>, vector<8x32xf32> -> vector<8x32xf32>
    %186 = arith.addf %161, %185 : vector<8x32xf32>
    %c8_99 = arith.constant 8 : index
    %c24_100 = arith.constant 24 : index
    %187 = vector.load %arg15[%c8_99, %c24_100] : memref<16x96xf32, #tpu.memory_space<vmem>>, vector<8x8xf32>
    %cst_101 = arith.constant 0.353553385 : f32
    %188 = vector.broadcast %cst_101 : f32 to vector<8x8xf32>
    %189 = arith.mulf %187, %188 : vector<8x8xf32>
    %c8_102 = arith.constant 8 : index
    %c56_103 = arith.constant 56 : index
    %190 = vector.load %arg15[%c8_102, %c56_103] : memref<16x96xf32, #tpu.memory_space<vmem>>, vector<8x8xf32>
    %c8_104 = arith.constant 8 : index
    %c88_105 = arith.constant 88 : index
    %191 = vector.load %arg15[%c8_104, %c88_105] : memref<16x96xf32, #tpu.memory_space<vmem>>, vector<8x8xf32>
    %192 = arith.truncf %189 : vector<8x8xf32> to vector<8x8xbf16>
    %193 = arith.truncf %190 : vector<8x8xf32> to vector<8x8xbf16>
    %cst_106 = arith.constant dense<0.000000e+00> : vector<8x8xf32>
    %194 = tpu.matmul %192, %193, %cst_106 {dimension_numbers = #tpu.dot_dimension_numbers<[1], [1], [0], [0], [0, 0, 1, 0], [], []>} : vector<8x8xbf16>, vector<8x8xbf16>, vector<8x8xf32> -> vector<8x8xf32>
    %cst_107 = arith.constant dense<0xFF800000> : vector<8xf32>
    %195 = vector.multi_reduction <maximumf>, %194, %cst_107 [1] : vector<8x8xf32> to vector<8xf32>
    %196 = vector.shape_cast %195 : vector<8xf32> to vector<8x1xf32>
    %197 = vector.broadcast %196 : vector<8x1xf32> to vector<8x8xf32>
    %198 = arith.subf %194, %197 : vector<8x8xf32>
    %199 = math.exp %198 : vector<8x8xf32>
    %cst_108 = arith.constant dense<0.000000e+00> : vector<8xf32>
    %200 = vector.multi_reduction <add>, %199, %cst_108 [1] : vector<8x8xf32> to vector<8xf32>
    %201 = vector.shape_cast %200 : vector<8xf32> to vector<8x1xf32>
    %202 = tpu.reciprocal %201 {approx = true} : vector<8x1xf32> -> vector<8x1xf32>
    %203 = vector.broadcast %202 : vector<8x1xf32> to vector<8x8xf32>
    %204 = arith.mulf %199, %203 : vector<8x8xf32>
    %205 = arith.truncf %204 : vector<8x8xf32> to vector<8x8xbf16>
    %206 = arith.truncf %191 : vector<8x8xf32> to vector<8x8xbf16>
    %cst_109 = arith.constant dense<0.000000e+00> : vector<8x8xf32>
    %207 = tpu.matmul %205, %206, %cst_109 {dimension_numbers = #tpu.dot_dimension_numbers<[1], [0], [0], [1], [0, 0, 1, 1], [], []>} : vector<8x8xbf16>, vector<8x8xbf16>, vector<8x8xf32> -> vector<8x8xf32>
    %208 = arith.truncf %207 : vector<8x8xf32> to vector<8x8xbf16>
    %c24_110 = arith.constant 24 : index
    %c0_111 = arith.constant 0 : index
    %209 = vector.load %arg4[%c24_110, %c0_111] : memref<32x32xbf16, #tpu.memory_space<vmem>>, vector<8x32xbf16>
    %cst_112 = arith.constant dense<0.000000e+00> : vector<8x32xf32>
    %210 = tpu.matmul %208, %209, %cst_112 {dimension_numbers = #tpu.dot_dimension_numbers<[1], [0], [0], [1], [0, 0, 1, 1], [], []>} : vector<8x8xbf16>, vector<8x32xbf16>, vector<8x32xf32> -> vector<8x32xf32>
    %211 = arith.addf %186, %210 : vector<8x32xf32>
    %c8_113 = arith.constant 8 : index
    %c0_114 = arith.constant 0 : index
    %212 = vector.load %arg16[%c8_113, %c0_114] : memref<16x32xf32, #tpu.memory_space<vmem>>, vector<8x32xf32>
    tpu.vector_store %arg16[%c8_113, %c0_114], %211 {strides = array<i32>} : memref<16x32xf32, #tpu.memory_space<vmem>>, vector<8x32xf32>,
    %c0_115 = arith.constant 0 : index
    %c0_116 = arith.constant 0 : index
    %213 = vector.load %arg16[%c0_115, %c0_116] : memref<16x32xf32, #tpu.memory_space<vmem>>, vector<16x32xf32>
    %c0_117 = arith.constant 0 : index
    %c0_118 = arith.constant 0 : index
    %214 = vector.load %arg5[%c0_117, %c0_118] : memref<1x32xf32, #tpu.memory_space<vmem>>, vector<1x32xf32>
    %215 = vector.broadcast %214 : vector<1x32xf32> to vector<16x32xf32>
    %216 = arith.addf %213, %215 : vector<16x32xf32>
    %217 = arith.addf %216, %1 : vector<16x32xf32>
    %cst_119 = arith.constant dense<0.000000e+00> : vector<16xf32>
    %218 = vector.multi_reduction <add>, %217, %cst_119 [1] : vector<16x32xf32> to vector<16xf32>
    %219 = vector.shape_cast %218 : vector<16xf32> to vector<16x1xf32>
    %cst_120 = arith.constant 3.200000e+01 : f32
    %220 = vector.broadcast %cst_120 : f32 to vector<16x1xf32>
    %221 = arith.divf %219, %220 : vector<16x1xf32>
    %222 = vector.broadcast %221 : vector<16x1xf32> to vector<16x32xf32>
    %223 = arith.subf %217, %222 : vector<16x32xf32>
    %224 = arith.mulf %223, %223 : vector<16x32xf32>
    %cst_121 = arith.constant dense<0.000000e+00> : vector<16xf32>
    %225 = vector.multi_reduction <add>, %224, %cst_121 [1] : vector<16x32xf32> to vector<16xf32>
    %226 = vector.shape_cast %225 : vector<16xf32> to vector<16x1xf32>
    %cst_122 = arith.constant 3.200000e+01 : f32
    %227 = vector.broadcast %cst_122 : f32 to vector<16x1xf32>
    %228 = arith.divf %226, %227 : vector<16x1xf32>
    %229 = vector.broadcast %221 : vector<16x1xf32> to vector<16x32xf32>
    %230 = arith.subf %217, %229 : vector<16x32xf32>
    %cst_123 = arith.constant 9.99999974E-6 : f32
    %231 = vector.broadcast %cst_123 : f32 to vector<16x1xf32>
    %232 = arith.addf %228, %231 : vector<16x1xf32>
    %233 = math.rsqrt %232 : vector<16x1xf32>
    %234 = vector.broadcast %233 : vector<16x1xf32> to vector<16x32xf32>
    %235 = arith.mulf %230, %234 : vector<16x32xf32>
    %c0_124 = arith.constant 0 : index
    %c0_125 = arith.constant 0 : index
    %236 = vector.load %arg6[%c0_124, %c0_125] : memref<1x32xf32, #tpu.memory_space<vmem>>, vector<1x32xf32>
    %237 = vector.broadcast %236 : vector<1x32xf32> to vector<16x32xf32>
    %238 = arith.mulf %237, %235 : vector<16x32xf32>
    %c0_126 = arith.constant 0 : index
    %c0_127 = arith.constant 0 : index
    %239 = vector.load %arg7[%c0_126, %c0_127] : memref<1x32xf32, #tpu.memory_space<vmem>>, vector<1x32xf32>
    %240 = vector.broadcast %239 : vector<1x32xf32> to vector<16x32xf32>
    %241 = arith.addf %238, %240 : vector<16x32xf32>
    %242 = arith.truncf %241 : vector<16x32xf32> to vector<16x32xbf16>
    %c0_128 = arith.constant 0 : index
    %c0_129 = arith.constant 0 : index
    %243 = vector.load %arg8[%c0_128, %c0_129] : memref<32x64xbf16, #tpu.memory_space<vmem>>, vector<32x64xbf16>
    %cst_130 = arith.constant dense<0.000000e+00> : vector<16x64xf32>
    %244 = tpu.matmul %242, %243, %cst_130 {dimension_numbers = #tpu.dot_dimension_numbers<[1], [0], [0], [1], [0, 0, 1, 1], [], []>} : vector<16x32xbf16>, vector<32x64xbf16>, vector<16x64xf32> -> vector<16x64xf32>
    %c0_131 = arith.constant 0 : index
    %c0_132 = arith.constant 0 : index
    %245 = vector.load %arg9[%c0_131, %c0_132] : memref<1x64xf32, #tpu.memory_space<vmem>>, vector<1x64xf32>
    %246 = vector.broadcast %245 : vector<1x64xf32> to vector<16x64xf32>
    %247 = arith.addf %244, %246 : vector<16x64xf32>
    %cst_133 = arith.constant 0.000000e+00 : f32
    %248 = vector.broadcast %cst_133 : f32 to vector<16x64xf32>
    %249 = arith.maximumf %247, %248 : vector<16x64xf32>
    %250 = arith.truncf %249 : vector<16x64xf32> to vector<16x64xbf16>
    %c0_134 = arith.constant 0 : index
    %c0_135 = arith.constant 0 : index
    %251 = vector.load %arg10[%c0_134, %c0_135] : memref<64x32xbf16, #tpu.memory_space<vmem>>, vector<64x32xbf16>
    %cst_136 = arith.constant dense<0.000000e+00> : vector<16x32xf32>
    %252 = tpu.matmul %250, %251, %cst_136 {dimension_numbers = #tpu.dot_dimension_numbers<[1], [0], [0], [1], [0, 0, 1, 1], [], []>} : vector<16x64xbf16>, vector<64x32xbf16>, vector<16x32xf32> -> vector<16x32xf32>
    %c0_137 = arith.constant 0 : index
    %c0_138 = arith.constant 0 : index
    %253 = vector.load %arg11[%c0_137, %c0_138] : memref<1x32xf32, #tpu.memory_space<vmem>>, vector<1x32xf32>
    %254 = vector.broadcast %253 : vector<1x32xf32> to vector<16x32xf32>
    %255 = arith.addf %252, %254 : vector<16x32xf32>
    %256 = arith.addf %255, %241 : vector<16x32xf32>
    %cst_139 = arith.constant dense<0.000000e+00> : vector<16xf32>
    %257 = vector.multi_reduction <add>, %256, %cst_139 [1] : vector<16x32xf32> to vector<16xf32>
    %258 = vector.shape_cast %257 : vector<16xf32> to vector<16x1xf32>
    %cst_140 = arith.constant 3.200000e+01 : f32
    %259 = vector.broadcast %cst_140 : f32 to vector<16x1xf32>
    %260 = arith.divf %258, %259 : vector<16x1xf32>
    %261 = vector.broadcast %260 : vector<16x1xf32> to vector<16x32xf32>
    %262 = arith.subf %256, %261 : vector<16x32xf32>
    %263 = arith.mulf %262, %262 : vector<16x32xf32>
    %cst_141 = arith.constant dense<0.000000e+00> : vector<16xf32>
    %264 = vector.multi_reduction <add>, %263, %cst_141 [1] : vector<16x32xf32> to vector<16xf32>
    %265 = vector.shape_cast %264 : vector<16xf32> to vector<16x1xf32>
    %cst_142 = arith.constant 3.200000e+01 : f32
    %266 = vector.broadcast %cst_142 : f32 to vector<16x1xf32>
    %267 = arith.divf %265, %266 : vector<16x1xf32>
    %268 = vector.broadcast %260 : vector<16x1xf32> to vector<16x32xf32>
    %269 = arith.subf %256, %268 : vector<16x32xf32>
    %cst_143 = arith.constant 9.99999974E-6 : f32
    %270 = vector.broadcast %cst_143 : f32 to vector<16x1xf32>
    %271 = arith.addf %267, %270 : vector<16x1xf32>
    %272 = math.rsqrt %271 : vector<16x1xf32>
    %273 = vector.broadcast %272 : vector<16x1xf32> to vector<16x32xf32>
    %274 = arith.mulf %269, %273 : vector<16x32xf32>
    %c0_144 = arith.constant 0 : index
    %c0_145 = arith.constant 0 : index
    %275 = vector.load %arg12[%c0_144, %c0_145] : memref<1x32xf32, #tpu.memory_space<vmem>>, vector<1x32xf32>
    %276 = vector.broadcast %275 : vector<1x32xf32> to vector<16x32xf32>
    %277 = arith.mulf %276, %274 : vector<16x32xf32>
    %c0_146 = arith.constant 0 : index
    %c0_147 = arith.constant 0 : index
    %278 = vector.load %arg13[%c0_146, %c0_147] : memref<1x32xf32, #tpu.memory_space<vmem>>, vector<1x32xf32>
    %279 = vector.broadcast %278 : vector<1x32xf32> to vector<16x32xf32>
    %280 = arith.addf %277, %279 : vector<16x32xf32>
    %281 = vector.shape_cast %280 : vector<16x32xf32> to vector<2x8x32xf32>
    %c0_148 = arith.constant 0 : index
    %c0_149 = arith.constant 0 : index
    %c0_150 = arith.constant 0 : index
    %282 = vector.load %arg14[%c0_148, %c0_149, %c0_150] : memref<2x8x32xf32, #tpu.memory_space<vmem>>, vector<2x8x32xf32>
    tpu.vector_store %arg14[%c0_148, %c0_149, %c0_150], %281 {strides = array<i32>} : memref<2x8x32xf32, #tpu.memory_space<vmem>>, vector<2x8x32xf32>,
    return
  }
  func.func @transform_0(%arg0: i32) -> (i32, i32, i32) {
    %c0_i32 = arith.constant 0 : i32
    %c0_i32_0 = arith.constant 0 : i32
    %c0_i32_1 = arith.constant 0 : i32
    return %arg0, %c0_i32, %c0_i32_0 : i32, i32, i32
  }
  func.func @transform_1(%arg0: i32) -> (i32, i32) {
    %c0_i32 = arith.constant 0 : i32
    %c0_i32_0 = arith.constant 0 : i32
    %c0_i32_1 = arith.constant 0 : i32
    return %c0_i32, %c0_i32_0 : i32, i32
  }
  func.func @transform_2(%arg0: i32) -> (i32, i32) {
    %c0_i32 = arith.constant 0 : i32
    %c0_i32_0 = arith.constant 0 : i32
    %c0_i32_1 = arith.constant 0 : i32
    return %c0_i32, %c0_i32_0 : i32, i32
  }
  func.func @transform_3(%arg0: i32) -> (i32, i32) {
    %c0_i32 = arith.constant 0 : i32
    %c0_i32_0 = arith.constant 0 : i32
    %c0_i32_1 = arith.constant 0 : i32
    return %c0_i32, %c0_i32_0 : i32, i32
  }
  func.func @transform_4(%arg0: i32) -> (i32, i32) {
    %c0_i32 = arith.constant 0 : i32
    %c0_i32_0 = arith.constant 0 : i32
    %c0_i32_1 = arith.constant 0 : i32
    return %c0_i32, %c0_i32_0 : i32, i32
  }
  func.func @transform_5(%arg0: i32) -> (i32, i32) {
    %c0_i32 = arith.constant 0 : i32
    %c0_i32_0 = arith.constant 0 : i32
    %c0_i32_1 = arith.constant 0 : i32
    return %c0_i32, %c0_i32_0 : i32, i32
  }
  func.func @transform_6(%arg0: i32) -> (i32, i32) {
    %c0_i32 = arith.constant 0 : i32
    %c0_i32_0 = arith.constant 0 : i32
    %c0_i32_1 = arith.constant 0 : i32
    return %c0_i32, %c0_i32_0 : i32, i32
  }
  func.func @transform_7(%arg0: i32) -> (i32, i32) {
    %c0_i32 = arith.constant 0 : i32
    %c0_i32_0 = arith.constant 0 : i32
    %c0_i32_1 = arith.constant 0 : i32
    return %c0_i32, %c0_i32_0 : i32, i32
  }
  func.func @transform_8(%arg0: i32) -> (i32, i32) {
    %c0_i32 = arith.constant 0 : i32
    %c0_i32_0 = arith.constant 0 : i32
    %c0_i32_1 = arith.constant 0 : i32
    return %c0_i32, %c0_i32_0 : i32, i32
  }
  func.func @transform_9(%arg0: i32) -> (i32, i32) {
    %c0_i32 = arith.constant 0 : i32
    %c0_i32_0 = arith.constant 0 : i32
    %c0_i32_1 = arith.constant 0 : i32
    return %c0_i32, %c0_i32_0 : i32, i32
  }
  func.func @transform_10(%arg0: i32) -> (i32, i32) {
    %c0_i32 = arith.constant 0 : i32
    %c0_i32_0 = arith.constant 0 : i32
    %c0_i32_1 = arith.constant 0 : i32
    return %c0_i32, %c0_i32_0 : i32, i32
  }
  func.func @transform_11(%arg0: i32) -> (i32, i32) {
    %c0_i32 = arith.constant 0 : i32
    %c0_i32_0 = arith.constant 0 : i32
    %c0_i32_1 = arith.constant 0 : i32
    return %c0_i32, %c0_i32_0 : i32, i32
  }
  func.func @transform_12(%arg0: i32) -> (i32, i32) {
    %c0_i32 = arith.constant 0 : i32
    %c0_i32_0 = arith.constant 0 : i32
    %c0_i32_1 = arith.constant 0 : i32
    return %c0_i32, %c0_i32_0 : i32, i32
  }
  func.func @transform_13(%arg0: i32) -> (i32, i32, i32) {
    %c0_i32 = arith.constant 0 : i32
    %c0_i32_0 = arith.constant 0 : i32
    %c0_i32_1 = arith.constant 0 : i32
    return %arg0, %c0_i32, %c0_i32_0 : i32, i32, i32
  }
}

module attributes {stable_mosaic.version = 11 : i64} {
  func.func @_encoder_layer_kernel(%arg0: i32, %arg1: memref<2x8x32xf32, #tpu.memory_space<vmem>>, %arg2: memref<32x96xbf16, #tpu.memory_space<vmem>>, %arg3: memref<1x96xf32, #tpu.memory_space<vmem>>, %arg4: memref<32x32xbf16, #tpu.memory_space<vmem>>, %arg5: memref<1x32xf32, #tpu.memory_space<vmem>>, %arg6: memref<1x32xf32, #tpu.memory_space<vmem>>, %arg7: memref<1x32xf32, #tpu.memory_space<vmem>>, %arg8: memref<32x64xbf16, #tpu.memory_space<vmem>>, %arg9: memref<1x64xf32, #tpu.memory_space<vmem>>, %arg10: memref<64x32xbf16, #tpu.memory_space<vmem>>, %arg11: memref<1x32xf32, #tpu.memory_space<vmem>>, %arg12: memref<1x32xf32, #tpu.memory_space<vmem>>, %arg13: memref<1x32xf32, #tpu.memory_space<vmem>>, %arg14: memref<2x8x32xf32, #tpu.memory_space<vmem>>, %arg15: memref<16x96xf32, #tpu.memory_space<vmem>>, %arg16: memref<16x32xf32, #tpu.memory_space<vmem>>) attributes {dimension_semantics = [#tpu.dimension_semantics<parallel>], iteration_bounds = array<i64: 1>, scalar_prefetch = 0 : i64, scratch_operands = 2 : i64, tpu.core_type = #tpu.core_type<tc>, window_params = [{transform_indices = @transform_0, window_bounds = array<i64: 2, 8, 32>}, {pipeline_mode = #tpu.pipeline_mode<synchronous>, transform_indices = @transform_1, window_bounds = array<i64: 32, 96>}, {pipeline_mode = #tpu.pipeline_mode<synchronous>, transform_indices = @transform_2, window_bounds = array<i64: 1, 96>}, {pipeline_mode = #tpu.pipeline_mode<synchronous>, transform_indices = @transform_3, window_bounds = array<i64: 32, 32>}, {pipeline_mode = #tpu.pipeline_mode<synchronous>, transform_indices = @transform_4, window_bounds = array<i64: 1, 32>}, {pipeline_mode = #tpu.pipeline_mode<synchronous>, transform_indices = @transform_5, window_bounds = array<i64: 1, 32>}, {pipeline_mode = #tpu.pipeline_mode<synchronous>, transform_indices = @transform_6, window_bounds = array<i64: 1, 32>}, {pipeline_mode = #tpu.pipeline_mode<synchronous>, transform_indices = @transform_7, window_bounds = array<i64: 32, 64>}, {pipeline_mode = #tpu.pipeline_mode<synchronous>, transform_indices = @transform_8, window_bounds = array<i64: 1, 64>}, {pipeline_mode = #tpu.pipeline_mode<synchronous>, transform_indices = @transform_9, window_bounds = array<i64: 64, 32>}, {pipeline_mode = #tpu.pipeline_mode<synchronous>, transform_indices = @transform_10, window_bounds = array<i64: 1, 32>}, {pipeline_mode = #tpu.pipeline_mode<synchronous>, transform_indices = @transform_11, window_bounds = array<i64: 1, 32>}, {pipeline_mode = #tpu.pipeline_mode<synchronous>, transform_indices = @transform_12, window_bounds = array<i64: 1, 32>}, {transform_indices = @transform_13, window_bounds = array<i64: 2, 8, 32>}]} {
    %c0 = arith.constant 0 : index
    %c0_0 = arith.constant 0 : index
    %c0_1 = arith.constant 0 : index
    %0 = vector.load %arg1[%c0, %c0_0, %c0_1] : memref<2x8x32xf32, #tpu.memory_space<vmem>>, vector<2x8x32xf32>
    %1 = vector.shape_cast %0 : vector<2x8x32xf32> to vector<16x32xf32>
    %2 = arith.truncf %1 : vector<16x32xf32> to vector<16x32xbf16>
    %c0_2 = arith.constant 0 : index
    %c0_3 = arith.constant 0 : index
    %3 = vector.load %arg2[%c0_2, %c0_3] : memref<32x96xbf16, #tpu.memory_space<vmem>>, vector<32x96xbf16>
    %cst = arith.constant dense<0.000000e+00> : vector<16x96xf32>
    %4 = tpu.matmul %2, %3, %cst {dimension_numbers = #tpu.dot_dimension_numbers<[1], [0], [0], [1], [0, 0, 1, 1], [], []>} : vector<16x32xbf16>, vector<32x96xbf16>, vector<16x96xf32> -> vector<16x96xf32>
    %c0_4 = arith.constant 0 : index
    %c0_5 = arith.constant 0 : index
    %5 = vector.load %arg3[%c0_4, %c0_5] : memref<1x96xf32, #tpu.memory_space<vmem>>, vector<1x96xf32>
    %6 = vector.broadcast %5 : vector<1x96xf32> to vector<16x96xf32>
    %7 = arith.addf %4, %6 : vector<16x96xf32>
    %c0_6 = arith.constant 0 : index
    %c0_7 = arith.constant 0 : index
    %8 = vector.load %arg15[%c0_6, %c0_7] : memref<16x96xf32, #tpu.memory_space<vmem>>, vector<16x96xf32>
    tpu.vector_store %arg15[%c0_6, %c0_7], %7 {strides = array<i32>} : memref<16x96xf32, #tpu.memory_space<vmem>>, vector<16x96xf32>,
    %cst_8 = arith.constant 0.000000e+00 : f32
    %9 = vector.broadcast %cst_8 : f32 to vector<8x32xf32>
    %c0_9 = arith.constant 0 : index
    %c0_10 = arith.constant 0 : index
    %10 = vector.load %arg15[%c0_9, %c0_10] : memref<16x96xf32, #tpu.memory_space<vmem>>, vector<8x8xf32>
    %cst_11 = arith.constant 0.353553385 : f32
    %11 = vector.broadcast %cst_11 : f32 to vector<8x8xf32>
    %12 = arith.mulf %10, %11 : vector<8x8xf32>
    %c0_12 = arith.constant 0 : index
    %c32 = arith.constant 32 : index
    %13 = vector.load %arg15[%c0_12, %c32] : memref<16x96xf32, #tpu.memory_space<vmem>>, vector<8x8xf32>
    %c0_13 = arith.constant 0 : index
    %c64 = arith.constant 64 : index
    %14 = vector.load %arg15[%c0_13, %c64] : memref<16x96xf32, #tpu.memory_space<vmem>>, vector<8x8xf32>
    %15 = arith.truncf %12 : vector<8x8xf32> to vector<8x8xbf16>
    %16 = arith.truncf %13 : vector<8x8xf32> to vector<8x8xbf16>
    %cst_14 = arith.constant dense<0.000000e+00> : vector<8x8xf32>
    %17 = tpu.matmul %15, %16, %cst_14 {dimension_numbers = #tpu.dot_dimension_numbers<[1], [1], [0], [0], [0, 0, 1, 0], [], []>} : vector<8x8xbf16>, vector<8x8xbf16>, vector<8x8xf32> -> vector<8x8xf32>
    %cst_15 = arith.constant dense<0xFF800000> : vector<8xf32>
    %18 = vector.multi_reduction <maximumf>, %17, %cst_15 [1] : vector<8x8xf32> to vector<8xf32>
    %19 = vector.shape_cast %18 : vector<8xf32> to vector<8x1xf32>
    %20 = vector.broadcast %19 : vector<8x1xf32> to vector<8x8xf32>
    %21 = arith.subf %17, %20 : vector<8x8xf32>
    %22 = math.exp %21 : vector<8x8xf32>
    %cst_16 = arith.constant dense<0.000000e+00> : vector<8xf32>
    %23 = vector.multi_reduction <add>, %22, %cst_16 [1] : vector<8x8xf32> to vector<8xf32>
    %24 = vector.shape_cast %23 : vector<8xf32> to vector<8x1xf32>
    %25 = tpu.reciprocal %24 {approx = true} : vector<8x1xf32> -> vector<8x1xf32>
    %26 = vector.broadcast %25 : vector<8x1xf32> to vector<8x8xf32>
    %27 = arith.mulf %22, %26 : vector<8x8xf32>
    %28 = arith.truncf %27 : vector<8x8xf32> to vector<8x8xbf16>
    %29 = arith.truncf %14 : vector<8x8xf32> to vector<8x8xbf16>
    %cst_17 = arith.constant dense<0.000000e+00> : vector<8x8xf32>
    %30 = tpu.matmul %28, %29, %cst_17 {dimension_numbers = #tpu.dot_dimension_numbers<[1], [0], [0], [1], [0, 0, 1, 1], [], []>} : vector<8x8xbf16>, vector<8x8xbf16>, vector<8x8xf32> -> vector<8x8xf32>
    %31 = arith.truncf %30 : vector<8x8xf32> to vector<8x8xbf16>
    %c0_18 = arith.constant 0 : index
    %c0_19 = arith.constant 0 : index
    %32 = vector.load %arg4[%c0_18, %c0_19] : memref<32x32xbf16, #tpu.memory_space<vmem>>, vector<8x32xbf16>
    %cst_20 = arith.constant dense<0.000000e+00> : vector<8x32xf32>
    %33 = tpu.matmul %31, %32, %cst_20 {dimension_numbers = #tpu.dot_dimension_numbers<[1], [0], [0], [1], [0, 0, 1, 1], [], []>} : vector<8x8xbf16>, vector<8x32xbf16>, vector<8x32xf32> -> vector<8x32xf32>
    %34 = arith.addf %9, %33 : vector<8x32xf32>
    %c0_21 = arith.constant 0 : index
    %c8 = arith.constant 8 : index
    %35 = vector.load %arg15[%c0_21, %c8] : memref<16x96xf32, #tpu.memory_space<vmem>>, vector<8x8xf32>
    %cst_22 = arith.constant 0.353553385 : f32
    %36 = vector.broadcast %cst_22 : f32 to vector<8x8xf32>
    %37 = arith.mulf %35, %36 : vector<8x8xf32>
    %c0_23 = arith.constant 0 : index
    %c40 = arith.constant 40 : index
    %38 = vector.load %arg15[%c0_23, %c40] : memref<16x96xf32, #tpu.memory_space<vmem>>, vector<8x8xf32>
    %c0_24 = arith.constant 0 : index
    %c72 = arith.constant 72 : index
    %39 = vector.load %arg15[%c0_24, %c72] : memref<16x96xf32, #tpu.memory_space<vmem>>, vector<8x8xf32>
    %40 = arith.truncf %37 : vector<8x8xf32> to vector<8x8xbf16>
    %41 = arith.truncf %38 : vector<8x8xf32> to vector<8x8xbf16>
    %cst_25 = arith.constant dense<0.000000e+00> : vector<8x8xf32>
    %42 = tpu.matmul %40, %41, %cst_25 {dimension_numbers = #tpu.dot_dimension_numbers<[1], [1], [0], [0], [0, 0, 1, 0], [], []>} : vector<8x8xbf16>, vector<8x8xbf16>, vector<8x8xf32> -> vector<8x8xf32>
    %cst_26 = arith.constant dense<0xFF800000> : vector<8xf32>
    %43 = vector.multi_reduction <maximumf>, %42, %cst_26 [1] : vector<8x8xf32> to vector<8xf32>
    %44 = vector.shape_cast %43 : vector<8xf32> to vector<8x1xf32>
    %45 = vector.broadcast %44 : vector<8x1xf32> to vector<8x8xf32>
    %46 = arith.subf %42, %45 : vector<8x8xf32>
    %47 = math.exp %46 : vector<8x8xf32>
    %cst_27 = arith.constant dense<0.000000e+00> : vector<8xf32>
    %48 = vector.multi_reduction <add>, %47, %cst_27 [1] : vector<8x8xf32> to vector<8xf32>
    %49 = vector.shape_cast %48 : vector<8xf32> to vector<8x1xf32>
    %50 = tpu.reciprocal %49 {approx = true} : vector<8x1xf32> -> vector<8x1xf32>
    %51 = vector.broadcast %50 : vector<8x1xf32> to vector<8x8xf32>
    %52 = arith.mulf %47, %51 : vector<8x8xf32>
    %53 = arith.truncf %52 : vector<8x8xf32> to vector<8x8xbf16>
    %54 = arith.truncf %39 : vector<8x8xf32> to vector<8x8xbf16>
    %cst_28 = arith.constant dense<0.000000e+00> : vector<8x8xf32>
    %55 = tpu.matmul %53, %54, %cst_28 {dimension_numbers = #tpu.dot_dimension_numbers<[1], [0], [0], [1], [0, 0, 1, 1], [], []>} : vector<8x8xbf16>, vector<8x8xbf16>, vector<8x8xf32> -> vector<8x8xf32>
    %56 = arith.truncf %55 : vector<8x8xf32> to vector<8x8xbf16>
    %c8_29 = arith.constant 8 : index
    %c0_30 = arith.constant 0 : index
    %57 = vector.load %arg4[%c8_29, %c0_30] : memref<32x32xbf16, #tpu.memory_space<vmem>>, vector<8x32xbf16>
    %cst_31 = arith.constant dense<0.000000e+00> : vector<8x32xf32>
    %58 = tpu.matmul %56, %57, %cst_31 {dimension_numbers = #tpu.dot_dimension_numbers<[1], [0], [0], [1], [0, 0, 1, 1], [], []>} : vector<8x8xbf16>, vector<8x32xbf16>, vector<8x32xf32> -> vector<8x32xf32>
    %59 = arith.addf %34, %58 : vector<8x32xf32>
    %c0_32 = arith.constant 0 : index
    %c16 = arith.constant 16 : index
    %60 = vector.load %arg15[%c0_32, %c16] : memref<16x96xf32, #tpu.memory_space<vmem>>, vector<8x8xf32>
    %cst_33 = arith.constant 0.353553385 : f32
    %61 = vector.broadcast %cst_33 : f32 to vector<8x8xf32>
    %62 = arith.mulf %60, %61 : vector<8x8xf32>
    %c0_34 = arith.constant 0 : index
    %c48 = arith.constant 48 : index
    %63 = vector.load %arg15[%c0_34, %c48] : memref<16x96xf32, #tpu.memory_space<vmem>>, vector<8x8xf32>
    %c0_35 = arith.constant 0 : index
    %c80 = arith.constant 80 : index
    %64 = vector.load %arg15[%c0_35, %c80] : memref<16x96xf32, #tpu.memory_space<vmem>>, vector<8x8xf32>
    %65 = arith.truncf %62 : vector<8x8xf32> to vector<8x8xbf16>
    %66 = arith.truncf %63 : vector<8x8xf32> to vector<8x8xbf16>
    %cst_36 = arith.constant dense<0.000000e+00> : vector<8x8xf32>
    %67 = tpu.matmul %65, %66, %cst_36 {dimension_numbers = #tpu.dot_dimension_numbers<[1], [1], [0], [0], [0, 0, 1, 0], [], []>} : vector<8x8xbf16>, vector<8x8xbf16>, vector<8x8xf32> -> vector<8x8xf32>
    %cst_37 = arith.constant dense<0xFF800000> : vector<8xf32>
    %68 = vector.multi_reduction <maximumf>, %67, %cst_37 [1] : vector<8x8xf32> to vector<8xf32>
    %69 = vector.shape_cast %68 : vector<8xf32> to vector<8x1xf32>
    %70 = vector.broadcast %69 : vector<8x1xf32> to vector<8x8xf32>
    %71 = arith.subf %67, %70 : vector<8x8xf32>
    %72 = math.exp %71 : vector<8x8xf32>
    %cst_38 = arith.constant dense<0.000000e+00> : vector<8xf32>
    %73 = vector.multi_reduction <add>, %72, %cst_38 [1] : vector<8x8xf32> to vector<8xf32>
    %74 = vector.shape_cast %73 : vector<8xf32> to vector<8x1xf32>
    %75 = tpu.reciprocal %74 {approx = true} : vector<8x1xf32> -> vector<8x1xf32>
    %76 = vector.broadcast %75 : vector<8x1xf32> to vector<8x8xf32>
    %77 = arith.mulf %72, %76 : vector<8x8xf32>
    %78 = arith.truncf %77 : vector<8x8xf32> to vector<8x8xbf16>
    %79 = arith.truncf %64 : vector<8x8xf32> to vector<8x8xbf16>
    %cst_39 = arith.constant dense<0.000000e+00> : vector<8x8xf32>
    %80 = tpu.matmul %78, %79, %cst_39 {dimension_numbers = #tpu.dot_dimension_numbers<[1], [0], [0], [1], [0, 0, 1, 1], [], []>} : vector<8x8xbf16>, vector<8x8xbf16>, vector<8x8xf32> -> vector<8x8xf32>
    %81 = arith.truncf %80 : vector<8x8xf32> to vector<8x8xbf16>
    %c16_40 = arith.constant 16 : index
    %c0_41 = arith.constant 0 : index
    %82 = vector.load %arg4[%c16_40, %c0_41] : memref<32x32xbf16, #tpu.memory_space<vmem>>, vector<8x32xbf16>
    %cst_42 = arith.constant dense<0.000000e+00> : vector<8x32xf32>
    %83 = tpu.matmul %81, %82, %cst_42 {dimension_numbers = #tpu.dot_dimension_numbers<[1], [0], [0], [1], [0, 0, 1, 1], [], []>} : vector<8x8xbf16>, vector<8x32xbf16>, vector<8x32xf32> -> vector<8x32xf32>
    %84 = arith.addf %59, %83 : vector<8x32xf32>
    %c0_43 = arith.constant 0 : index
    %c24 = arith.constant 24 : index
    %85 = vector.load %arg15[%c0_43, %c24] : memref<16x96xf32, #tpu.memory_space<vmem>>, vector<8x8xf32>
    %cst_44 = arith.constant 0.353553385 : f32
    %86 = vector.broadcast %cst_44 : f32 to vector<8x8xf32>
    %87 = arith.mulf %85, %86 : vector<8x8xf32>
    %c0_45 = arith.constant 0 : index
    %c56 = arith.constant 56 : index
    %88 = vector.load %arg15[%c0_45, %c56] : memref<16x96xf32, #tpu.memory_space<vmem>>, vector<8x8xf32>
    %c0_46 = arith.constant 0 : index
    %c88 = arith.constant 88 : index
    %89 = vector.load %arg15[%c0_46, %c88] : memref<16x96xf32, #tpu.memory_space<vmem>>, vector<8x8xf32>
    %90 = arith.truncf %87 : vector<8x8xf32> to vector<8x8xbf16>
    %91 = arith.truncf %88 : vector<8x8xf32> to vector<8x8xbf16>
    %cst_47 = arith.constant dense<0.000000e+00> : vector<8x8xf32>
    %92 = tpu.matmul %90, %91, %cst_47 {dimension_numbers = #tpu.dot_dimension_numbers<[1], [1], [0], [0], [0, 0, 1, 0], [], []>} : vector<8x8xbf16>, vector<8x8xbf16>, vector<8x8xf32> -> vector<8x8xf32>
    %cst_48 = arith.constant dense<0xFF800000> : vector<8xf32>
    %93 = vector.multi_reduction <maximumf>, %92, %cst_48 [1] : vector<8x8xf32> to vector<8xf32>
    %94 = vector.shape_cast %93 : vector<8xf32> to vector<8x1xf32>
    %95 = vector.broadcast %94 : vector<8x1xf32> to vector<8x8xf32>
    %96 = arith.subf %92, %95 : vector<8x8xf32>
    %97 = math.exp %96 : vector<8x8xf32>
    %cst_49 = arith.constant dense<0.000000e+00> : vector<8xf32>
    %98 = vector.multi_reduction <add>, %97, %cst_49 [1] : vector<8x8xf32> to vector<8xf32>
    %99 = vector.shape_cast %98 : vector<8xf32> to vector<8x1xf32>
    %100 = tpu.reciprocal %99 {approx = true} : vector<8x1xf32> -> vector<8x1xf32>
    %101 = vector.broadcast %100 : vector<8x1xf32> to vector<8x8xf32>
    %102 = arith.mulf %97, %101 : vector<8x8xf32>
    %103 = arith.truncf %102 : vector<8x8xf32> to vector<8x8xbf16>
    %104 = arith.truncf %89 : vector<8x8xf32> to vector<8x8xbf16>
    %cst_50 = arith.constant dense<0.000000e+00> : vector<8x8xf32>
    %105 = tpu.matmul %103, %104, %cst_50 {dimension_numbers = #tpu.dot_dimension_numbers<[1], [0], [0], [1], [0, 0, 1, 1], [], []>} : vector<8x8xbf16>, vector<8x8xbf16>, vector<8x8xf32> -> vector<8x8xf32>
    %106 = arith.truncf %105 : vector<8x8xf32> to vector<8x8xbf16>
    %c24_51 = arith.constant 24 : index
    %c0_52 = arith.constant 0 : index
    %107 = vector.load %arg4[%c24_51, %c0_52] : memref<32x32xbf16, #tpu.memory_space<vmem>>, vector<8x32xbf16>
    %cst_53 = arith.constant dense<0.000000e+00> : vector<8x32xf32>
    %108 = tpu.matmul %106, %107, %cst_53 {dimension_numbers = #tpu.dot_dimension_numbers<[1], [0], [0], [1], [0, 0, 1, 1], [], []>} : vector<8x8xbf16>, vector<8x32xbf16>, vector<8x32xf32> -> vector<8x32xf32>
    %109 = arith.addf %84, %108 : vector<8x32xf32>
    %c0_54 = arith.constant 0 : index
    %c0_55 = arith.constant 0 : index
    %110 = vector.load %arg16[%c0_54, %c0_55] : memref<16x32xf32, #tpu.memory_space<vmem>>, vector<8x32xf32>
    tpu.vector_store %arg16[%c0_54, %c0_55], %109 {strides = array<i32>} : memref<16x32xf32, #tpu.memory_space<vmem>>, vector<8x32xf32>,
    %cst_56 = arith.constant 0.000000e+00 : f32
    %111 = vector.broadcast %cst_56 : f32 to vector<8x32xf32>
    %c8_57 = arith.constant 8 : index
    %c0_58 = arith.constant 0 : index
    %112 = vector.load %arg15[%c8_57, %c0_58] : memref<16x96xf32, #tpu.memory_space<vmem>>, vector<8x8xf32>
    %cst_59 = arith.constant 0.353553385 : f32
    %113 = vector.broadcast %cst_59 : f32 to vector<8x8xf32>
    %114 = arith.mulf %112, %113 : vector<8x8xf32>
    %c8_60 = arith.constant 8 : index
    %c32_61 = arith.constant 32 : index
    %115 = vector.load %arg15[%c8_60, %c32_61] : memref<16x96xf32, #tpu.memory_space<vmem>>, vector<8x8xf32>
    %c8_62 = arith.constant 8 : index
    %c64_63 = arith.constant 64 : index
    %116 = vector.load %arg15[%c8_62, %c64_63] : memref<16x96xf32, #tpu.memory_space<vmem>>, vector<8x8xf32>
    %117 = arith.truncf %114 : vector<8x8xf32> to vector<8x8xbf16>
    %118 = arith.truncf %115 : vector<8x8xf32> to vector<8x8xbf16>
    %cst_64 = arith.constant dense<0.000000e+00> : vector<8x8xf32>
    %119 = tpu.matmul %117, %118, %cst_64 {dimension_numbers = #tpu.dot_dimension_numbers<[1], [1], [0], [0], [0, 0, 1, 0], [], []>} : vector<8x8xbf16>, vector<8x8xbf16>, vector<8x8xf32> -> vector<8x8xf32>
    %cst_65 = arith.constant dense<0xFF800000> : vector<8xf32>
    %120 = vector.multi_reduction <maximumf>, %119, %cst_65 [1] : vector<8x8xf32> to vector<8xf32>
    %121 = vector.shape_cast %120 : vector<8xf32> to vector<8x1xf32>
    %122 = vector.broadcast %121 : vector<8x1xf32> to vector<8x8xf32>
    %123 = arith.subf %119, %122 : vector<8x8xf32>
    %124 = math.exp %123 : vector<8x8xf32>
    %cst_66 = arith.constant dense<0.000000e+00> : vector<8xf32>
    %125 = vector.multi_reduction <add>, %124, %cst_66 [1] : vector<8x8xf32> to vector<8xf32>
    %126 = vector.shape_cast %125 : vector<8xf32> to vector<8x1xf32>
    %127 = tpu.reciprocal %126 {approx = true} : vector<8x1xf32> -> vector<8x1xf32>
    %128 = vector.broadcast %127 : vector<8x1xf32> to vector<8x8xf32>
    %129 = arith.mulf %124, %128 : vector<8x8xf32>
    %130 = arith.truncf %129 : vector<8x8xf32> to vector<8x8xbf16>
    %131 = arith.truncf %116 : vector<8x8xf32> to vector<8x8xbf16>
    %cst_67 = arith.constant dense<0.000000e+00> : vector<8x8xf32>
    %132 = tpu.matmul %130, %131, %cst_67 {dimension_numbers = #tpu.dot_dimension_numbers<[1], [0], [0], [1], [0, 0, 1, 1], [], []>} : vector<8x8xbf16>, vector<8x8xbf16>, vector<8x8xf32> -> vector<8x8xf32>
    %133 = arith.truncf %132 : vector<8x8xf32> to vector<8x8xbf16>
    %c0_68 = arith.constant 0 : index
    %c0_69 = arith.constant 0 : index
    %134 = vector.load %arg4[%c0_68, %c0_69] : memref<32x32xbf16, #tpu.memory_space<vmem>>, vector<8x32xbf16>
    %cst_70 = arith.constant dense<0.000000e+00> : vector<8x32xf32>
    %135 = tpu.matmul %133, %134, %cst_70 {dimension_numbers = #tpu.dot_dimension_numbers<[1], [0], [0], [1], [0, 0, 1, 1], [], []>} : vector<8x8xbf16>, vector<8x32xbf16>, vector<8x32xf32> -> vector<8x32xf32>
    %136 = arith.addf %111, %135 : vector<8x32xf32>
    %c8_71 = arith.constant 8 : index
    %c8_72 = arith.constant 8 : index
    %137 = vector.load %arg15[%c8_71, %c8_72] : memref<16x96xf32, #tpu.memory_space<vmem>>, vector<8x8xf32>
    %cst_73 = arith.constant 0.353553385 : f32
    %138 = vector.broadcast %cst_73 : f32 to vector<8x8xf32>
    %139 = arith.mulf %137, %138 : vector<8x8xf32>
    %c8_74 = arith.constant 8 : index
    %c40_75 = arith.constant 40 : index
    %140 = vector.load %arg15[%c8_74, %c40_75] : memref<16x96xf32, #tpu.memory_space<vmem>>, vector<8x8xf32>
    %c8_76 = arith.constant 8 : index
    %c72_77 = arith.constant 72 : index
    %141 = vector.load %arg15[%c8_76, %c72_77] : memref<16x96xf32, #tpu.memory_space<vmem>>, vector<8x8xf32>
    %142 = arith.truncf %139 : vector<8x8xf32> to vector<8x8xbf16>
    %143 = arith.truncf %140 : vector<8x8xf32> to vector<8x8xbf16>
    %cst_78 = arith.constant dense<0.000000e+00> : vector<8x8xf32>
    %144 = tpu.matmul %142, %143, %cst_78 {dimension_numbers = #tpu.dot_dimension_numbers<[1], [1], [0], [0], [0, 0, 1, 0], [], []>} : vector<8x8xbf16>, vector<8x8xbf16>, vector<8x8xf32> -> vector<8x8xf32>
    %cst_79 = arith.constant dense<0xFF800000> : vector<8xf32>
    %145 = vector.multi_reduction <maximumf>, %144, %cst_79 [1] : vector<8x8xf32> to vector<8xf32>
    %146 = vector.shape_cast %145 : vector<8xf32> to vector<8x1xf32>
    %147 = vector.broadcast %146 : vector<8x1xf32> to vector<8x8xf32>
    %148 = arith.subf %144, %147 : vector<8x8xf32>
    %149 = math.exp %148 : vector<8x8xf32>
    %cst_80 = arith.constant dense<0.000000e+00> : vector<8xf32>
    %150 = vector.multi_reduction <add>, %149, %cst_80 [1] : vector<8x8xf32> to vector<8xf32>
    %151 = vector.shape_cast %150 : vector<8xf32> to vector<8x1xf32>
    %152 = tpu.reciprocal %151 {approx = true} : vector<8x1xf32> -> vector<8x1xf32>
    %153 = vector.broadcast %152 : vector<8x1xf32> to vector<8x8xf32>
    %154 = arith.mulf %149, %153 : vector<8x8xf32>
    %155 = arith.truncf %154 : vector<8x8xf32> to vector<8x8xbf16>
    %156 = arith.truncf %141 : vector<8x8xf32> to vector<8x8xbf16>
    %cst_81 = arith.constant dense<0.000000e+00> : vector<8x8xf32>
    %157 = tpu.matmul %155, %156, %cst_81 {dimension_numbers = #tpu.dot_dimension_numbers<[1], [0], [0], [1], [0, 0, 1, 1], [], []>} : vector<8x8xbf16>, vector<8x8xbf16>, vector<8x8xf32> -> vector<8x8xf32>
    %158 = arith.truncf %157 : vector<8x8xf32> to vector<8x8xbf16>
    %c8_82 = arith.constant 8 : index
    %c0_83 = arith.constant 0 : index
    %159 = vector.load %arg4[%c8_82, %c0_83] : memref<32x32xbf16, #tpu.memory_space<vmem>>, vector<8x32xbf16>
    %cst_84 = arith.constant dense<0.000000e+00> : vector<8x32xf32>
    %160 = tpu.matmul %158, %159, %cst_84 {dimension_numbers = #tpu.dot_dimension_numbers<[1], [0], [0], [1], [0, 0, 1, 1], [], []>} : vector<8x8xbf16>, vector<8x32xbf16>, vector<8x32xf32> -> vector<8x32xf32>
    %161 = arith.addf %136, %160 : vector<8x32xf32>
    %c8_85 = arith.constant 8 : index
    %c16_86 = arith.constant 16 : index
    %162 = vector.load %arg15[%c8_85, %c16_86] : memref<16x96xf32, #tpu.memory_space<vmem>>, vector<8x8xf32>
    %cst_87 = arith.constant 0.353553385 : f32
    %163 = vector.broadcast %cst_87 : f32 to vector<8x8xf32>
    %164 = arith.mulf %162, %163 : vector<8x8xf32>
    %c8_88 = arith.constant 8 : index
    %c48_89 = arith.constant 48 : index
    %165 = vector.load %arg15[%c8_88, %c48_89] : memref<16x96xf32, #tpu.memory_space<vmem>>, vector<8x8xf32>
    %c8_90 = arith.constant 8 : index
    %c80_91 = arith.constant 80 : index
    %166 = vector.load %arg15[%c8_90, %c80_91] : memref<16x96xf32, #tpu.memory_space<vmem>>, vector<8x8xf32>
    %167 = arith.truncf %164 : vector<8x8xf32> to vector<8x8xbf16>
    %168 = arith.truncf %165 : vector<8x8xf32> to vector<8x8xbf16>
    %cst_92 = arith.constant dense<0.000000e+00> : vector<8x8xf32>
    %169 = tpu.matmul %167, %168, %cst_92 {dimension_numbers = #tpu.dot_dimension_numbers<[1], [1], [0], [0], [0, 0, 1, 0], [], []>} : vector<8x8xbf16>, vector<8x8xbf16>, vector<8x8xf32> -> vector<8x8xf32>
    %cst_93 = arith.constant dense<0xFF800000> : vector<8xf32>
    %170 = vector.multi_reduction <maximumf>, %169, %cst_93 [1] : vector<8x8xf32> to vector<8xf32>
    %171 = vector.shape_cast %170 : vector<8xf32> to vector<8x1xf32>
    %172 = vector.broadcast %171 : vector<8x1xf32> to vector<8x8xf32>
    %173 = arith.subf %169, %172 : vector<8x8xf32>
    %174 = math.exp %173 : vector<8x8xf32>
    %cst_94 = arith.constant dense<0.000000e+00> : vector<8xf32>
    %175 = vector.multi_reduction <add>, %174, %cst_94 [1] : vector<8x8xf32> to vector<8xf32>
    %176 = vector.shape_cast %175 : vector<8xf32> to vector<8x1xf32>
    %177 = tpu.reciprocal %176 {approx = true} : vector<8x1xf32> -> vector<8x1xf32>
    %178 = vector.broadcast %177 : vector<8x1xf32> to vector<8x8xf32>
    %179 = arith.mulf %174, %178 : vector<8x8xf32>
    %180 = arith.truncf %179 : vector<8x8xf32> to vector<8x8xbf16>
    %181 = arith.truncf %166 : vector<8x8xf32> to vector<8x8xbf16>
    %cst_95 = arith.constant dense<0.000000e+00> : vector<8x8xf32>
    %182 = tpu.matmul %180, %181, %cst_95 {dimension_numbers = #tpu.dot_dimension_numbers<[1], [0], [0], [1], [0, 0, 1, 1], [], []>} : vector<8x8xbf16>, vector<8x8xbf16>, vector<8x8xf32> -> vector<8x8xf32>
    %183 = arith.truncf %182 : vector<8x8xf32> to vector<8x8xbf16>
    %c16_96 = arith.constant 16 : index
    %c0_97 = arith.constant 0 : index
    %184 = vector.load %arg4[%c16_96, %c0_97] : memref<32x32xbf16, #tpu.memory_space<vmem>>, vector<8x32xbf16>
    %cst_98 = arith.constant dense<0.000000e+00> : vector<8x32xf32>
    %185 = tpu.matmul %183, %184, %cst_98 {dimension_numbers = #tpu.dot_dimension_numbers<[1], [0], [0], [1], [0, 0, 1, 1], [], []>} : vector<8x8xbf16>, vector<8x32xbf16>, vector<8x32xf32> -> vector<8x32xf32>
    %186 = arith.addf %161, %185 : vector<8x32xf32>
    %c8_99 = arith.constant 8 : index
    %c24_100 = arith.constant 24 : index
    %187 = vector.load %arg15[%c8_99, %c24_100] : memref<16x96xf32, #tpu.memory_space<vmem>>, vector<8x8xf32>
    %cst_101 = arith.constant 0.353553385 : f32
    %188 = vector.broadcast %cst_101 : f32 to vector<8x8xf32>
    %189 = arith.mulf %187, %188 : vector<8x8xf32>
    %c8_102 = arith.constant 8 : index
    %c56_103 = arith.constant 56 : index
    %190 = vector.load %arg15[%c8_102, %c56_103] : memref<16x96xf32, #tpu.memory_space<vmem>>, vector<8x8xf32>
    %c8_104 = arith.constant 8 : index
    %c88_105 = arith.constant 88 : index
    %191 = vector.load %arg15[%c8_104, %c88_105] : memref<16x96xf32, #tpu.memory_space<vmem>>, vector<8x8xf32>
    %192 = arith.truncf %189 : vector<8x8xf32> to vector<8x8xbf16>
    %193 = arith.truncf %190 : vector<8x8xf32> to vector<8x8xbf16>
    %cst_106 = arith.constant dense<0.000000e+00> : vector<8x8xf32>
    %194 = tpu.matmul %192, %193, %cst_106 {dimension_numbers = #tpu.dot_dimension_numbers<[1], [1], [0], [0], [0, 0, 1, 0], [], []>} : vector<8x8xbf16>, vector<8x8xbf16>, vector<8x8xf32> -> vector<8x8xf32>
    %cst_107 = arith.constant dense<0xFF800000> : vector<8xf32>
    %195 = vector.multi_reduction <maximumf>, %194, %cst_107 [1] : vector<8x8xf32> to vector<8xf32>
    %196 = vector.shape_cast %195 : vector<8xf32> to vector<8x1xf32>
    %197 = vector.broadcast %196 : vector<8x1xf32> to vector<8x8xf32>
    %198 = arith.subf %194, %197 : vector<8x8xf32>
    %199 = math.exp %198 : vector<8x8xf32>
    %cst_108 = arith.constant dense<0.000000e+00> : vector<8xf32>
    %200 = vector.multi_reduction <add>, %199, %cst_108 [1] : vector<8x8xf32> to vector<8xf32>
    %201 = vector.shape_cast %200 : vector<8xf32> to vector<8x1xf32>
    %202 = tpu.reciprocal %201 {approx = true} : vector<8x1xf32> -> vector<8x1xf32>
    %203 = vector.broadcast %202 : vector<8x1xf32> to vector<8x8xf32>
    %204 = arith.mulf %199, %203 : vector<8x8xf32>
    %205 = arith.truncf %204 : vector<8x8xf32> to vector<8x8xbf16>
    %206 = arith.truncf %191 : vector<8x8xf32> to vector<8x8xbf16>
    %cst_109 = arith.constant dense<0.000000e+00> : vector<8x8xf32>
    %207 = tpu.matmul %205, %206, %cst_109 {dimension_numbers = #tpu.dot_dimension_numbers<[1], [0], [0], [1], [0, 0, 1, 1], [], []>} : vector<8x8xbf16>, vector<8x8xbf16>, vector<8x8xf32> -> vector<8x8xf32>
    %208 = arith.truncf %207 : vector<8x8xf32> to vector<8x8xbf16>
    %c24_110 = arith.constant 24 : index
    %c0_111 = arith.constant 0 : index
    %209 = vector.load %arg4[%c24_110, %c0_111] : memref<32x32xbf16, #tpu.memory_space<vmem>>, vector<8x32xbf16>
    %cst_112 = arith.constant dense<0.000000e+00> : vector<8x32xf32>
    %210 = tpu.matmul %208, %209, %cst_112 {dimension_numbers = #tpu.dot_dimension_numbers<[1], [0], [0], [1], [0, 0, 1, 1], [], []>} : vector<8x8xbf16>, vector<8x32xbf16>, vector<8x32xf32> -> vector<8x32xf32>
    %211 = arith.addf %186, %210 : vector<8x32xf32>
    %c8_113 = arith.constant 8 : index
    %c0_114 = arith.constant 0 : index
    %212 = vector.load %arg16[%c8_113, %c0_114] : memref<16x32xf32, #tpu.memory_space<vmem>>, vector<8x32xf32>
    tpu.vector_store %arg16[%c8_113, %c0_114], %211 {strides = array<i32>} : memref<16x32xf32, #tpu.memory_space<vmem>>, vector<8x32xf32>,
    %c0_115 = arith.constant 0 : index
    %c0_116 = arith.constant 0 : index
    %213 = vector.load %arg16[%c0_115, %c0_116] : memref<16x32xf32, #tpu.memory_space<vmem>>, vector<16x32xf32>
    %c0_117 = arith.constant 0 : index
    %c0_118 = arith.constant 0 : index
    %214 = vector.load %arg5[%c0_117, %c0_118] : memref<1x32xf32, #tpu.memory_space<vmem>>, vector<1x32xf32>
    %215 = vector.broadcast %214 : vector<1x32xf32> to vector<16x32xf32>
    %216 = arith.addf %213, %215 : vector<16x32xf32>
    %217 = arith.addf %216, %1 : vector<16x32xf32>
    %cst_119 = arith.constant dense<0.000000e+00> : vector<16xf32>
    %218 = vector.multi_reduction <add>, %217, %cst_119 [1] : vector<16x32xf32> to vector<16xf32>
    %219 = vector.shape_cast %218 : vector<16xf32> to vector<16x1xf32>
    %cst_120 = arith.constant 3.200000e+01 : f32
    %220 = vector.broadcast %cst_120 : f32 to vector<16x1xf32>
    %221 = arith.divf %219, %220 : vector<16x1xf32>
    %222 = vector.broadcast %221 : vector<16x1xf32> to vector<16x32xf32>
    %223 = arith.subf %217, %222 : vector<16x32xf32>
    %224 = arith.mulf %223, %223 : vector<16x32xf32>
    %cst_121 = arith.constant dense<0.000000e+00> : vector<16xf32>
    %225 = vector.multi_reduction <add>, %224, %cst_121 [1] : vector<16x32xf32> to vector<16xf32>
    %226 = vector.shape_cast %225 : vector<16xf32> to vector<16x1xf32>
    %cst_122 = arith.constant 3.200000e+01 : f32
    %227 = vector.broadcast %cst_122 : f32 to vector<16x1xf32>
    %228 = arith.divf %226, %227 : vector<16x1xf32>
    %229 = vector.broadcast %221 : vector<16x1xf32> to vector<16x32xf32>
    %230 = arith.subf %217, %229 : vector<16x32xf32>
    %cst_123 = arith.constant 9.99999974E-6 : f32
    %231 = vector.broadcast %cst_123 : f32 to vector<16x1xf32>
    %232 = arith.addf %228, %231 : vector<16x1xf32>
    %233 = math.rsqrt %232 : vector<16x1xf32>
    %234 = vector.broadcast %233 : vector<16x1xf32> to vector<16x32xf32>
    %235 = arith.mulf %230, %234 : vector<16x32xf32>
    %c0_124 = arith.constant 0 : index
    %c0_125 = arith.constant 0 : index
    %236 = vector.load %arg6[%c0_124, %c0_125] : memref<1x32xf32, #tpu.memory_space<vmem>>, vector<1x32xf32>
    %237 = vector.broadcast %236 : vector<1x32xf32> to vector<16x32xf32>
    %238 = arith.mulf %237, %235 : vector<16x32xf32>
    %c0_126 = arith.constant 0 : index
    %c0_127 = arith.constant 0 : index
    %239 = vector.load %arg7[%c0_126, %c0_127] : memref<1x32xf32, #tpu.memory_space<vmem>>, vector<1x32xf32>
    %240 = vector.broadcast %239 : vector<1x32xf32> to vector<16x32xf32>
    %241 = arith.addf %238, %240 : vector<16x32xf32>
    %242 = arith.truncf %241 : vector<16x32xf32> to vector<16x32xbf16>
    %c0_128 = arith.constant 0 : index
    %c0_129 = arith.constant 0 : index
    %243 = vector.load %arg8[%c0_128, %c0_129] : memref<32x64xbf16, #tpu.memory_space<vmem>>, vector<32x64xbf16>
    %cst_130 = arith.constant dense<0.000000e+00> : vector<16x64xf32>
    %244 = tpu.matmul %242, %243, %cst_130 {dimension_numbers = #tpu.dot_dimension_numbers<[1], [0], [0], [1], [0, 0, 1, 1], [], []>} : vector<16x32xbf16>, vector<32x64xbf16>, vector<16x64xf32> -> vector<16x64xf32>
    %c0_131 = arith.constant 0 : index
    %c0_132 = arith.constant 0 : index
    %245 = vector.load %arg9[%c0_131, %c0_132] : memref<1x64xf32, #tpu.memory_space<vmem>>, vector<1x64xf32>
    %246 = vector.broadcast %245 : vector<1x64xf32> to vector<16x64xf32>
    %247 = arith.addf %244, %246 : vector<16x64xf32>
    %cst_133 = arith.constant 0.000000e+00 : f32
    %248 = vector.broadcast %cst_133 : f32 to vector<16x64xf32>
    %249 = arith.maximumf %247, %248 : vector<16x64xf32>
    %250 = arith.truncf %249 : vector<16x64xf32> to vector<16x64xbf16>
    %c0_134 = arith.constant 0 : index
    %c0_135 = arith.constant 0 : index
    %251 = vector.load %arg10[%c0_134, %c0_135] : memref<64x32xbf16, #tpu.memory_space<vmem>>, vector<64x32xbf16>
    %cst_136 = arith.constant dense<0.000000e+00> : vector<16x32xf32>
    %252 = tpu.matmul %250, %251, %cst_136 {dimension_numbers = #tpu.dot_dimension_numbers<[1], [0], [0], [1], [0, 0, 1, 1], [], []>} : vector<16x64xbf16>, vector<64x32xbf16>, vector<16x32xf32> -> vector<16x32xf32>
    %c0_137 = arith.constant 0 : index
    %c0_138 = arith.constant 0 : index
    %253 = vector.load %arg11[%c0_137, %c0_138] : memref<1x32xf32, #tpu.memory_space<vmem>>, vector<1x32xf32>
    %254 = vector.broadcast %253 : vector<1x32xf32> to vector<16x32xf32>
    %255 = arith.addf %252, %254 : vector<16x32xf32>
    %256 = arith.addf %255, %241 : vector<16x32xf32>
    %cst_139 = arith.constant dense<0.000000e+00> : vector<16xf32>
    %257 = vector.multi_reduction <add>, %256, %cst_139 [1] : vector<16x32xf32> to vector<16xf32>
    %258 = vector.shape_cast %257 : vector<16xf32> to vector<16x1xf32>
    %cst_140 = arith.constant 3.200000e+01 : f32
    %259 = vector.broadcast %cst_140 : f32 to vector<16x1xf32>
    %260 = arith.divf %258, %259 : vector<16x1xf32>
    %261 = vector.broadcast %260 : vector<16x1xf32> to vector<16x32xf32>
    %262 = arith.subf %256, %261 : vector<16x32xf32>
    %263 = arith.mulf %262, %262 : vector<16x32xf32>
    %cst_141 = arith.constant dense<0.000000e+00> : vector<16xf32>
    %264 = vector.multi_reduction <add>, %263, %cst_141 [1] : vector<16x32xf32> to vector<16xf32>
    %265 = vector.shape_cast %264 : vector<16xf32> to vector<16x1xf32>
    %cst_142 = arith.constant 3.200000e+01 : f32
    %266 = vector.broadcast %cst_142 : f32 to vector<16x1xf32>
    %267 = arith.divf %265, %266 : vector<16x1xf32>
    %268 = vector.broadcast %260 : vector<16x1xf32> to vector<16x32xf32>
    %269 = arith.subf %256, %268 : vector<16x32xf32>
    %cst_143 = arith.constant 9.99999974E-6 : f32
    %270 = vector.broadcast %cst_143 : f32 to vector<16x1xf32>
    %271 = arith.addf %267, %270 : vector<16x1xf32>
    %272 = math.rsqrt %271 : vector<16x1xf32>
    %273 = vector.broadcast %272 : vector<16x1xf32> to vector<16x32xf32>
    %274 = arith.mulf %269, %273 : vector<16x32xf32>
    %c0_144 = arith.constant 0 : index
    %c0_145 = arith.constant 0 : index
    %275 = vector.load %arg12[%c0_144, %c0_145] : memref<1x32xf32, #tpu.memory_space<vmem>>, vector<1x32xf32>
    %276 = vector.broadcast %275 : vector<1x32xf32> to vector<16x32xf32>
    %277 = arith.mulf %276, %274 : vector<16x32xf32>
    %c0_146 = arith.constant 0 : index
    %c0_147 = arith.constant 0 : index
    %278 = vector.load %arg13[%c0_146, %c0_147] : memref<1x32xf32, #tpu.memory_space<vmem>>, vector<1x32xf32>
    %279 = vector.broadcast %278 : vector<1x32xf32> to vector<16x32xf32>
    %280 = arith.addf %277, %279 : vector<16x32xf32>
    %281 = vector.shape_cast %280 : vector<16x32xf32> to vector<2x8x32xf32>
    %c0_148 = arith.constant 0 : index
    %c0_149 = arith.constant 0 : index
    %c0_150 = arith.constant 0 : index
    %282 = vector.load %arg14[%c0_148, %c0_149, %c0_150] : memref<2x8x32xf32, #tpu.memory_space<vmem>>, vector<2x8x32xf32>
    tpu.vector_store %arg14[%c0_148, %c0_149, %c0_150], %281 {strides = array<i32>} : memref<2x8x32xf32, #tpu.memory_space<vmem>>, vector<2x8x32xf32>,
    return
  }
  func.func @transform_0(%arg0: i32) -> (i32, i32, i32) {
    %c0_i32 = arith.constant 0 : i32
    %c0_i32_0 = arith.constant 0 : i32
    %c0_i32_1 = arith.constant 0 : i32
    return %arg0, %c0_i32, %c0_i32_0 : i32, i32, i32
  }
  func.func @transform_1(%arg0: i32) -> (i32, i32) {
    %c0_i32 = arith.constant 0 : i32
    %c0_i32_0 = arith.constant 0 : i32
    %c0_i32_1 = arith.constant 0 : i32
    return %c0_i32, %c0_i32_0 : i32, i32
  }
  func.func @transform_2(%arg0: i32) -> (i32, i32) {
    %c0_i32 = arith.constant 0 : i32
    %c0_i32_0 = arith.constant 0 : i32
    %c0_i32_1 = arith.constant 0 : i32
    return %c0_i32, %c0_i32_0 : i32, i32
  }
  func.func @transform_3(%arg0: i32) -> (i32, i32) {
    %c0_i32 = arith.constant 0 : i32
    %c0_i32_0 = arith.constant 0 : i32
    %c0_i32_1 = arith.constant 0 : i32
    return %c0_i32, %c0_i32_0 : i32, i32
  }
  func.func @transform_4(%arg0: i32) -> (i32, i32) {
    %c0_i32 = arith.constant 0 : i32
    %c0_i32_0 = arith.constant 0 : i32
    %c0_i32_1 = arith.constant 0 : i32
    return %c0_i32, %c0_i32_0 : i32, i32
  }
  func.func @transform_5(%arg0: i32) -> (i32, i32) {
    %c0_i32 = arith.constant 0 : i32
    %c0_i32_0 = arith.constant 0 : i32
    %c0_i32_1 = arith.constant 0 : i32
    return %c0_i32, %c0_i32_0 : i32, i32
  }
  func.func @transform_6(%arg0: i32) -> (i32, i32) {
    %c0_i32 = arith.constant 0 : i32
    %c0_i32_0 = arith.constant 0 : i32
    %c0_i32_1 = arith.constant 0 : i32
    return %c0_i32, %c0_i32_0 : i32, i32
  }
  func.func @transform_7(%arg0: i32) -> (i32, i32) {
    %c0_i32 = arith.constant 0 : i32
    %c0_i32_0 = arith.constant 0 : i32
    %c0_i32_1 = arith.constant 0 : i32
    return %c0_i32, %c0_i32_0 : i32, i32
  }
  func.func @transform_8(%arg0: i32) -> (i32, i32) {
    %c0_i32 = arith.constant 0 : i32
    %c0_i32_0 = arith.constant 0 : i32
    %c0_i32_1 = arith.constant 0 : i32
    return %c0_i32, %c0_i32_0 : i32, i32
  }
  func.func @transform_9(%arg0: i32) -> (i32, i32) {
    %c0_i32 = arith.constant 0 : i32
    %c0_i32_0 = arith.constant 0 : i32
    %c0_i32_1 = arith.constant 0 : i32
    return %c0_i32, %c0_i32_0 : i32, i32
  }
  func.func @transform_10(%arg0: i32) -> (i32, i32) {
    %c0_i32 = arith.constant 0 : i32
    %c0_i32_0 = arith.constant 0 : i32
    %c0_i32_1 = arith.constant 0 : i32
    return %c0_i32, %c0_i32_0 : i32, i32
  }
  func.func @transform_11(%arg0: i32) -> (i32, i32) {
    %c0_i32 = arith.constant 0 : i32
    %c0_i32_0 = arith.constant 0 : i32
    %c0_i32_1 = arith.constant 0 : i32
    return %c0_i32, %c0_i32_0 : i32, i32
  }
  func.func @transform_12(%arg0: i32) -> (i32, i32) {
    %c0_i32 = arith.constant 0 : i32
    %c0_i32_0 = arith.constant 0 : i32
    %c0_i32_1 = arith.constant 0 : i32
    return %c0_i32, %c0_i32_0 : i32, i32
  }
  func.func @transform_13(%arg0: i32) -> (i32, i32, i32) {
    %c0_i32 = arith.constant 0 : i32
    %c0_i32_0 = arith.constant 0 : i32
    %c0_i32_1 = arith.constant 0 : i32
    return %arg0, %c0_i32, %c0_i32_0 : i32, i32, i32
  }
}

</mosaic_0001>

<llo_original>
// kernel: tpu_custom_call.1
$region0: #{tpu_custom_call.1}
  #allocation0 [shape = 'u32[]', space=smem, size = 0x4, offset = 0x4, fixed_abs, tag = 'smem constant byte address 0x4 - core index']
  #allocation1 [shape = 'u32[144,128]{1,0:T(1,128)}', space=vmem, size = 0x12000, scoped, tag = 'internal scratch']
  #allocation2 [shape = 'f32[16,96]{1,0:T(8,128)}', space=vmem, size = 0x2000, scoped, tag = 'scratch operand']
  #allocation3 [shape = 'f32[16,32]{1,0:T(8,128)}', space=vmem, size = 0x2000, scoped, tag = 'scratch operand']
  %s0 = inlined_call_operand.vmem [shape: f32[2,8,32], index: 0, kind: input, shape index: {}]
  %s1 = inlined_call_operand.vmem [shape: bf16[32,96], index: 1, kind: input, shape index: {}]
  %s2 = inlined_call_operand.vmem [shape: f32[1,96], index: 2, kind: input, shape index: {}]
  %s3 = inlined_call_operand.vmem [shape: bf16[32,32], index: 3, kind: input, shape index: {}]
  %s4 = inlined_call_operand.vmem [shape: f32[1,32], index: 4, kind: input, shape index: {}]
  %s5 = inlined_call_operand.vmem [shape: f32[1,32], index: 5, kind: input, shape index: {}]
  %s6 = inlined_call_operand.vmem [shape: f32[1,32], index: 6, kind: input, shape index: {}]
  %s7 = inlined_call_operand.hbm [shape: bf16[32,64], index: 7, kind: input, shape index: {}]
  %s8 = inlined_call_operand.vmem [shape: f32[1,64], index: 8, kind: input, shape index: {}]
  %s9 = inlined_call_operand.vmem [shape: bf16[64,32], index: 9, kind: input, shape index: {}]
  %s10 = inlined_call_operand.vmem [shape: f32[1,32], index: 10, kind: input, shape index: {}]
  %s11 = inlined_call_operand.vmem [shape: f32[1,32], index: 11, kind: input, shape index: {}]
  %s12 = inlined_call_operand.vmem [shape: f32[1,32], index: 12, kind: input, shape index: {}]
  %s13 = inlined_call_operand.hbm [shape: f32[2,8,32], index: 13, kind: output, shape index: {}]
  %s14 = sld [smem:[#allocation0]]
  $region66: #{tpu_custom_call.1} parent=0
    _
  %s16 = ssub.s32 1, %s14
  %s17 = scalar_select 0, %s16, %s14
  $region1: #{tpu_custom_call.1} parent=0
    #allocation4 [shape = 'u8[8192]{0}', space=vmem, size = 0x2000, scoped, tag = 'input window, operand 7, single buffered']
    #allocation5 [shape = 's32[1]{0}', space=sflag, size = 0x4, scoped, tag = 'scoped memory for tpu_custom_call.1']
    #allocation6 [shape = 's32[1]{0}', space=sflag, size = 0x4, scoped, tag = 'scoped memory for tpu_custom_call.1']
    #allocation7 [shape = 'u8[8192]{0}', space=vmem, size = 0x2000, scoped, tag = 'output window, operand 0, single buffered']
    %18 = vsyncpa [#allocation5], 0
    %19 = vsyncpa [#allocation6], 0
    // Predicated region
    $region2: #{tpu_custom_call.1} parent=1 // pred_check
      _
    $region3: #{tpu_custom_call.1} parent=1 // pred_check_branch
      %21 = sbr.rel (0) target = $region5
    $region4: #{tpu_custom_call.1} parent=1 // pred_region
      _
    $region5: #{tpu_custom_call.1} parent=1 // pred_fallthru
      _
    // Predicated region
    $region6: #{tpu_custom_call.1} parent=1 // pred_check
      _
    $region7: #{tpu_custom_call.1} parent=1 // pred_check_branch
      %23 = sbr.rel (0) target = $region9
    $region8: #{tpu_custom_call.1} parent=1 // pred_region
      _
    $region9: #{tpu_custom_call.1} parent=1 // pred_fallthru
      _
    // Predicated region
    $region10: #{tpu_custom_call.1} parent=1 // pred_check
      _
    $region11: #{tpu_custom_call.1} parent=1 // pred_check_branch
      %25 = sbr.rel (0) target = $region13
    $region12: #{tpu_custom_call.1} parent=1 // pred_region
      _
    $region13: #{tpu_custom_call.1} parent=1 // pred_fallthru
      _
    // Predicated region
    $region14: #{tpu_custom_call.1} parent=1 // pred_check
      _
    $region15: #{tpu_custom_call.1} parent=1 // pred_check_branch
      %27 = sbr.rel (0) target = $region17
    $region16: #{tpu_custom_call.1} parent=1 // pred_region
      _
    $region17: #{tpu_custom_call.1} parent=1 // pred_fallthru
      _
    // Predicated region
    $region18: #{tpu_custom_call.1} parent=1 // pred_check
      _
    $region19: #{tpu_custom_call.1} parent=1 // pred_check_branch
      %29 = sbr.rel (0) target = $region21
    $region20: #{tpu_custom_call.1} parent=1 // pred_region
      _
    $region21: #{tpu_custom_call.1} parent=1 // pred_fallthru
      _
    // Predicated region
    $region22: #{tpu_custom_call.1} parent=1 // pred_check
      _
    $region23: #{tpu_custom_call.1} parent=1 // pred_check_branch
      %31 = sbr.rel (0) target = $region25
    $region24: #{tpu_custom_call.1} parent=1 // pred_region
      _
    $region25: #{tpu_custom_call.1} parent=1 // pred_fallthru
      _
    // Predicated region
    $region26: #{tpu_custom_call.1} parent=1 // pred_check
      _
    $region27: #{tpu_custom_call.1} parent=1 // pred_check_branch
      %33 = sbr.rel (0) target = $region29
    $region28: #{tpu_custom_call.1} parent=1 // pred_region
      _
    $region29: #{tpu_custom_call.1} parent=1 // pred_fallthru
      _
    // Predicated region
    $region30: #{tpu_custom_call.1} parent=1 // pred_check
      _
    $region31: #{tpu_custom_call.1} parent=1 // pred_check_branch
      %35 = sbr.rel (0) target = $region33
    $region32: #{tpu_custom_call.1} parent=1 // pred_region
      %s37 = ssub.s32 256, 256
      %38 = vsyncadd [#allocation5], %s37
      %s39 = sshll.u32 [#allocation4], 4
      %s40 = int_to_ptr.vmem [resolvable:$true] %s39
      %45 = dma.hbm_to_vmem [thread:$0]  %s7, 256, %s40, [#allocation5], 64, 64, 4
    $region33: #{tpu_custom_call.1} parent=1 // pred_fallthru
      _
    // Predicated region
    $region34: #{tpu_custom_call.1} parent=1 // pred_check
      _
    $region35: #{tpu_custom_call.1} parent=1 // pred_check_branch
      %47 = sbr.rel (0) target = $region37
    $region36: #{tpu_custom_call.1} parent=1 // pred_region
      _
    $region37: #{tpu_custom_call.1} parent=1 // pred_fallthru
      _
    // Predicated region
    $region38: #{tpu_custom_call.1} parent=1 // pred_check
      _
    $region39: #{tpu_custom_call.1} parent=1 // pred_check_branch
      %49 = sbr.rel (0) target = $region41
    $region40: #{tpu_custom_call.1} parent=1 // pred_region
      _
    $region41: #{tpu_custom_call.1} parent=1 // pred_fallthru
      _
    // Predicated region
    $region42: #{tpu_custom_call.1} parent=1 // pred_check
      _
    $region43: #{tpu_custom_call.1} parent=1 // pred_check_branch
      %51 = sbr.rel (0) target = $region45
    $region44: #{tpu_custom_call.1} parent=1 // pred_region
      _
    $region45: #{tpu_custom_call.1} parent=1 // pred_fallthru
      _
    // Predicated region
    $region46: #{tpu_custom_call.1} parent=1 // pred_check
      _
    $region47: #{tpu_custom_call.1} parent=1 // pred_check_branch
      %53 = sbr.rel (0) target = $region49
    $region48: #{tpu_custom_call.1} parent=1 // pred_region
      _
    $region49: #{tpu_custom_call.1} parent=1 // pred_fallthru
      _
    // Predicated region
    $region50: #{tpu_custom_call.1} parent=1 // pred_check
      _
    $region51: #{tpu_custom_call.1} parent=1 // pred_check_branch
      %55 = sbr.rel (0) target = $region53
    $region52: #{tpu_custom_call.1} parent=1 // pred_region
      _
    $region53: #{tpu_custom_call.1} parent=1 // pred_fallthru
      _
    // Predicated region
    $region54: #{tpu_custom_call.1} parent=1 // pred_check
      _
    $region55: #{tpu_custom_call.1} parent=1 // pred_check_branch
      %57 = sbr.rel (0) target = $region57
    $region56: #{tpu_custom_call.1} parent=1 // pred_region
      %58 = dma.done [#allocation5], 256
    $region57: #{tpu_custom_call.1} parent=1 // pred_fallthru
      _
    %v60 = vld [vmem:[%s0] sm:$0xff]
    %v61 = vld [vmem:[%s0 + $0x8] sm:$0xff]
    %v62 = vpack.c.bf16 %v61, %v60
    %v63 = vld [vmem:[%s1] sm:$0xf]
    %v64 = vld [vmem:[%s1 + $0x4] sm:$0xf]
    %v65 = vld [vmem:[%s1 + $0x8] sm:$0xf]
    %v66 = vld [vmem:[%s1 + $0xc] sm:$0xf]
    %v67 = vld [vmem:[%s2] sm:$0x1]
    %v69 = vlaneseq
    %v70 = vshrl.u32 %v69, 7
    %v71 = vsub.s32 0, %v70
    %v72 = vrot.slane %v67, %v71
    %v78 = vunpack.c.l.b16 %v63
    %v79 = vunpack.c.l.b16 %v64
    %v80 = vunpack.c.l.b16 %v65
    %v81 = vunpack.c.l.b16 %v66
    %v82 = vpack.c.b16 %v79, %v78
    %v83 = vpack.c.b16 %v81, %v80
    %vm86 = vcmask 261120
    %v88 = vsel %vm86, %v62, 0
    %90 = vmatprep.subr.bf16.mxu0 0
    %91 = vmatpush1.bf16.msra.mxu0 %v82
    %92 = vmatprep.subr.bf16.mxu0 0
    %93 = vmatpush1.bf16.msra.mxu0 %v83
    %94 = vmatprep.subr.bf16.mxu0 0
    %95 = vmatpush1.bf16.msra.mxu0 0
    %96 = vmatprep.subr.bf16.mxu0 0
    %97 = vmatpush1.bf16.msra.mxu0 0
    %98 = vmatprep.subr.bf16.mxu0 0
    %99 = vmatpush1.bf16.msra.mxu0 0
    %100 = vmatprep.subr.bf16.mxu0 0
    %101 = vmatpush1.bf16.msra.mxu0 0
    %102 = vmatprep.subr.bf16.mxu0 0
    %103 = vmatpush1.bf16.msra.mxu0 0
    %104 = vmatprep.subr.bf16.mxu0 0
    %105 = vmatpush1.bf16.msra.mxu0 0
    %106 = vmatprep.subr.bf16.mxu0 0
    %107 = vmatpush1.bf16.msra.mxu0 0
    %108 = vmatprep.subr.bf16.mxu0 0
    %109 = vmatpush1.bf16.msra.mxu0 0
    %110 = vmatprep.subr.bf16.mxu0 0
    %111 = vmatpush1.bf16.msra.mxu0 0
    %112 = vmatprep.subr.bf16.mxu0 0
    %113 = vmatpush1.bf16.msra.mxu0 0
    %114 = vmatprep.subr.bf16.mxu0 0
    %115 = vmatpush1.bf16.msra.mxu0 0
    %116 = vmatprep.subr.bf16.mxu0 0
    %117 = vmatpush1.bf16.msra.mxu0 0
    %118 = vmatprep.subr.bf16.mxu0 0
    %119 = vmatpush1.bf16.msra.mxu0 0
    %120 = vmatprep.subr.bf16.mxu0 0
    %121 = vmatpush1.bf16.msra.mxu0 0
    %122 = vmatprep.mubr.bf16.mxu0 0
    %123 = vmatmul.mubr.bf16.gmra.mrb[0].mxu0 %v88
    %v124 = vpop.f32.mrb[0].mxu0
    %v125 = vadd.f32 %v72, %v124
    %v126 = vpop.f32.mrb[0].mxu0
    %v127 = vpop.f32.mrb[0].mxu0
    %v128 = vadd.f32 %v72, %v127
    %v129 = vpop.f32.mrb[0].mxu0
    %130 = vdwg.mxu0
    %vm131 = vcmask 785408
    %132 = vst.msk [vmem:[#allocation2] sm:$0xff] %vm131, %v125
    %133 = vst.msk [vmem:[#allocation2 + $0x8] sm:$0xff] %vm131, %v128
    %v134 = vld [vmem:[#allocation2] sm:$0xff]
    %v135 = vmul.f32 %v134, 0.35355338
    %v136 = vpack.c.bf16 %v135, %v135
    %v137 = vpack.c.bf16 %v134, %v134
    %139 = vrot.lane.b32.xlu0 %v137, 96
    %v140 = vpop.permute.xlu0 %139
    %vm141 = vcmask 64512
    %v143 = vsel %vm141, %v136, 0
    %v146 = vsel %vm141, %v140, 0
    %148 = vmatprep.subr.bf16.mxu0 0
    %149 = vmatpush1.bf16.xpose.msra.mxu0 %v146
    %150 = vmatprep.subr.bf16.mxu0 0
    %151 = vmatpush1.bf16.xpose.msra.mxu0 0
    %152 = vmatprep.subr.bf16.mxu0 0
    %153 = vmatpush1.bf16.xpose.msra.mxu0 0
    %154 = vmatprep.subr.bf16.mxu0 0
    %155 = vmatpush1.bf16.xpose.msra.mxu0 0
    %156 = vmatprep.subr.bf16.mxu0 0
    %157 = vmatpush1.bf16.xpose.msra.mxu0 0
    %158 = vmatprep.subr.bf16.mxu0 0
    %159 = vmatpush1.bf16.xpose.msra.mxu0 0
    %160 = vmatprep.subr.bf16.mxu0 0
    %161 = vmatpush1.bf16.xpose.msra.mxu0 0
    %162 = vmatprep.subr.bf16.mxu0 0
    %163 = vmatpush1.bf16.xpose.msra.mxu0 0
    %164 = vmatprep.subr.bf16.mxu0 0
    %165 = vmatpush1.bf16.xpose.msra.mxu0 0
    %166 = vmatprep.subr.bf16.mxu0 0
    %167 = vmatpush1.bf16.xpose.msra.mxu0 0
    %168 = vmatprep.subr.bf16.mxu0 0
    %169 = vmatpush1.bf16.xpose.msra.mxu0 0
    %170 = vmatprep.subr.bf16.mxu0 0
    %171 = vmatpush1.bf16.xpose.msra.mxu0 0
    %172 = vmatprep.subr.bf16.mxu0 0
    %173 = vmatpush1.bf16.xpose.msra.mxu0 0
    %174 = vmatprep.subr.bf16.mxu0 0
    %175 = vmatpush1.bf16.xpose.msra.mxu0 0
    %176 = vmatprep.subr.bf16.mxu0 0
    %177 = vmatpush1.bf16.xpose.msra.mxu0 0
    %178 = vmatprep.subr.bf16.mxu0 0
    %179 = vmatpush1.bf16.xpose.msra.mxu0 0
    %180 = vmatprep.mubr.bf16.mxu0 0
    %181 = vmatmul.mubr.bf16.gmra.mrb[0].mxu0 %v143
    %v182 = vpop.f32.mrb[0].mxu0
    %v183 = vadd.f32 0.0, %v182
    %v184 = vpop.f32.mrb[0].mxu0
    %v185 = vpop.f32.mrb[0].mxu0
    %v186 = vpop.f32.mrb[0].mxu0
    %187 = vdwg.mxu0
    %v188 = vsel %vm141, %v183, -inf
    %189 = vmax.xlane.f32.xlu0 %v188
    %v190 = vpop.xlane.xlu0 %189
    %v191 = vsub.f32 %v183, %v190
    %v192 = vmul.f32 %v191, 1.442695
    %v193 = vpow.pop %v192
    %v194 = vsel %vm141, %v193, 0.0
    %195 = vadd.xlane.f32.xlu0 %v194
    %v196 = vpop.xlane.xlu0 %195
    %v197 = vrcp.pop %v196
    %v198 = vmul.f32 %v193, %v197
    %v199 = vpack.c.bf16 %v198, %v198
    %200 = vrot.lane.b32.xlu0 %v137, 64
    %v201 = vpop.permute.xlu0 %200
    %v203 = vsel %vm141, %v199, 0
    %vm205 = vcmask 1043456
    %v207 = vsel %vm205, %v201, 0
    %209 = vmatprep.subr.bf16.mxu0 0
    %210 = vmatpush1.bf16.msra.mxu0 %v207
    %211 = vmatprep.subr.bf16.mxu0 0
    %212 = vmatpush1.bf16.msra.mxu0 0
    %213 = vmatprep.subr.bf16.mxu0 0
    %214 = vmatpush1.bf16.msra.mxu0 0
    %215 = vmatprep.subr.bf16.mxu0 0
    %216 = vmatpush1.bf16.msra.mxu0 0
    %217 = vmatprep.subr.bf16.mxu0 0
    %218 = vmatpush1.bf16.msra.mxu0 0
    %219 = vmatprep.subr.bf16.mxu0 0
    %220 = vmatpush1.bf16.msra.mxu0 0
    %221 = vmatprep.subr.bf16.mxu0 0
    %222 = vmatpush1.bf16.msra.mxu0 0
    %223 = vmatprep.subr.bf16.mxu0 0
    %224 = vmatpush1.bf16.msra.mxu0 0
    %225 = vmatprep.subr.bf16.mxu0 0
    %226 = vmatpush1.bf16.msra.mxu0 0
    %227 = vmatprep.subr.bf16.mxu0 0
    %228 = vmatpush1.bf16.msra.mxu0 0
    %229 = vmatprep.subr.bf16.mxu0 0
    %230 = vmatpush1.bf16.msra.mxu0 0
    %231 = vmatprep.subr.bf16.mxu0 0
    %232 = vmatpush1.bf16.msra.mxu0 0
    %233 = vmatprep.subr.bf16.mxu0 0
    %234 = vmatpush1.bf16.msra.mxu0 0
    %235 = vmatprep.subr.bf16.mxu0 0
    %236 = vmatpush1.bf16.msra.mxu0 0
    %237 = vmatprep.subr.bf16.mxu0 0
    %238 = vmatpush1.bf16.msra.mxu0 0
    %239 = vmatprep.subr.bf16.mxu0 0
    %240 = vmatpush1.bf16.msra.mxu0 0
    %241 = vmatprep.mubr.bf16.mxu0 0
    %242 = vmatmul.mubr.bf16.gmra.mrb[0].mxu0 %v203
    %v243 = vpop.f32.mrb[0].mxu0
    %v244 = vadd.f32 0.0, %v243
    %v245 = vpop.f32.mrb[0].mxu0
    %v246 = vpop.f32.mrb[0].mxu0
    %v247 = vpop.f32.mrb[0].mxu0
    %248 = vdwg.mxu0
    %v249 = vpack.c.bf16 %v244, %v244
    %v250 = vld [vmem:[%s3] sm:$0xf]
    %252 = vrot.lane.b32.xlu0 %v136, 120
    %v253 = vpop.permute.xlu0 %252
    %254 = vrot.lane.b32.xlu0 %v137, 88
    %v255 = vpop.permute.xlu0 %254
    %v257 = vsel %vm141, %v253, 0
    %v260 = vsel %vm141, %v255, 0
    %262 = vmatprep.subr.bf16.mxu0 0
    %263 = vmatpush1.bf16.xpose.msra.mxu0 %v260
    %264 = vmatprep.subr.bf16.mxu0 0
    %265 = vmatpush1.bf16.xpose.msra.mxu0 0
    %266 = vmatprep.subr.bf16.mxu0 0
    %267 = vmatpush1.bf16.xpose.msra.mxu0 0
    %268 = vmatprep.subr.bf16.mxu0 0
    %269 = vmatpush1.bf16.xpose.msra.mxu0 0
    %270 = vmatprep.subr.bf16.mxu0 0
    %271 = vmatpush1.bf16.xpose.msra.mxu0 0
    %272 = vmatprep.subr.bf16.mxu0 0
    %273 = vmatpush1.bf16.xpose.msra.mxu0 0
    %274 = vmatprep.subr.bf16.mxu0 0
    %275 = vmatpush1.bf16.xpose.msra.mxu0 0
    %276 = vmatprep.subr.bf16.mxu0 0
    %277 = vmatpush1.bf16.xpose.msra.mxu0 0
    %278 = vmatprep.subr.bf16.mxu0 0
    %279 = vmatpush1.bf16.xpose.msra.mxu0 0
    %280 = vmatprep.subr.bf16.mxu0 0
    %281 = vmatpush1.bf16.xpose.msra.mxu0 0
    %282 = vmatprep.subr.bf16.mxu0 0
    %283 = vmatpush1.bf16.xpose.msra.mxu0 0
    %284 = vmatprep.subr.bf16.mxu0 0
    %285 = vmatpush1.bf16.xpose.msra.mxu0 0
    %286 = vmatprep.subr.bf16.mxu0 0
    %287 = vmatpush1.bf16.xpose.msra.mxu0 0
    %288 = vmatprep.subr.bf16.mxu0 0
    %289 = vmatpush1.bf16.xpose.msra.mxu0 0
    %290 = vmatprep.subr.bf16.mxu0 0
    %291 = vmatpush1.bf16.xpose.msra.mxu0 0
    %292 = vmatprep.subr.bf16.mxu0 0
    %293 = vmatpush1.bf16.xpose.msra.mxu0 0
    %294 = vmatprep.mubr.bf16.mxu0 0
    %295 = vmatmul.mubr.bf16.gmra.mrb[0].mxu0 %v257
    %v296 = vpop.f32.mrb[0].mxu0
    %v297 = vadd.f32 0.0, %v296
    %v298 = vpop.f32.mrb[0].mxu0
    %v299 = vpop.f32.mrb[0].mxu0
    %v300 = vpop.f32.mrb[0].mxu0
    %301 = vdwg.mxu0
    %v302 = vsel %vm141, %v297, -inf
    %303 = vmax.xlane.f32.xlu0 %v302
    %v304 = vpop.xlane.xlu0 %303
    %v305 = vsub.f32 %v297, %v304
    %v306 = vmul.f32 %v305, 1.442695
    %v307 = vpow.pop %v306
    %v308 = vsel %vm141, %v307, 0.0
    %309 = vadd.xlane.f32.xlu0 %v308
    %v310 = vpop.xlane.xlu0 %309
    %v311 = vrcp.pop %v310
    %v312 = vmul.f32 %v307, %v311
    %v313 = vpack.c.bf16 %v312, %v312
    %314 = vrot.lane.b32.xlu0 %v137, 56
    %v315 = vpop.permute.xlu0 %314
    %v317 = vsel %vm141, %v313, 0
    %v320 = vsel %vm205, %v315, 0
    %322 = vmatprep.subr.bf16.mxu0 0
    %323 = vmatpush1.bf16.msra.mxu0 %v320
    %324 = vmatprep.subr.bf16.mxu0 0
    %325 = vmatpush1.bf16.msra.mxu0 0
    %326 = vmatprep.subr.bf16.mxu0 0
    %327 = vmatpush1.bf16.msra.mxu0 0
    %328 = vmatprep.subr.bf16.mxu0 0
    %329 = vmatpush1.bf16.msra.mxu0 0
    %330 = vmatprep.subr.bf16.mxu0 0
    %331 = vmatpush1.bf16.msra.mxu0 0
    %332 = vmatprep.subr.bf16.mxu0 0
    %333 = vmatpush1.bf16.msra.mxu0 0
    %334 = vmatprep.subr.bf16.mxu0 0
    %335 = vmatpush1.bf16.msra.mxu0 0
    %336 = vmatprep.subr.bf16.mxu0 0
    %337 = vmatpush1.bf16.msra.mxu0 0
    %338 = vmatprep.subr.bf16.mxu0 0
    %339 = vmatpush1.bf16.msra.mxu0 0
    %340 = vmatprep.subr.bf16.mxu0 0
    %341 = vmatpush1.bf16.msra.mxu0 0
    %342 = vmatprep.subr.bf16.mxu0 0
    %343 = vmatpush1.bf16.msra.mxu0 0
    %344 = vmatprep.subr.bf16.mxu0 0
    %345 = vmatpush1.bf16.msra.mxu0 0
    %346 = vmatprep.subr.bf16.mxu0 0
    %347 = vmatpush1.bf16.msra.mxu0 0
    %348 = vmatprep.subr.bf16.mxu0 0
    %349 = vmatpush1.bf16.msra.mxu0 0
    %350 = vmatprep.subr.bf16.mxu0 0
    %351 = vmatpush1.bf16.msra.mxu0 0
    %352 = vmatprep.subr.bf16.mxu0 0
    %353 = vmatpush1.bf16.msra.mxu0 0
    %354 = vmatprep.mubr.bf16.mxu0 0
    %355 = vmatmul.mubr.bf16.gmra.mrb[0].mxu0 %v317
    %v356 = vpop.f32.mrb[0].mxu0
    %v357 = vadd.f32 0.0, %v356
    %v358 = vpop.f32.mrb[0].mxu0
    %v359 = vpop.f32.mrb[0].mxu0
    %v360 = vpop.f32.mrb[0].mxu0
    %361 = vdwg.mxu0
    %v362 = vpack.c.bf16 %v357, %v357
    %v363 = vld [vmem:[%s3 + $0x4] sm:$0xf]
    %v365 = vsel %vm141, %v362, 0
    %v368 = vsel %vm205, %v363, 0
    %370 = vmatprep.subr.bf16.mxu0 0
    %371 = vmatpush1.bf16.msra.mxu0 %v368
    %372 = vmatprep.subr.bf16.mxu0 0
    %373 = vmatpush1.bf16.msra.mxu0 0
    %374 = vmatprep.subr.bf16.mxu0 0
    %375 = vmatpush1.bf16.msra.mxu0 0
    %376 = vmatprep.subr.bf16.mxu0 0
    %377 = vmatpush1.bf16.msra.mxu0 0
    %378 = vmatprep.subr.bf16.mxu0 0
    %379 = vmatpush1.bf16.msra.mxu0 0
    %380 = vmatprep.subr.bf16.mxu0 0
    %381 = vmatpush1.bf16.msra.mxu0 0
    %382 = vmatprep.subr.bf16.mxu0 0
    %383 = vmatpush1.bf16.msra.mxu0 0
    %384 = vmatprep.subr.bf16.mxu0 0
    %385 = vmatpush1.bf16.msra.mxu0 0
    %386 = vmatprep.subr.bf16.mxu0 0
    %387 = vmatpush1.bf16.msra.mxu0 0
    %388 = vmatprep.subr.bf16.mxu0 0
    %389 = vmatpush1.bf16.msra.mxu0 0
    %390 = vmatprep.subr.bf16.mxu0 0
    %391 = vmatpush1.bf16.msra.mxu0 0
    %392 = vmatprep.subr.bf16.mxu0 0
    %393 = vmatpush1.bf16.msra.mxu0 0
    %394 = vmatprep.subr.bf16.mxu0 0
    %395 = vmatpush1.bf16.msra.mxu0 0
    %396 = vmatprep.subr.bf16.mxu0 0
    %397 = vmatpush1.bf16.msra.mxu0 0
    %398 = vmatprep.subr.bf16.mxu0 0
    %399 = vmatpush1.bf16.msra.mxu0 0
    %400 = vmatprep.subr.bf16.mxu0 0
    %401 = vmatpush1.bf16.msra.mxu0 0
    %402 = vmatprep.mubr.bf16.mxu0 0
    %403 = vmatmul.mubr.bf16.gmra.mrb[0].mxu0 %v365
    %v404 = vpop.f32.mrb[0].mxu0
    %v405 = vadd.f32 0.0, %v404
    %v406 = vpop.f32.mrb[0].mxu0
    %v407 = vpop.f32.mrb[0].mxu0
    %v408 = vpop.f32.mrb[0].mxu0
    %409 = vdwg.mxu0
    %v411 = vsel %vm141, %v249, 0
    %v414 = vsel %vm205, %v250, 0
    %416 = vmatprep.subr.bf16.mxu0 0
    %417 = vmatpush1.bf16.msra.mxu0 %v414
    %418 = vmatprep.subr.bf16.mxu0 0
    %419 = vmatpush1.bf16.msra.mxu0 0
    %420 = vmatprep.subr.bf16.mxu0 0
    %421 = vmatpush1.bf16.msra.mxu0 0
    %422 = vmatprep.subr.bf16.mxu0 0
    %423 = vmatpush1.bf16.msra.mxu0 0
    %424 = vmatprep.subr.bf16.mxu0 0
    %425 = vmatpush1.bf16.msra.mxu0 0
    %426 = vmatprep.subr.bf16.mxu0 0
    %427 = vmatpush1.bf16.msra.mxu0 0
    %428 = vmatprep.subr.bf16.mxu0 0
    %429 = vmatpush1.bf16.msra.mxu0 0
    %430 = vmatprep.subr.bf16.mxu0 0
    %431 = vmatpush1.bf16.msra.mxu0 0
    %432 = vmatprep.subr.bf16.mxu0 0
    %433 = vmatpush1.bf16.msra.mxu0 0
    %434 = vmatprep.subr.bf16.mxu0 0
    %435 = vmatpush1.bf16.msra.mxu0 0
    %436 = vmatprep.subr.bf16.mxu0 0
    %437 = vmatpush1.bf16.msra.mxu0 0
    %438 = vmatprep.subr.bf16.mxu0 0
    %439 = vmatpush1.bf16.msra.mxu0 0
    %440 = vmatprep.subr.bf16.mxu0 0
    %441 = vmatpush1.bf16.msra.mxu0 0
    %442 = vmatprep.subr.bf16.mxu0 0
    %443 = vmatpush1.bf16.msra.mxu0 0
    %444 = vmatprep.subr.bf16.mxu0 0
    %445 = vmatpush1.bf16.msra.mxu0 0
    %446 = vmatprep.subr.bf16.mxu0 0
    %447 = vmatpush1.bf16.msra.mxu0 0
    %448 = vmatprep.mubr.bf16.mxu0 0
    %449 = vmatmul.mubr.bf16.gmra.mrb[0].mxu0 %v411
    %v450 = vpop.f32.mrb[0].mxu0
    %v451 = vadd.f32 %v405, %v450
    %v452 = vpop.f32.mrb[0].mxu0
    %v453 = vpop.f32.mrb[0].mxu0
    %v454 = vpop.f32.mrb[0].mxu0
    %455 = vdwg.mxu0
    %456 = vrot.lane.b32.xlu0 %v136, 112
    %v457 = vpop.permute.xlu0 %456
    %458 = vrot.lane.b32.xlu0 %v137, 80
    %v459 = vpop.permute.xlu0 %458
    %v461 = vsel %vm141, %v457, 0
    %v464 = vsel %vm141, %v459, 0
    %466 = vmatprep.subr.bf16.mxu0 0
    %467 = vmatpush1.bf16.xpose.msra.mxu0 %v464
    %468 = vmatprep.subr.bf16.mxu0 0
    %469 = vmatpush1.bf16.xpose.msra.mxu0 0
    %470 = vmatprep.subr.bf16.mxu0 0
    %471 = vmatpush1.bf16.xpose.msra.mxu0 0
    %472 = vmatprep.subr.bf16.mxu0 0
    %473 = vmatpush1.bf16.xpose.msra.mxu0 0
    %474 = vmatprep.subr.bf16.mxu0 0
    %475 = vmatpush1.bf16.xpose.msra.mxu0 0
    %476 = vmatprep.subr.bf16.mxu0 0
    %477 = vmatpush1.bf16.xpose.msra.mxu0 0
    %478 = vmatprep.subr.bf16.mxu0 0
    %479 = vmatpush1.bf16.xpose.msra.mxu0 0
    %480 = vmatprep.subr.bf16.mxu0 0
    %481 = vmatpush1.bf16.xpose.msra.mxu0 0
    %482 = vmatprep.subr.bf16.mxu0 0
    %483 = vmatpush1.bf16.xpose.msra.mxu0 0
    %484 = vmatprep.subr.bf16.mxu0 0
    %485 = vmatpush1.bf16.xpose.msra.mxu0 0
    %486 = vmatprep.subr.bf16.mxu0 0
    %487 = vmatpush1.bf16.xpose.msra.mxu0 0
    %488 = vmatprep.subr.bf16.mxu0 0
    %489 = vmatpush1.bf16.xpose.msra.mxu0 0
    %490 = vmatprep.subr.bf16.mxu0 0
    %491 = vmatpush1.bf16.xpose.msra.mxu0 0
    %492 = vmatprep.subr.bf16.mxu0 0
    %493 = vmatpush1.bf16.xpose.msra.mxu0 0
    %494 = vmatprep.subr.bf16.mxu0 0
    %495 = vmatpush1.bf16.xpose.msra.mxu0 0
    %496 = vmatprep.subr.bf16.mxu0 0
    %497 = vmatpush1.bf16.xpose.msra.mxu0 0
    %498 = vmatprep.mubr.bf16.mxu0 0
    %499 = vmatmul.mubr.bf16.gmra.mrb[0].mxu0 %v461
    %v500 = vpop.f32.mrb[0].mxu0
    %v501 = vadd.f32 0.0, %v500
    %v502 = vpop.f32.mrb[0].mxu0
    %v503 = vpop.f32.mrb[0].mxu0
    %v504 = vpop.f32.mrb[0].mxu0
    %505 = vdwg.mxu0
    %v506 = vsel %vm141, %v501, -inf
    %507 = vmax.xlane.f32.xlu0 %v506
    %v508 = vpop.xlane.xlu0 %507
    %v509 = vsub.f32 %v501, %v508
    %v510 = vmul.f32 %v509, 1.442695
    %v511 = vpow.pop %v510
    %v512 = vsel %vm141, %v511, 0.0
    %513 = vadd.xlane.f32.xlu0 %v512
    %v514 = vpop.xlane.xlu0 %513
    %v515 = vrcp.pop %v514
    %v516 = vmul.f32 %v511, %v515
    %v517 = vpack.c.bf16 %v516, %v516
    %518 = vrot.lane.b32.xlu0 %v137, 48
    %v519 = vpop.permute.xlu0 %518
    %v521 = vsel %vm141, %v517, 0
    %v524 = vsel %vm205, %v519, 0
    %526 = vmatprep.subr.bf16.mxu0 0
    %527 = vmatpush1.bf16.msra.mxu0 %v524
    %528 = vmatprep.subr.bf16.mxu0 0
    %529 = vmatpush1.bf16.msra.mxu0 0
    %530 = vmatprep.subr.bf16.mxu0 0
    %531 = vmatpush1.bf16.msra.mxu0 0
    %532 = vmatprep.subr.bf16.mxu0 0
    %533 = vmatpush1.bf16.msra.mxu0 0
    %534 = vmatprep.subr.bf16.mxu0 0
    %535 = vmatpush1.bf16.msra.mxu0 0
    %536 = vmatprep.subr.bf16.mxu0 0
    %537 = vmatpush1.bf16.msra.mxu0 0
    %538 = vmatprep.subr.bf16.mxu0 0
    %539 = vmatpush1.bf16.msra.mxu0 0
    %540 = vmatprep.subr.bf16.mxu0 0
    %541 = vmatpush1.bf16.msra.mxu0 0
    %542 = vmatprep.subr.bf16.mxu0 0
    %543 = vmatpush1.bf16.msra.mxu0 0
    %544 = vmatprep.subr.bf16.mxu0 0
    %545 = vmatpush1.bf16.msra.mxu0 0
    %546 = vmatprep.subr.bf16.mxu0 0
    %547 = vmatpush1.bf16.msra.mxu0 0
    %548 = vmatprep.subr.bf16.mxu0 0
    %549 = vmatpush1.bf16.msra.mxu0 0
    %550 = vmatprep.subr.bf16.mxu0 0
    %551 = vmatpush1.bf16.msra.mxu0 0
    %552 = vmatprep.subr.bf16.mxu0 0
    %553 = vmatpush1.bf16.msra.mxu0 0
    %554 = vmatprep.subr.bf16.mxu0 0
    %555 = vmatpush1.bf16.msra.mxu0 0
    %556 = vmatprep.subr.bf16.mxu0 0
    %557 = vmatpush1.bf16.msra.mxu0 0
    %558 = vmatprep.mubr.bf16.mxu0 0
    %559 = vmatmul.mubr.bf16.gmra.mrb[0].mxu0 %v521
    %v560 = vpop.f32.mrb[0].mxu0
    %v561 = vadd.f32 0.0, %v560
    %v562 = vpop.f32.mrb[0].mxu0
    %v563 = vpop.f32.mrb[0].mxu0
    %v564 = vpop.f32.mrb[0].mxu0
    %565 = vdwg.mxu0
    %v566 = vpack.c.bf16 %v561, %v561
    %v567 = vld [vmem:[%s3 + $0x8] sm:$0xf]
    %v569 = vsel %vm141, %v566, 0
    %v572 = vsel %vm205, %v567, 0
    %574 = vmatprep.subr.bf16.mxu0 0
    %575 = vmatpush1.bf16.msra.mxu0 %v572
    %576 = vmatprep.subr.bf16.mxu0 0
    %577 = vmatpush1.bf16.msra.mxu0 0
    %578 = vmatprep.subr.bf16.mxu0 0
    %579 = vmatpush1.bf16.msra.mxu0 0
    %580 = vmatprep.subr.bf16.mxu0 0
    %581 = vmatpush1.bf16.msra.mxu0 0
    %582 = vmatprep.subr.bf16.mxu0 0
    %583 = vmatpush1.bf16.msra.mxu0 0
    %584 = vmatprep.subr.bf16.mxu0 0
    %585 = vmatpush1.bf16.msra.mxu0 0
    %586 = vmatprep.subr.bf16.mxu0 0
    %587 = vmatpush1.bf16.msra.mxu0 0
    %588 = vmatprep.subr.bf16.mxu0 0
    %589 = vmatpush1.bf16.msra.mxu0 0
    %590 = vmatprep.subr.bf16.mxu0 0
    %591 = vmatpush1.bf16.msra.mxu0 0
    %592 = vmatprep.subr.bf16.mxu0 0
    %593 = vmatpush1.bf16.msra.mxu0 0
    %594 = vmatprep.subr.bf16.mxu0 0
    %595 = vmatpush1.bf16.msra.mxu0 0
    %596 = vmatprep.subr.bf16.mxu0 0
    %597 = vmatpush1.bf16.msra.mxu0 0
    %598 = vmatprep.subr.bf16.mxu0 0
    %599 = vmatpush1.bf16.msra.mxu0 0
    %600 = vmatprep.subr.bf16.mxu0 0
    %601 = vmatpush1.bf16.msra.mxu0 0
    %602 = vmatprep.subr.bf16.mxu0 0
    %603 = vmatpush1.bf16.msra.mxu0 0
    %604 = vmatprep.subr.bf16.mxu0 0
    %605 = vmatpush1.bf16.msra.mxu0 0
    %606 = vmatprep.mubr.bf16.mxu0 0
    %607 = vmatmul.mubr.bf16.gmra.mrb[0].mxu0 %v569
    %v608 = vpop.f32.mrb[0].mxu0
    %v609 = vadd.f32 0.0, %v608
    %v610 = vpop.f32.mrb[0].mxu0
    %v611 = vpop.f32.mrb[0].mxu0
    %v612 = vpop.f32.mrb[0].mxu0
    %613 = vdwg.mxu0
    %v614 = vadd.f32 %v451, %v609
    %615 = vrot.lane.b32.xlu0 %v136, 104
    %v616 = vpop.permute.xlu0 %615
    %617 = vrot.lane.b32.xlu0 %v137, 72
    %v618 = vpop.permute.xlu0 %617
    %v620 = vsel %vm141, %v616, 0
    %v623 = vsel %vm141, %v618, 0
    %625 = vmatprep.subr.bf16.mxu0 0
    %626 = vmatpush1.bf16.xpose.msra.mxu0 %v623
    %627 = vmatprep.subr.bf16.mxu0 0
    %628 = vmatpush1.bf16.xpose.msra.mxu0 0
    %629 = vmatprep.subr.bf16.mxu0 0
    %630 = vmatpush1.bf16.xpose.msra.mxu0 0
    %631 = vmatprep.subr.bf16.mxu0 0
    %632 = vmatpush1.bf16.xpose.msra.mxu0 0
    %633 = vmatprep.subr.bf16.mxu0 0
    %634 = vmatpush1.bf16.xpose.msra.mxu0 0
    %635 = vmatprep.subr.bf16.mxu0 0
    %636 = vmatpush1.bf16.xpose.msra.mxu0 0
    %637 = vmatprep.subr.bf16.mxu0 0
    %638 = vmatpush1.bf16.xpose.msra.mxu0 0
    %639 = vmatprep.subr.bf16.mxu0 0
    %640 = vmatpush1.bf16.xpose.msra.mxu0 0
    %641 = vmatprep.subr.bf16.mxu0 0
    %642 = vmatpush1.bf16.xpose.msra.mxu0 0
    %643 = vmatprep.subr.bf16.mxu0 0
    %644 = vmatpush1.bf16.xpose.msra.mxu0 0
    %645 = vmatprep.subr.bf16.mxu0 0
    %646 = vmatpush1.bf16.xpose.msra.mxu0 0
    %647 = vmatprep.subr.bf16.mxu0 0
    %648 = vmatpush1.bf16.xpose.msra.mxu0 0
    %649 = vmatprep.subr.bf16.mxu0 0
    %650 = vmatpush1.bf16.xpose.msra.mxu0 0
    %651 = vmatprep.subr.bf16.mxu0 0
    %652 = vmatpush1.bf16.xpose.msra.mxu0 0
    %653 = vmatprep.subr.bf16.mxu0 0
    %654 = vmatpush1.bf16.xpose.msra.mxu0 0
    %655 = vmatprep.subr.bf16.mxu0 0
    %656 = vmatpush1.bf16.xpose.msra.mxu0 0
    %657 = vmatprep.mubr.bf16.mxu0 0
    %658 = vmatmul.mubr.bf16.gmra.mrb[0].mxu0 %v620
    %v659 = vpop.f32.mrb[0].mxu0
    %v660 = vadd.f32 0.0, %v659
    %v661 = vpop.f32.mrb[0].mxu0
    %v662 = vpop.f32.mrb[0].mxu0
    %v663 = vpop.f32.mrb[0].mxu0
    %664 = vdwg.mxu0
    %v665 = vsel %vm141, %v660, -inf
    %666 = vmax.xlane.f32.xlu0 %v665
    %v667 = vpop.xlane.xlu0 %666
    %v668 = vsub.f32 %v660, %v667
    %v669 = vmul.f32 %v668, 1.442695
    %v670 = vpow.pop %v669
    %v671 = vsel %vm141, %v670, 0.0
    %672 = vadd.xlane.f32.xlu0 %v671
    %v673 = vpop.xlane.xlu0 %672
    %v674 = vrcp.pop %v673
    %v675 = vmul.f32 %v670, %v674
    %v676 = vpack.c.bf16 %v675, %v675
    %677 = vrot.lane.b32.xlu0 %v137, 40
    %v678 = vpop.permute.xlu0 %677
    %v680 = vsel %vm141, %v676, 0
    %v683 = vsel %vm205, %v678, 0
    %685 = vmatprep.subr.bf16.mxu0 0
    %686 = vmatpush1.bf16.msra.mxu0 %v683
    %687 = vmatprep.subr.bf16.mxu0 0
    %688 = vmatpush1.bf16.msra.mxu0 0
    %689 = vmatprep.subr.bf16.mxu0 0
    %690 = vmatpush1.bf16.msra.mxu0 0
    %691 = vmatprep.subr.bf16.mxu0 0
    %692 = vmatpush1.bf16.msra.mxu0 0
    %693 = vmatprep.subr.bf16.mxu0 0
    %694 = vmatpush1.bf16.msra.mxu0 0
    %695 = vmatprep.subr.bf16.mxu0 0
    %696 = vmatpush1.bf16.msra.mxu0 0
    %697 = vmatprep.subr.bf16.mxu0 0
    %698 = vmatpush1.bf16.msra.mxu0 0
    %699 = vmatprep.subr.bf16.mxu0 0
    %700 = vmatpush1.bf16.msra.mxu0 0
    %701 = vmatprep.subr.bf16.mxu0 0
    %702 = vmatpush1.bf16.msra.mxu0 0
    %703 = vmatprep.subr.bf16.mxu0 0
    %704 = vmatpush1.bf16.msra.mxu0 0
    %705 = vmatprep.subr.bf16.mxu0 0
    %706 = vmatpush1.bf16.msra.mxu0 0
    %707 = vmatprep.subr.bf16.mxu0 0
    %708 = vmatpush1.bf16.msra.mxu0 0
    %709 = vmatprep.subr.bf16.mxu0 0
    %710 = vmatpush1.bf16.msra.mxu0 0
    %711 = vmatprep.subr.bf16.mxu0 0
    %712 = vmatpush1.bf16.msra.mxu0 0
    %713 = vmatprep.subr.bf16.mxu0 0
    %714 = vmatpush1.bf16.msra.mxu0 0
    %715 = vmatprep.subr.bf16.mxu0 0
    %716 = vmatpush1.bf16.msra.mxu0 0
    %717 = vmatprep.mubr.bf16.mxu0 0
    %718 = vmatmul.mubr.bf16.gmra.mrb[0].mxu0 %v680
    %v719 = vpop.f32.mrb[0].mxu0
    %v720 = vadd.f32 0.0, %v719
    %v721 = vpop.f32.mrb[0].mxu0
    %v722 = vpop.f32.mrb[0].mxu0
    %v723 = vpop.f32.mrb[0].mxu0
    %724 = vdwg.mxu0
    %v725 = vpack.c.bf16 %v720, %v720
    %v726 = vld [vmem:[%s3 + $0xc] sm:$0xf]
    %v728 = vsel %vm141, %v725, 0
    %v731 = vsel %vm205, %v726, 0
    %733 = vmatprep.subr.bf16.mxu0 0
    %734 = vmatpush1.bf16.msra.mxu0 %v731
    %735 = vmatprep.subr.bf16.mxu0 0
    %736 = vmatpush1.bf16.msra.mxu0 0
    %737 = vmatprep.subr.bf16.mxu0 0
    %738 = vmatpush1.bf16.msra.mxu0 0
    %739 = vmatprep.subr.bf16.mxu0 0
    %740 = vmatpush1.bf16.msra.mxu0 0
    %741 = vmatprep.subr.bf16.mxu0 0
    %742 = vmatpush1.bf16.msra.mxu0 0
    %743 = vmatprep.subr.bf16.mxu0 0
    %744 = vmatpush1.bf16.msra.mxu0 0
    %745 = vmatprep.subr.bf16.mxu0 0
    %746 = vmatpush1.bf16.msra.mxu0 0
    %747 = vmatprep.subr.bf16.mxu0 0
    %748 = vmatpush1.bf16.msra.mxu0 0
    %749 = vmatprep.subr.bf16.mxu0 0
    %750 = vmatpush1.bf16.msra.mxu0 0
    %751 = vmatprep.subr.bf16.mxu0 0
    %752 = vmatpush1.bf16.msra.mxu0 0
    %753 = vmatprep.subr.bf16.mxu0 0
    %754 = vmatpush1.bf16.msra.mxu0 0
    %755 = vmatprep.subr.bf16.mxu0 0
    %756 = vmatpush1.bf16.msra.mxu0 0
    %757 = vmatprep.subr.bf16.mxu0 0
    %758 = vmatpush1.bf16.msra.mxu0 0
    %759 = vmatprep.subr.bf16.mxu0 0
    %760 = vmatpush1.bf16.msra.mxu0 0
    %761 = vmatprep.subr.bf16.mxu0 0
    %762 = vmatpush1.bf16.msra.mxu0 0
    %763 = vmatprep.subr.bf16.mxu0 0
    %764 = vmatpush1.bf16.msra.mxu0 0
    %765 = vmatprep.mubr.bf16.mxu0 0
    %766 = vmatmul.mubr.bf16.gmra.mrb[0].mxu0 %v728
    %v767 = vpop.f32.mrb[0].mxu0
    %v768 = vadd.f32 0.0, %v767
    %v769 = vpop.f32.mrb[0].mxu0
    %v770 = vpop.f32.mrb[0].mxu0
    %v771 = vpop.f32.mrb[0].mxu0
    %772 = vdwg.mxu0
    %v773 = vadd.f32 %v614, %v768
    %774 = vst.msk [vmem:[#allocation3] sm:$0xff] %vm86, %v773
    %v775 = vld [vmem:[#allocation2 + $0x8] sm:$0xff]
    %v776 = vmul.f32 %v775, 0.35355338
    %v777 = vpack.c.bf16 %v776, %v776
    %v778 = vpack.c.bf16 %v775, %v775
    %780 = vrot.lane.b32.xlu0 %v778, 96
    %v781 = vpop.permute.xlu0 %780
    %v783 = vsel %vm141, %v777, 0
    %v786 = vsel %vm141, %v781, 0
    %788 = vmatprep.subr.bf16.mxu0 0
    %789 = vmatpush1.bf16.xpose.msra.mxu0 %v786
    %790 = vmatprep.subr.bf16.mxu0 0
    %791 = vmatpush1.bf16.xpose.msra.mxu0 0
    %792 = vmatprep.subr.bf16.mxu0 0
    %793 = vmatpush1.bf16.xpose.msra.mxu0 0
    %794 = vmatprep.subr.bf16.mxu0 0
    %795 = vmatpush1.bf16.xpose.msra.mxu0 0
    %796 = vmatprep.subr.bf16.mxu0 0
    %797 = vmatpush1.bf16.xpose.msra.mxu0 0
    %798 = vmatprep.subr.bf16.mxu0 0
    %799 = vmatpush1.bf16.xpose.msra.mxu0 0
    %800 = vmatprep.subr.bf16.mxu0 0
    %801 = vmatpush1.bf16.xpose.msra.mxu0 0
    %802 = vmatprep.subr.bf16.mxu0 0
    %803 = vmatpush1.bf16.xpose.msra.mxu0 0
    %804 = vmatprep.subr.bf16.mxu0 0
    %805 = vmatpush1.bf16.xpose.msra.mxu0 0
    %806 = vmatprep.subr.bf16.mxu0 0
    %807 = vmatpush1.bf16.xpose.msra.mxu0 0
    %808 = vmatprep.subr.bf16.mxu0 0
    %809 = vmatpush1.bf16.xpose.msra.mxu0 0
    %810 = vmatprep.subr.bf16.mxu0 0
    %811 = vmatpush1.bf16.xpose.msra.mxu0 0
    %812 = vmatprep.subr.bf16.mxu0 0
    %813 = vmatpush1.bf16.xpose.msra.mxu0 0
    %814 = vmatprep.subr.bf16.mxu0 0
    %815 = vmatpush1.bf16.xpose.msra.mxu0 0
    %816 = vmatprep.subr.bf16.mxu0 0
    %817 = vmatpush1.bf16.xpose.msra.mxu0 0
    %818 = vmatprep.subr.bf16.mxu0 0
    %819 = vmatpush1.bf16.xpose.msra.mxu0 0
    %820 = vmatprep.mubr.bf16.mxu0 0
    %821 = vmatmul.mubr.bf16.gmra.mrb[0].mxu0 %v783
    %v822 = vpop.f32.mrb[0].mxu0
    %v823 = vadd.f32 0.0, %v822
    %v824 = vpop.f32.mrb[0].mxu0
    %v825 = vpop.f32.mrb[0].mxu0
    %v826 = vpop.f32.mrb[0].mxu0
    %827 = vdwg.mxu0
    %v828 = vsel %vm141, %v823, -inf
    %829 = vmax.xlane.f32.xlu0 %v828
    %v830 = vpop.xlane.xlu0 %829
    %v831 = vsub.f32 %v823, %v830
    %v832 = vmul.f32 %v831, 1.442695
    %v833 = vpow.pop %v832
    %v834 = vsel %vm141, %v833, 0.0
    %835 = vadd.xlane.f32.xlu0 %v834
    %v836 = vpop.xlane.xlu0 %835
    %v837 = vrcp.pop %v836
    %v838 = vmul.f32 %v833, %v837
    %v839 = vpack.c.bf16 %v838, %v838
    %840 = vrot.lane.b32.xlu0 %v778, 64
    %v841 = vpop.permute.xlu0 %840
    %v843 = vsel %vm141, %v839, 0
    %v846 = vsel %vm205, %v841, 0
    %848 = vmatprep.subr.bf16.mxu0 0
    %849 = vmatpush1.bf16.msra.mxu0 %v846
    %850 = vmatprep.subr.bf16.mxu0 0
    %851 = vmatpush1.bf16.msra.mxu0 0
    %852 = vmatprep.subr.bf16.mxu0 0
    %853 = vmatpush1.bf16.msra.mxu0 0
    %854 = vmatprep.subr.bf16.mxu0 0
    %855 = vmatpush1.bf16.msra.mxu0 0
    %856 = vmatprep.subr.bf16.mxu0 0
    %857 = vmatpush1.bf16.msra.mxu0 0
    %858 = vmatprep.subr.bf16.mxu0 0
    %859 = vmatpush1.bf16.msra.mxu0 0
    %860 = vmatprep.subr.bf16.mxu0 0
    %861 = vmatpush1.bf16.msra.mxu0 0
    %862 = vmatprep.subr.bf16.mxu0 0
    %863 = vmatpush1.bf16.msra.mxu0 0
    %864 = vmatprep.subr.bf16.mxu0 0
    %865 = vmatpush1.bf16.msra.mxu0 0
    %866 = vmatprep.subr.bf16.mxu0 0
    %867 = vmatpush1.bf16.msra.mxu0 0
    %868 = vmatprep.subr.bf16.mxu0 0
    %869 = vmatpush1.bf16.msra.mxu0 0
    %870 = vmatprep.subr.bf16.mxu0 0
    %871 = vmatpush1.bf16.msra.mxu0 0
    %872 = vmatprep.subr.bf16.mxu0 0
    %873 = vmatpush1.bf16.msra.mxu0 0
    %874 = vmatprep.subr.bf16.mxu0 0
    %875 = vmatpush1.bf16.msra.mxu0 0
    %876 = vmatprep.subr.bf16.mxu0 0
    %877 = vmatpush1.bf16.msra.mxu0 0
    %878 = vmatprep.subr.bf16.mxu0 0
    %879 = vmatpush1.bf16.msra.mxu0 0
    %880 = vmatprep.mubr.bf16.mxu0 0
    %881 = vmatmul.mubr.bf16.gmra.mrb[0].mxu0 %v843
    %v882 = vpop.f32.mrb[0].mxu0
    %v883 = vadd.f32 0.0, %v882
    %v884 = vpop.f32.mrb[0].mxu0
    %v885 = vpop.f32.mrb[0].mxu0
    %v886 = vpop.f32.mrb[0].mxu0
    %887 = vdwg.mxu0
    %v888 = vpack.c.bf16 %v883, %v883
    %v889 = vld [vmem:[%s3] sm:$0xf]
    %891 = vrot.lane.b32.xlu0 %v777, 120
    %v892 = vpop.permute.xlu0 %891
    %893 = vrot.lane.b32.xlu0 %v778, 88
    %v894 = vpop.permute.xlu0 %893
    %v896 = vsel %vm141, %v892, 0
    %v899 = vsel %vm141, %v894, 0
    %901 = vmatprep.subr.bf16.mxu0 0
    %902 = vmatpush1.bf16.xpose.msra.mxu0 %v899
    %903 = vmatprep.subr.bf16.mxu0 0
    %904 = vmatpush1.bf16.xpose.msra.mxu0 0
    %905 = vmatprep.subr.bf16.mxu0 0
    %906 = vmatpush1.bf16.xpose.msra.mxu0 0
    %907 = vmatprep.subr.bf16.mxu0 0
    %908 = vmatpush1.bf16.xpose.msra.mxu0 0
    %909 = vmatprep.subr.bf16.mxu0 0
    %910 = vmatpush1.bf16.xpose.msra.mxu0 0
    %911 = vmatprep.subr.bf16.mxu0 0
    %912 = vmatpush1.bf16.xpose.msra.mxu0 0
    %913 = vmatprep.subr.bf16.mxu0 0
    %914 = vmatpush1.bf16.xpose.msra.mxu0 0
    %915 = vmatprep.subr.bf16.mxu0 0
    %916 = vmatpush1.bf16.xpose.msra.mxu0 0
    %917 = vmatprep.subr.bf16.mxu0 0
    %918 = vmatpush1.bf16.xpose.msra.mxu0 0
    %919 = vmatprep.subr.bf16.mxu0 0
    %920 = vmatpush1.bf16.xpose.msra.mxu0 0
    %921 = vmatprep.subr.bf16.mxu0 0
    %922 = vmatpush1.bf16.xpose.msra.mxu0 0
    %923 = vmatprep.subr.bf16.mxu0 0
    %924 = vmatpush1.bf16.xpose.msra.mxu0 0
    %925 = vmatprep.subr.bf16.mxu0 0
    %926 = vmatpush1.bf16.xpose.msra.mxu0 0
    %927 = vmatprep.subr.bf16.mxu0 0
    %928 = vmatpush1.bf16.xpose.msra.mxu0 0
    %929 = vmatprep.subr.bf16.mxu0 0
    %930 = vmatpush1.bf16.xpose.msra.mxu0 0
    %931 = vmatprep.subr.bf16.mxu0 0
    %932 = vmatpush1.bf16.xpose.msra.mxu0 0
    %933 = vmatprep.mubr.bf16.mxu0 0
    %934 = vmatmul.mubr.bf16.gmra.mrb[0].mxu0 %v896
    %v935 = vpop.f32.mrb[0].mxu0
    %v936 = vadd.f32 0.0, %v935
    %v937 = vpop.f32.mrb[0].mxu0
    %v938 = vpop.f32.mrb[0].mxu0
    %v939 = vpop.f32.mrb[0].mxu0
    %940 = vdwg.mxu0
    %v941 = vsel %vm141, %v936, -inf
    %942 = vmax.xlane.f32.xlu0 %v941
    %v943 = vpop.xlane.xlu0 %942
    %v944 = vsub.f32 %v936, %v943
    %v945 = vmul.f32 %v944, 1.442695
    %v946 = vpow.pop %v945
    %v947 = vsel %vm141, %v946, 0.0
    %948 = vadd.xlane.f32.xlu0 %v947
    %v949 = vpop.xlane.xlu0 %948
    %v950 = vrcp.pop %v949
    %v951 = vmul.f32 %v946, %v950
    %v952 = vpack.c.bf16 %v951, %v951
    %953 = vrot.lane.b32.xlu0 %v778, 56
    %v954 = vpop.permute.xlu0 %953
    %v956 = vsel %vm141, %v952, 0
    %v959 = vsel %vm205, %v954, 0
    %961 = vmatprep.subr.bf16.mxu0 0
    %962 = vmatpush1.bf16.msra.mxu0 %v959
    %963 = vmatprep.subr.bf16.mxu0 0
    %964 = vmatpush1.bf16.msra.mxu0 0
    %965 = vmatprep.subr.bf16.mxu0 0
    %966 = vmatpush1.bf16.msra.mxu0 0
    %967 = vmatprep.subr.bf16.mxu0 0
    %968 = vmatpush1.bf16.msra.mxu0 0
    %969 = vmatprep.subr.bf16.mxu0 0
    %970 = vmatpush1.bf16.msra.mxu0 0
    %971 = vmatprep.subr.bf16.mxu0 0
    %972 = vmatpush1.bf16.msra.mxu0 0
    %973 = vmatprep.subr.bf16.mxu0 0
    %974 = vmatpush1.bf16.msra.mxu0 0
    %975 = vmatprep.subr.bf16.mxu0 0
    %976 = vmatpush1.bf16.msra.mxu0 0
    %977 = vmatprep.subr.bf16.mxu0 0
    %978 = vmatpush1.bf16.msra.mxu0 0
    %979 = vmatprep.subr.bf16.mxu0 0
    %980 = vmatpush1.bf16.msra.mxu0 0
    %981 = vmatprep.subr.bf16.mxu0 0
    %982 = vmatpush1.bf16.msra.mxu0 0
    %983 = vmatprep.subr.bf16.mxu0 0
    %984 = vmatpush1.bf16.msra.mxu0 0
    %985 = vmatprep.subr.bf16.mxu0 0
    %986 = vmatpush1.bf16.msra.mxu0 0
    %987 = vmatprep.subr.bf16.mxu0 0
    %988 = vmatpush1.bf16.msra.mxu0 0
    %989 = vmatprep.subr.bf16.mxu0 0
    %990 = vmatpush1.bf16.msra.mxu0 0
    %991 = vmatprep.subr.bf16.mxu0 0
    %992 = vmatpush1.bf16.msra.mxu0 0
    %993 = vmatprep.mubr.bf16.mxu0 0
    %994 = vmatmul.mubr.bf16.gmra.mrb[0].mxu0 %v956
    %v995 = vpop.f32.mrb[0].mxu0
    %v996 = vadd.f32 0.0, %v995
    %v997 = vpop.f32.mrb[0].mxu0
    %v998 = vpop.f32.mrb[0].mxu0
    %v999 = vpop.f32.mrb[0].mxu0
    %1000 = vdwg.mxu0
    %v1001 = vpack.c.bf16 %v996, %v996
    %v1002 = vld [vmem:[%s3 + $0x4] sm:$0xf]
    %v1004 = vsel %vm141, %v1001, 0
    %v1007 = vsel %vm205, %v1002, 0
    %1009 = vmatprep.subr.bf16.mxu0 0
    %1010 = vmatpush1.bf16.msra.mxu0 %v1007
    %1011 = vmatprep.subr.bf16.mxu0 0
    %1012 = vmatpush1.bf16.msra.mxu0 0
    %1013 = vmatprep.subr.bf16.mxu0 0
    %1014 = vmatpush1.bf16.msra.mxu0 0
    %1015 = vmatprep.subr.bf16.mxu0 0
    %1016 = vmatpush1.bf16.msra.mxu0 0
    %1017 = vmatprep.subr.bf16.mxu0 0
    %1018 = vmatpush1.bf16.msra.mxu0 0
    %1019 = vmatprep.subr.bf16.mxu0 0
    %1020 = vmatpush1.bf16.msra.mxu0 0
    %1021 = vmatprep.subr.bf16.mxu0 0
    %1022 = vmatpush1.bf16.msra.mxu0 0
    %1023 = vmatprep.subr.bf16.mxu0 0
    %1024 = vmatpush1.bf16.msra.mxu0 0
    %1025 = vmatprep.subr.bf16.mxu0 0
    %1026 = vmatpush1.bf16.msra.mxu0 0
    %1027 = vmatprep.subr.bf16.mxu0 0
    %1028 = vmatpush1.bf16.msra.mxu0 0
    %1029 = vmatprep.subr.bf16.mxu0 0
    %1030 = vmatpush1.bf16.msra.mxu0 0
    %1031 = vmatprep.subr.bf16.mxu0 0
    %1032 = vmatpush1.bf16.msra.mxu0 0
    %1033 = vmatprep.subr.bf16.mxu0 0
    %1034 = vmatpush1.bf16.msra.mxu0 0
    %1035 = vmatprep.subr.bf16.mxu0 0
    %1036 = vmatpush1.bf16.msra.mxu0 0
    %1037 = vmatprep.subr.bf16.mxu0 0
    %1038 = vmatpush1.bf16.msra.mxu0 0
    %1039 = vmatprep.subr.bf16.mxu0 0
    %1040 = vmatpush1.bf16.msra.mxu0 0
    %1041 = vmatprep.mubr.bf16.mxu0 0
    %1042 = vmatmul.mubr.bf16.gmra.mrb[0].mxu0 %v1004
    %v1043 = vpop.f32.mrb[0].mxu0
    %v1044 = vadd.f32 0.0, %v1043
    %v1045 = vpop.f32.mrb[0].mxu0
    %v1046 = vpop.f32.mrb[0].mxu0
    %v1047 = vpop.f32.mrb[0].mxu0
    %1048 = vdwg.mxu0
    %v1050 = vsel %vm141, %v888, 0
    %v1053 = vsel %vm205, %v889, 0
    %1055 = vmatprep.subr.bf16.mxu0 0
    %1056 = vmatpush1.bf16.msra.mxu0 %v1053
    %1057 = vmatprep.subr.bf16.mxu0 0
    %1058 = vmatpush1.bf16.msra.mxu0 0
    %1059 = vmatprep.subr.bf16.mxu0 0
    %1060 = vmatpush1.bf16.msra.mxu0 0
    %1061 = vmatprep.subr.bf16.mxu0 0
    %1062 = vmatpush1.bf16.msra.mxu0 0
    %1063 = vmatprep.subr.bf16.mxu0 0
    %1064 = vmatpush1.bf16.msra.mxu0 0
    %1065 = vmatprep.subr.bf16.mxu0 0
    %1066 = vmatpush1.bf16.msra.mxu0 0
    %1067 = vmatprep.subr.bf16.mxu0 0
    %1068 = vmatpush1.bf16.msra.mxu0 0
    %1069 = vmatprep.subr.bf16.mxu0 0
    %1070 = vmatpush1.bf16.msra.mxu0 0
    %1071 = vmatprep.subr.bf16.mxu0 0
    %1072 = vmatpush1.bf16.msra.mxu0 0
    %1073 = vmatprep.subr.bf16.mxu0 0
    %1074 = vmatpush1.bf16.msra.mxu0 0
    %1075 = vmatprep.subr.bf16.mxu0 0
    %1076 = vmatpush1.bf16.msra.mxu0 0
    %1077 = vmatprep.subr.bf16.mxu0 0
    %1078 = vmatpush1.bf16.msra.mxu0 0
    %1079 = vmatprep.subr.bf16.mxu0 0
    %1080 = vmatpush1.bf16.msra.mxu0 0
    %1081 = vmatprep.subr.bf16.mxu0 0
    %1082 = vmatpush1.bf16.msra.mxu0 0
    %1083 = vmatprep.subr.bf16.mxu0 0
    %1084 = vmatpush1.bf16.msra.mxu0 0
    %1085 = vmatprep.subr.bf16.mxu0 0
    %1086 = vmatpush1.bf16.msra.mxu0 0
    %1087 = vmatprep.mubr.bf16.mxu0 0
    %1088 = vmatmul.mubr.bf16.gmra.mrb[0].mxu0 %v1050
    %v1089 = vpop.f32.mrb[0].mxu0
    %v1090 = vadd.f32 %v1044, %v1089
    %v1091 = vpop.f32.mrb[0].mxu0
    %v1092 = vpop.f32.mrb[0].mxu0
    %v1093 = vpop.f32.mrb[0].mxu0
    %1094 = vdwg.mxu0
    %1095 = vrot.lane.b32.xlu0 %v777, 112
    %v1096 = vpop.permute.xlu0 %1095
    %1097 = vrot.lane.b32.xlu0 %v778, 80
    %v1098 = vpop.permute.xlu0 %1097
    %v1100 = vsel %vm141, %v1096, 0
    %v1103 = vsel %vm141, %v1098, 0
    %1105 = vmatprep.subr.bf16.mxu0 0
    %1106 = vmatpush1.bf16.xpose.msra.mxu0 %v1103
    %1107 = vmatprep.subr.bf16.mxu0 0
    %1108 = vmatpush1.bf16.xpose.msra.mxu0 0
    %1109 = vmatprep.subr.bf16.mxu0 0
    %1110 = vmatpush1.bf16.xpose.msra.mxu0 0
    %1111 = vmatprep.subr.bf16.mxu0 0
    %1112 = vmatpush1.bf16.xpose.msra.mxu0 0
    %1113 = vmatprep.subr.bf16.mxu0 0
    %1114 = vmatpush1.bf16.xpose.msra.mxu0 0
    %1115 = vmatprep.subr.bf16.mxu0 0
    %1116 = vmatpush1.bf16.xpose.msra.mxu0 0
    %1117 = vmatprep.subr.bf16.mxu0 0
    %1118 = vmatpush1.bf16.xpose.msra.mxu0 0
    %1119 = vmatprep.subr.bf16.mxu0 0
    %1120 = vmatpush1.bf16.xpose.msra.mxu0 0
    %1121 = vmatprep.subr.bf16.mxu0 0
    %1122 = vmatpush1.bf16.xpose.msra.mxu0 0
    %1123 = vmatprep.subr.bf16.mxu0 0
    %1124 = vmatpush1.bf16.xpose.msra.mxu0 0
    %1125 = vmatprep.subr.bf16.mxu0 0
    %1126 = vmatpush1.bf16.xpose.msra.mxu0 0
    %1127 = vmatprep.subr.bf16.mxu0 0
    %1128 = vmatpush1.bf16.xpose.msra.mxu0 0
    %1129 = vmatprep.subr.bf16.mxu0 0
    %1130 = vmatpush1.bf16.xpose.msra.mxu0 0
    %1131 = vmatprep.subr.bf16.mxu0 0
    %1132 = vmatpush1.bf16.xpose.msra.mxu0 0
    %1133 = vmatprep.subr.bf16.mxu0 0
    %1134 = vmatpush1.bf16.xpose.msra.mxu0 0
    %1135 = vmatprep.subr.bf16.mxu0 0
    %1136 = vmatpush1.bf16.xpose.msra.mxu0 0
    %1137 = vmatprep.mubr.bf16.mxu0 0
    %1138 = vmatmul.mubr.bf16.gmra.mrb[0].mxu0 %v1100
    %v1139 = vpop.f32.mrb[0].mxu0
    %v1140 = vadd.f32 0.0, %v1139
    %v1141 = vpop.f32.mrb[0].mxu0
    %v1142 = vpop.f32.mrb[0].mxu0
    %v1143 = vpop.f32.mrb[0].mxu0
    %1144 = vdwg.mxu0
    %v1145 = vsel %vm141, %v1140, -inf
    %1146 = vmax.xlane.f32.xlu0 %v1145
    %v1147 = vpop.xlane.xlu0 %1146
    %v1148 = vsub.f32 %v1140, %v1147
    %v1149 = vmul.f32 %v1148, 1.442695
    %v1150 = vpow.pop %v1149
    %v1151 = vsel %vm141, %v1150, 0.0
    %1152 = vadd.xlane.f32.xlu0 %v1151
    %v1153 = vpop.xlane.xlu0 %1152
    %v1154 = vrcp.pop %v1153
    %v1155 = vmul.f32 %v1150, %v1154
    %v1156 = vpack.c.bf16 %v1155, %v1155
    %1157 = vrot.lane.b32.xlu0 %v778, 48
    %v1158 = vpop.permute.xlu0 %1157
    %v1160 = vsel %vm141, %v1156, 0
    %v1163 = vsel %vm205, %v1158, 0
    %1165 = vmatprep.subr.bf16.mxu0 0
    %1166 = vmatpush1.bf16.msra.mxu0 %v1163
    %1167 = vmatprep.subr.bf16.mxu0 0
    %1168 = vmatpush1.bf16.msra.mxu0 0
    %1169 = vmatprep.subr.bf16.mxu0 0
    %1170 = vmatpush1.bf16.msra.mxu0 0
    %1171 = vmatprep.subr.bf16.mxu0 0
    %1172 = vmatpush1.bf16.msra.mxu0 0
    %1173 = vmatprep.subr.bf16.mxu0 0
    %1174 = vmatpush1.bf16.msra.mxu0 0
    %1175 = vmatprep.subr.bf16.mxu0 0
    %1176 = vmatpush1.bf16.msra.mxu0 0
    %1177 = vmatprep.subr.bf16.mxu0 0
    %1178 = vmatpush1.bf16.msra.mxu0 0
    %1179 = vmatprep.subr.bf16.mxu0 0
    %1180 = vmatpush1.bf16.msra.mxu0 0
    %1181 = vmatprep.subr.bf16.mxu0 0
    %1182 = vmatpush1.bf16.msra.mxu0 0
    %1183 = vmatprep.subr.bf16.mxu0 0
    %1184 = vmatpush1.bf16.msra.mxu0 0
    %1185 = vmatprep.subr.bf16.mxu0 0
    %1186 = vmatpush1.bf16.msra.mxu0 0
    %1187 = vmatprep.subr.bf16.mxu0 0
    %1188 = vmatpush1.bf16.msra.mxu0 0
    %1189 = vmatprep.subr.bf16.mxu0 0
    %1190 = vmatpush1.bf16.msra.mxu0 0
    %1191 = vmatprep.subr.bf16.mxu0 0
    %1192 = vmatpush1.bf16.msra.mxu0 0
    %1193 = vmatprep.subr.bf16.mxu0 0
    %1194 = vmatpush1.bf16.msra.mxu0 0
    %1195 = vmatprep.subr.bf16.mxu0 0
    %1196 = vmatpush1.bf16.msra.mxu0 0
    %1197 = vmatprep.mubr.bf16.mxu0 0
    %1198 = vmatmul.mubr.bf16.gmra.mrb[0].mxu0 %v1160
    %v1199 = vpop.f32.mrb[0].mxu0
    %v1200 = vadd.f32 0.0, %v1199
    %v1201 = vpop.f32.mrb[0].mxu0
    %v1202 = vpop.f32.mrb[0].mxu0
    %v1203 = vpop.f32.mrb[0].mxu0
    %1204 = vdwg.mxu0
    %v1205 = vpack.c.bf16 %v1200, %v1200
    %v1206 = vld [vmem:[%s3 + $0x8] sm:$0xf]
    %v1208 = vsel %vm141, %v1205, 0
    %v1211 = vsel %vm205, %v1206, 0
    %1213 = vmatprep.subr.bf16.mxu0 0
    %1214 = vmatpush1.bf16.msra.mxu0 %v1211
    %1215 = vmatprep.subr.bf16.mxu0 0
    %1216 = vmatpush1.bf16.msra.mxu0 0
    %1217 = vmatprep.subr.bf16.mxu0 0
    %1218 = vmatpush1.bf16.msra.mxu0 0
    %1219 = vmatprep.subr.bf16.mxu0 0
    %1220 = vmatpush1.bf16.msra.mxu0 0
    %1221 = vmatprep.subr.bf16.mxu0 0
    %1222 = vmatpush1.bf16.msra.mxu0 0
    %1223 = vmatprep.subr.bf16.mxu0 0
    %1224 = vmatpush1.bf16.msra.mxu0 0
    %1225 = vmatprep.subr.bf16.mxu0 0
    %1226 = vmatpush1.bf16.msra.mxu0 0
    %1227 = vmatprep.subr.bf16.mxu0 0
    %1228 = vmatpush1.bf16.msra.mxu0 0
    %1229 = vmatprep.subr.bf16.mxu0 0
    %1230 = vmatpush1.bf16.msra.mxu0 0
    %1231 = vmatprep.subr.bf16.mxu0 0
    %1232 = vmatpush1.bf16.msra.mxu0 0
    %1233 = vmatprep.subr.bf16.mxu0 0
    %1234 = vmatpush1.bf16.msra.mxu0 0
    %1235 = vmatprep.subr.bf16.mxu0 0
    %1236 = vmatpush1.bf16.msra.mxu0 0
    %1237 = vmatprep.subr.bf16.mxu0 0
    %1238 = vmatpush1.bf16.msra.mxu0 0
    %1239 = vmatprep.subr.bf16.mxu0 0
    %1240 = vmatpush1.bf16.msra.mxu0 0
    %1241 = vmatprep.subr.bf16.mxu0 0
    %1242 = vmatpush1.bf16.msra.mxu0 0
    %1243 = vmatprep.subr.bf16.mxu0 0
    %1244 = vmatpush1.bf16.msra.mxu0 0
    %1245 = vmatprep.mubr.bf16.mxu0 0
    %1246 = vmatmul.mubr.bf16.gmra.mrb[0].mxu0 %v1208
    %v1247 = vpop.f32.mrb[0].mxu0
    %v1248 = vadd.f32 0.0, %v1247
    %v1249 = vpop.f32.mrb[0].mxu0
    %v1250 = vpop.f32.mrb[0].mxu0
    %v1251 = vpop.f32.mrb[0].mxu0
    %1252 = vdwg.mxu0
    %v1253 = vadd.f32 %v1090, %v1248
    %1254 = vrot.lane.b32.xlu0 %v777, 104
    %v1255 = vpop.permute.xlu0 %1254
    %1256 = vrot.lane.b32.xlu0 %v778, 72
    %v1257 = vpop.permute.xlu0 %1256
    %v1259 = vsel %vm141, %v1255, 0
    %v1262 = vsel %vm141, %v1257, 0
    %1264 = vmatprep.subr.bf16.mxu0 0
    %1265 = vmatpush1.bf16.xpose.msra.mxu0 %v1262
    %1266 = vmatprep.subr.bf16.mxu0 0
    %1267 = vmatpush1.bf16.xpose.msra.mxu0 0
    %1268 = vmatprep.subr.bf16.mxu0 0
    %1269 = vmatpush1.bf16.xpose.msra.mxu0 0
    %1270 = vmatprep.subr.bf16.mxu0 0
    %1271 = vmatpush1.bf16.xpose.msra.mxu0 0
    %1272 = vmatprep.subr.bf16.mxu0 0
    %1273 = vmatpush1.bf16.xpose.msra.mxu0 0
    %1274 = vmatprep.subr.bf16.mxu0 0
    %1275 = vmatpush1.bf16.xpose.msra.mxu0 0
    %1276 = vmatprep.subr.bf16.mxu0 0
    %1277 = vmatpush1.bf16.xpose.msra.mxu0 0
    %1278 = vmatprep.subr.bf16.mxu0 0
    %1279 = vmatpush1.bf16.xpose.msra.mxu0 0
    %1280 = vmatprep.subr.bf16.mxu0 0
    %1281 = vmatpush1.bf16.xpose.msra.mxu0 0
    %1282 = vmatprep.subr.bf16.mxu0 0
    %1283 = vmatpush1.bf16.xpose.msra.mxu0 0
    %1284 = vmatprep.subr.bf16.mxu0 0
    %1285 = vmatpush1.bf16.xpose.msra.mxu0 0
    %1286 = vmatprep.subr.bf16.mxu0 0
    %1287 = vmatpush1.bf16.xpose.msra.mxu0 0
    %1288 = vmatprep.subr.bf16.mxu0 0
    %1289 = vmatpush1.bf16.xpose.msra.mxu0 0
    %1290 = vmatprep.subr.bf16.mxu0 0
    %1291 = vmatpush1.bf16.xpose.msra.mxu0 0
    %1292 = vmatprep.subr.bf16.mxu0 0
    %1293 = vmatpush1.bf16.xpose.msra.mxu0 0
    %1294 = vmatprep.subr.bf16.mxu0 0
    %1295 = vmatpush1.bf16.xpose.msra.mxu0 0
    %1296 = vmatprep.mubr.bf16.mxu0 0
    %1297 = vmatmul.mubr.bf16.gmra.mrb[0].mxu0 %v1259
    %v1298 = vpop.f32.mrb[0].mxu0
    %v1299 = vadd.f32 0.0, %v1298
    %v1300 = vpop.f32.mrb[0].mxu0
    %v1301 = vpop.f32.mrb[0].mxu0
    %v1302 = vpop.f32.mrb[0].mxu0
    %1303 = vdwg.mxu0
    %v1304 = vsel %vm141, %v1299, -inf
    %1305 = vmax.xlane.f32.xlu0 %v1304
    %v1306 = vpop.xlane.xlu0 %1305
    %v1307 = vsub.f32 %v1299, %v1306
    %v1308 = vmul.f32 %v1307, 1.442695
    %v1309 = vpow.pop %v1308
    %v1310 = vsel %vm141, %v1309, 0.0
    %1311 = vadd.xlane.f32.xlu0 %v1310
    %v1312 = vpop.xlane.xlu0 %1311
    %v1313 = vrcp.pop %v1312
    %v1314 = vmul.f32 %v1309, %v1313
    %v1315 = vpack.c.bf16 %v1314, %v1314
    %1316 = vrot.lane.b32.xlu0 %v778, 40
    %v1317 = vpop.permute.xlu0 %1316
    %v1319 = vsel %vm141, %v1315, 0
    %v1322 = vsel %vm205, %v1317, 0
    %1324 = vmatprep.subr.bf16.mxu0 0
    %1325 = vmatpush1.bf16.msra.mxu0 %v1322
    %1326 = vmatprep.subr.bf16.mxu0 0
    %1327 = vmatpush1.bf16.msra.mxu0 0
    %1328 = vmatprep.subr.bf16.mxu0 0
    %1329 = vmatpush1.bf16.msra.mxu0 0
    %1330 = vmatprep.subr.bf16.mxu0 0
    %1331 = vmatpush1.bf16.msra.mxu0 0
    %1332 = vmatprep.subr.bf16.mxu0 0
    %1333 = vmatpush1.bf16.msra.mxu0 0
    %1334 = vmatprep.subr.bf16.mxu0 0
    %1335 = vmatpush1.bf16.msra.mxu0 0
    %1336 = vmatprep.subr.bf16.mxu0 0
    %1337 = vmatpush1.bf16.msra.mxu0 0
    %1338 = vmatprep.subr.bf16.mxu0 0
    %1339 = vmatpush1.bf16.msra.mxu0 0
    %1340 = vmatprep.subr.bf16.mxu0 0
    %1341 = vmatpush1.bf16.msra.mxu0 0
    %1342 = vmatprep.subr.bf16.mxu0 0
    %1343 = vmatpush1.bf16.msra.mxu0 0
    %1344 = vmatprep.subr.bf16.mxu0 0
    %1345 = vmatpush1.bf16.msra.mxu0 0
    %1346 = vmatprep.subr.bf16.mxu0 0
    %1347 = vmatpush1.bf16.msra.mxu0 0
    %1348 = vmatprep.subr.bf16.mxu0 0
    %1349 = vmatpush1.bf16.msra.mxu0 0
    %1350 = vmatprep.subr.bf16.mxu0 0
    %1351 = vmatpush1.bf16.msra.mxu0 0
    %1352 = vmatprep.subr.bf16.mxu0 0
    %1353 = vmatpush1.bf16.msra.mxu0 0
    %1354 = vmatprep.subr.bf16.mxu0 0
    %1355 = vmatpush1.bf16.msra.mxu0 0
    %1356 = vmatprep.mubr.bf16.mxu0 0
    %1357 = vmatmul.mubr.bf16.gmra.mrb[0].mxu0 %v1319
    %v1358 = vpop.f32.mrb[0].mxu0
    %v1359 = vadd.f32 0.0, %v1358
    %v1360 = vpop.f32.mrb[0].mxu0
    %v1361 = vpop.f32.mrb[0].mxu0
    %v1362 = vpop.f32.mrb[0].mxu0
    %1363 = vdwg.mxu0
    %v1364 = vpack.c.bf16 %v1359, %v1359
    %v1365 = vld [vmem:[%s3 + $0xc] sm:$0xf]
    %v1367 = vsel %vm141, %v1364, 0
    %v1370 = vsel %vm205, %v1365, 0
    %1372 = vmatprep.subr.bf16.mxu0 0
    %1373 = vmatpush1.bf16.msra.mxu0 %v1370
    %1374 = vmatprep.subr.bf16.mxu0 0
    %1375 = vmatpush1.bf16.msra.mxu0 0
    %1376 = vmatprep.subr.bf16.mxu0 0
    %1377 = vmatpush1.bf16.msra.mxu0 0
    %1378 = vmatprep.subr.bf16.mxu0 0
    %1379 = vmatpush1.bf16.msra.mxu0 0
    %1380 = vmatprep.subr.bf16.mxu0 0
    %1381 = vmatpush1.bf16.msra.mxu0 0
    %1382 = vmatprep.subr.bf16.mxu0 0
    %1383 = vmatpush1.bf16.msra.mxu0 0
    %1384 = vmatprep.subr.bf16.mxu0 0
    %1385 = vmatpush1.bf16.msra.mxu0 0
    %1386 = vmatprep.subr.bf16.mxu0 0
    %1387 = vmatpush1.bf16.msra.mxu0 0
    %1388 = vmatprep.subr.bf16.mxu0 0
    %1389 = vmatpush1.bf16.msra.mxu0 0
    %1390 = vmatprep.subr.bf16.mxu0 0
    %1391 = vmatpush1.bf16.msra.mxu0 0
    %1392 = vmatprep.subr.bf16.mxu0 0
    %1393 = vmatpush1.bf16.msra.mxu0 0
    %1394 = vmatprep.subr.bf16.mxu0 0
    %1395 = vmatpush1.bf16.msra.mxu0 0
    %1396 = vmatprep.subr.bf16.mxu0 0
    %1397 = vmatpush1.bf16.msra.mxu0 0
    %1398 = vmatprep.subr.bf16.mxu0 0
    %1399 = vmatpush1.bf16.msra.mxu0 0
    %1400 = vmatprep.subr.bf16.mxu0 0
    %1401 = vmatpush1.bf16.msra.mxu0 0
    %1402 = vmatprep.subr.bf16.mxu0 0
    %1403 = vmatpush1.bf16.msra.mxu0 0
    %1404 = vmatprep.mubr.bf16.mxu0 0
    %1405 = vmatmul.mubr.bf16.gmra.mrb[0].mxu0 %v1367
    %v1406 = vpop.f32.mrb[0].mxu0
    %v1407 = vadd.f32 0.0, %v1406
    %v1408 = vpop.f32.mrb[0].mxu0
    %v1409 = vpop.f32.mrb[0].mxu0
    %v1410 = vpop.f32.mrb[0].mxu0
    %1411 = vdwg.mxu0
    %v1412 = vadd.f32 %v1253, %v1407
    %1413 = vst.msk [vmem:[#allocation3 + $0x8] sm:$0xff] %vm86, %v1412
    %v1414 = vld [vmem:[#allocation3] sm:$0xff]
    %v1415 = vld [vmem:[#allocation3 + $0x8] sm:$0xff]
    %v1416 = vld [vmem:[%s4] sm:$0x1]
    %v1418 = vlaneseq
    %v1419 = vshrl.u32 %v1418, 7
    %v1420 = vsub.s32 0, %v1419
    %v1421 = vrot.slane %v1416, %v1420
    %v1423 = vadd.f32 %v1414, %v1421
    %v1424 = vadd.f32 %v1415, %v1421
    %v1425 = vadd.f32 %v1423, %v60
    %v1426 = vadd.f32 %v1424, %v61
    %v1427 = vsel %vm86, %v1425, 0.0
    %1428 = vadd.xlane.f32.xlu0 %v1427
    %v1429 = vpop.xlane.xlu0 %1428
    %v1430 = vsel %vm86, %v1426, 0.0
    %1431 = vadd.xlane.f32.xlu0 %v1430
    %v1432 = vpop.xlane.xlu0 %1431
    %v1433 = vrcp.pop 32.0
    %v1434 = vmul.f32 %v1429, %v1433
    %v1435 = vmul.f32 %v1432, %v1433
    %v1436 = vsub.f32 %v1425, %v1434
    %v1437 = vsub.f32 %v1426, %v1435
    %v1438 = vmul.f32 %v1436, %v1436
    %v1439 = vmul.f32 %v1437, %v1437
    %v1440 = vsel %vm86, %v1438, 0.0
    %1441 = vadd.xlane.f32.xlu0 %v1440
    %v1442 = vpop.xlane.xlu0 %1441
    %v1443 = vsel %vm86, %v1439, 0.0
    %1444 = vadd.xlane.f32.xlu0 %v1443
    %v1445 = vpop.xlane.xlu0 %1444
    %v1446 = vmul.f32 %v1442, %v1433
    %v1447 = vmul.f32 %v1445, %v1433
    %v1448 = vadd.f32 %v1446, 1e-05
    %v1449 = vadd.f32 %v1447, 1e-05
    %v1450 = vrsqrt.pop %v1448
    %v1451 = vrsqrt.pop %v1449
    %v1452 = vmul.f32 %v1436, %v1450
    %v1453 = vmul.f32 %v1437, %v1451
    %v1454 = vld [vmem:[%s5] sm:$0x1]
    %v1456 = vlaneseq
    %v1457 = vshrl.u32 %v1456, 7
    %v1458 = vsub.s32 0, %v1457
    %v1459 = vrot.slane %v1454, %v1458
    %v1461 = vmul.f32 %v1459, %v1452
    %v1462 = vmul.f32 %v1459, %v1453
    %v1463 = vld [vmem:[%s6] sm:$0x1]
    %v1465 = vlaneseq
    %v1466 = vshrl.u32 %v1465, 7
    %v1467 = vsub.s32 0, %v1466
    %v1468 = vrot.slane %v1463, %v1467
    %v1470 = vadd.f32 %v1461, %v1468
    %v1471 = vadd.f32 %v1462, %v1468
    %v1472 = vpack.c.bf16 %v1471, %v1470
    %v1473 = vld [vmem:[#allocation4] sm:$0xf]
    %v1474 = vld [vmem:[#allocation4 + $0x4] sm:$0xf]
    %v1475 = vld [vmem:[#allocation4 + $0x8] sm:$0xf]
    %v1476 = vld [vmem:[#allocation4 + $0xc] sm:$0xf]
    %v1477 = vld [vmem:[%s8] sm:$0x1]
    %v1479 = vlaneseq
    %v1480 = vshrl.u32 %v1479, 7
    %v1481 = vsub.s32 0, %v1480
    %v1482 = vrot.slane %v1477, %v1481
    %v1488 = vunpack.c.l.b16 %v1473
    %v1489 = vunpack.c.l.b16 %v1474
    %v1490 = vunpack.c.l.b16 %v1475
    %v1491 = vunpack.c.l.b16 %v1476
    %v1492 = vpack.c.b16 %v1489, %v1488
    %v1493 = vpack.c.b16 %v1491, %v1490
    %v1497 = vsel %vm86, %v1472, 0
    %1499 = vmatprep.subr.bf16.mxu0 0
    %1500 = vmatpush1.bf16.msra.mxu0 %v1492
    %1501 = vmatprep.subr.bf16.mxu0 0
    %1502 = vmatpush1.bf16.msra.mxu0 %v1493
    %1503 = vmatprep.subr.bf16.mxu0 0
    %1504 = vmatpush1.bf16.msra.mxu0 0
    %1505 = vmatprep.subr.bf16.mxu0 0
    %1506 = vmatpush1.bf16.msra.mxu0 0
    %1507 = vmatprep.subr.bf16.mxu0 0
    %1508 = vmatpush1.bf16.msra.mxu0 0
    %1509 = vmatprep.subr.bf16.mxu0 0
    %1510 = vmatpush1.bf16.msra.mxu0 0
    %1511 = vmatprep.subr.bf16.mxu0 0
    %1512 = vmatpush1.bf16.msra.mxu0 0
    %1513 = vmatprep.subr.bf16.mxu0 0
    %1514 = vmatpush1.bf16.msra.mxu0 0
    %1515 = vmatprep.subr.bf16.mxu0 0
    %1516 = vmatpush1.bf16.msra.mxu0 0
    %1517 = vmatprep.subr.bf16.mxu0 0
    %1518 = vmatpush1.bf16.msra.mxu0 0
    %1519 = vmatprep.subr.bf16.mxu0 0
    %1520 = vmatpush1.bf16.msra.mxu0 0
    %1521 = vmatprep.subr.bf16.mxu0 0
    %1522 = vmatpush1.bf16.msra.mxu0 0
    %1523 = vmatprep.subr.bf16.mxu0 0
    %1524 = vmatpush1.bf16.msra.mxu0 0
    %1525 = vmatprep.subr.bf16.mxu0 0
    %1526 = vmatpush1.bf16.msra.mxu0 0
    %1527 = vmatprep.subr.bf16.mxu0 0
    %1528 = vmatpush1.bf16.msra.mxu0 0
    %1529 = vmatprep.subr.bf16.mxu0 0
    %1530 = vmatpush1.bf16.msra.mxu0 0
    %1531 = vmatprep.mubr.bf16.mxu0 0
    %1532 = vmatmul.mubr.bf16.gmra.mrb[0].mxu0 %v1497
    %v1533 = vpop.f32.mrb[0].mxu0
    %v1534 = vadd.f32 %v1482, %v1533
    %v1535 = vpop.f32.mrb[0].mxu0
    %v1536 = vpop.f32.mrb[0].mxu0
    %v1537 = vadd.f32 %v1482, %v1536
    %v1538 = vpop.f32.mrb[0].mxu0
    %1539 = vdwg.mxu0
    %v1540 = vmax.f32 %v1534, 0.0
    %v1541 = vmax.f32 %v1537, 0.0
    %v1542 = vpack.c.bf16 %v1541, %v1540
    %v1543 = vld [vmem:[%s9] sm:$0xf]
    %v1544 = vld [vmem:[%s9 + $0x4] sm:$0xf]
    %v1545 = vld [vmem:[%s9 + $0x8] sm:$0xf]
    %v1546 = vld [vmem:[%s9 + $0xc] sm:$0xf]
    %v1547 = vld [vmem:[%s9 + $0x10] sm:$0xf]
    %v1548 = vld [vmem:[%s9 + $0x14] sm:$0xf]
    %v1549 = vld [vmem:[%s9 + $0x18] sm:$0xf]
    %v1550 = vld [vmem:[%s9 + $0x1c] sm:$0xf]
    %v1551 = vld [vmem:[%s10] sm:$0x1]
    %v1553 = vlaneseq
    %v1554 = vshrl.u32 %v1553, 7
    %v1555 = vsub.s32 0, %v1554
    %v1556 = vrot.slane %v1551, %v1555
    %v1566 = vunpack.c.l.b16 %v1543
    %v1567 = vunpack.c.l.b16 %v1544
    %v1568 = vunpack.c.l.b16 %v1545
    %v1569 = vunpack.c.l.b16 %v1546
    %v1570 = vunpack.c.l.b16 %v1547
    %v1571 = vunpack.c.l.b16 %v1548
    %v1572 = vunpack.c.l.b16 %v1549
    %v1573 = vunpack.c.l.b16 %v1550
    %v1574 = vpack.c.b16 %v1567, %v1566
    %v1575 = vpack.c.b16 %v1569, %v1568
    %v1576 = vpack.c.b16 %v1571, %v1570
    %v1577 = vpack.c.b16 %v1573, %v1572
    %vm1582 = vcmask 523264
    %v1584 = vsel %vm1582, %v1542, 0
    %1586 = vmatprep.subr.bf16.mxu0 0
    %1587 = vmatpush1.bf16.msra.mxu0 %v1574
    %1588 = vmatprep.subr.bf16.mxu0 0
    %1589 = vmatpush1.bf16.msra.mxu0 %v1575
    %1590 = vmatprep.subr.bf16.mxu0 0
    %1591 = vmatpush1.bf16.msra.mxu0 %v1576
    %1592 = vmatprep.subr.bf16.mxu0 0
    %1593 = vmatpush1.bf16.msra.mxu0 %v1577
    %1594 = vmatprep.subr.bf16.mxu0 0
    %1595 = vmatpush1.bf16.msra.mxu0 0
    %1596 = vmatprep.subr.bf16.mxu0 0
    %1597 = vmatpush1.bf16.msra.mxu0 0
    %1598 = vmatprep.subr.bf16.mxu0 0
    %1599 = vmatpush1.bf16.msra.mxu0 0
    %1600 = vmatprep.subr.bf16.mxu0 0
    %1601 = vmatpush1.bf16.msra.mxu0 0
    %1602 = vmatprep.subr.bf16.mxu0 0
    %1603 = vmatpush1.bf16.msra.mxu0 0
    %1604 = vmatprep.subr.bf16.mxu0 0
    %1605 = vmatpush1.bf16.msra.mxu0 0
    %1606 = vmatprep.subr.bf16.mxu0 0
    %1607 = vmatpush1.bf16.msra.mxu0 0
    %1608 = vmatprep.subr.bf16.mxu0 0
    %1609 = vmatpush1.bf16.msra.mxu0 0
    %1610 = vmatprep.subr.bf16.mxu0 0
    %1611 = vmatpush1.bf16.msra.mxu0 0
    %1612 = vmatprep.subr.bf16.mxu0 0
    %1613 = vmatpush1.bf16.msra.mxu0 0
    %1614 = vmatprep.subr.bf16.mxu0 0
    %1615 = vmatpush1.bf16.msra.mxu0 0
    %1616 = vmatprep.subr.bf16.mxu0 0
    %1617 = vmatpush1.bf16.msra.mxu0 0
    %1618 = vmatprep.mubr.bf16.mxu0 0
    %1619 = vmatmul.mubr.bf16.gmra.mrb[0].mxu0 %v1584
    %v1620 = vpop.f32.mrb[0].mxu0
    %v1621 = vadd.f32 %v1556, %v1620
    %v1622 = vpop.f32.mrb[0].mxu0
    %v1623 = vpop.f32.mrb[0].mxu0
    %v1624 = vadd.f32 %v1556, %v1623
    %v1625 = vpop.f32.mrb[0].mxu0
    %1626 = vdwg.mxu0
    %v1627 = vadd.f32 %v1621, %v1470
    %v1628 = vadd.f32 %v1624, %v1471
    %v1629 = vsel %vm86, %v1627, 0.0
    %1630 = vadd.xlane.f32.xlu0 %v1629
    %v1631 = vpop.xlane.xlu0 %1630
    %v1632 = vsel %vm86, %v1628, 0.0
    %1633 = vadd.xlane.f32.xlu0 %v1632
    %v1634 = vpop.xlane.xlu0 %1633
    %v1635 = vmul.f32 %v1631, %v1433
    %v1636 = vmul.f32 %v1634, %v1433
    %v1637 = vsub.f32 %v1627, %v1635
    %v1638 = vsub.f32 %v1628, %v1636
    %v1639 = vmul.f32 %v1637, %v1637
    %v1640 = vmul.f32 %v1638, %v1638
    %v1641 = vsel %vm86, %v1639, 0.0
    %1642 = vadd.xlane.f32.xlu0 %v1641
    %v1643 = vpop.xlane.xlu0 %1642
    %v1644 = vsel %vm86, %v1640, 0.0
    %1645 = vadd.xlane.f32.xlu0 %v1644
    %v1646 = vpop.xlane.xlu0 %1645
    %v1647 = vmul.f32 %v1643, %v1433
    %v1648 = vmul.f32 %v1646, %v1433
    %v1649 = vadd.f32 %v1647, 1e-05
    %v1650 = vadd.f32 %v1648, 1e-05
    %v1651 = vrsqrt.pop %v1649
    %v1652 = vrsqrt.pop %v1650
    %v1653 = vmul.f32 %v1637, %v1651
    %v1654 = vmul.f32 %v1638, %v1652
    %v1655 = vld [vmem:[%s11] sm:$0x1]
    %v1657 = vlaneseq
    %v1658 = vshrl.u32 %v1657, 7
    %v1659 = vsub.s32 0, %v1658
    %v1660 = vrot.slane %v1655, %v1659
    %v1662 = vmul.f32 %v1660, %v1653
    %v1663 = vmul.f32 %v1660, %v1654
    %v1664 = vld [vmem:[%s12] sm:$0x1]
    %v1666 = vlaneseq
    %v1667 = vshrl.u32 %v1666, 7
    %v1668 = vsub.s32 0, %v1667
    %v1669 = vrot.slane %v1664, %v1668
    %v1671 = vadd.f32 %v1662, %v1669
    %v1672 = vadd.f32 %v1663, %v1669
    %1673 = vst.msk [vmem:[#allocation7] sm:$0xff] %vm86, %v1671
    %1674 = vst.msk [vmem:[#allocation7 + $0x8] sm:$0xff] %vm86, %v1672
    // Predicated region
    $region58: #{tpu_custom_call.1} parent=1 // pred_check
      _
    $region59: #{tpu_custom_call.1} parent=1 // pred_check_branch
      %1676 = sbr.rel (0) target = $region61
    $region60: #{tpu_custom_call.1} parent=1 // pred_region
      %s1678 = ssub.s32 256, 256
      %1679 = vsyncadd [#allocation6], %s1678
      %s1680 = sshll.u32 [#allocation7], 4
      %s1681 = int_to_ptr.vmem [resolvable:$true] %s1680
      %1686 = dma.vmem_to_hbm [thread:$0]  %s1681, 256, %s13, [#allocation6], 128, 128, 8
    $region61: #{tpu_custom_call.1} parent=1 // pred_fallthru
      _
    // Predicated region
    $region62: #{tpu_custom_call.1} parent=1 // pred_check
      _
    $region63: #{tpu_custom_call.1} parent=1 // pred_check_branch
      %1688 = sbr.rel (0) target = $region65
    $region64: #{tpu_custom_call.1} parent=1 // pred_region
      %1689 = dma.done [#allocation6], 256
    $region65: #{tpu_custom_call.1} parent=1 // pred_fallthru
      _
    %1690 = vsyncpa [#allocation5], 1
    %1691 = vsyncpa [#allocation6], 1

// kernel: tpu_custom_call.1
$region0: #{tpu_custom_call.1}
  #allocation0 [shape = 'u32[]', space=smem, size = 0x4, offset = 0x4, fixed_abs, tag = 'smem constant byte address 0x4 - core index']
  #allocation1 [shape = 'u32[144,128]{1,0:T(1,128)}', space=vmem, size = 0x12000, scoped, tag = 'internal scratch']
  #allocation2 [shape = 'f32[16,96]{1,0:T(8,128)}', space=vmem, size = 0x2000, scoped, tag = 'scratch operand']
  #allocation3 [shape = 'f32[16,32]{1,0:T(8,128)}', space=vmem, size = 0x2000, scoped, tag = 'scratch operand']
  %s0 = inlined_call_operand.vmem [shape: f32[2,8,32], index: 0, kind: input, shape index: {}]
  %s1 = inlined_call_operand.vmem [shape: bf16[32,96], index: 1, kind: input, shape index: {}]
  %s2 = inlined_call_operand.vmem [shape: f32[1,96], index: 2, kind: input, shape index: {}]
  %s3 = inlined_call_operand.vmem [shape: bf16[32,32], index: 3, kind: input, shape index: {}]
  %s4 = inlined_call_operand.vmem [shape: f32[1,32], index: 4, kind: input, shape index: {}]
  %s5 = inlined_call_operand.vmem [shape: f32[1,32], index: 5, kind: input, shape index: {}]
  %s6 = inlined_call_operand.vmem [shape: f32[1,32], index: 6, kind: input, shape index: {}]
  %s7 = inlined_call_operand.hbm [shape: bf16[32,64], index: 7, kind: input, shape index: {}]
  %s8 = inlined_call_operand.vmem [shape: f32[1,64], index: 8, kind: input, shape index: {}]
  %s9 = inlined_call_operand.vmem [shape: bf16[64,32], index: 9, kind: input, shape index: {}]
  %s10 = inlined_call_operand.vmem [shape: f32[1,32], index: 10, kind: input, shape index: {}]
  %s11 = inlined_call_operand.vmem [shape: f32[1,32], index: 11, kind: input, shape index: {}]
  %s12 = inlined_call_operand.vmem [shape: f32[1,32], index: 12, kind: input, shape index: {}]
  %s13 = inlined_call_operand.hbm [shape: f32[2,8,32], index: 13, kind: output, shape index: {}]
  %s14 = sld [smem:[#allocation0]]
  $region66: #{tpu_custom_call.1} parent=0
    _
  %s16 = ssub.s32 1, %s14
  %s17 = scalar_select 0, %s16, %s14
  $region1: #{tpu_custom_call.1} parent=0
    #allocation4 [shape = 'u8[8192]{0}', space=vmem, size = 0x2000, scoped, tag = 'input window, operand 7, single buffered']
    #allocation5 [shape = 's32[1]{0}', space=sflag, size = 0x4, scoped, tag = 'scoped memory for tpu_custom_call.1']
    #allocation6 [shape = 's32[1]{0}', space=sflag, size = 0x4, scoped, tag = 'scoped memory for tpu_custom_call.1']
    #allocation7 [shape = 'u8[8192]{0}', space=vmem, size = 0x2000, scoped, tag = 'output window, operand 0, single buffered']
    %18 = vsyncpa [#allocation5], 0
    %19 = vsyncpa [#allocation6], 0
    // Predicated region
    $region2: #{tpu_custom_call.1} parent=1 // pred_check
      _
    $region3: #{tpu_custom_call.1} parent=1 // pred_check_branch
      %21 = sbr.rel (0) target = $region5
    $region4: #{tpu_custom_call.1} parent=1 // pred_region
      _
    $region5: #{tpu_custom_call.1} parent=1 // pred_fallthru
      _
    // Predicated region
    $region6: #{tpu_custom_call.1} parent=1 // pred_check
      _
    $region7: #{tpu_custom_call.1} parent=1 // pred_check_branch
      %23 = sbr.rel (0) target = $region9
    $region8: #{tpu_custom_call.1} parent=1 // pred_region
      _
    $region9: #{tpu_custom_call.1} parent=1 // pred_fallthru
      _
    // Predicated region
    $region10: #{tpu_custom_call.1} parent=1 // pred_check
      _
    $region11: #{tpu_custom_call.1} parent=1 // pred_check_branch
      %25 = sbr.rel (0) target = $region13
    $region12: #{tpu_custom_call.1} parent=1 // pred_region
      _
    $region13: #{tpu_custom_call.1} parent=1 // pred_fallthru
      _
    // Predicated region
    $region14: #{tpu_custom_call.1} parent=1 // pred_check
      _
    $region15: #{tpu_custom_call.1} parent=1 // pred_check_branch
      %27 = sbr.rel (0) target = $region17
    $region16: #{tpu_custom_call.1} parent=1 // pred_region
      _
    $region17: #{tpu_custom_call.1} parent=1 // pred_fallthru
      _
    // Predicated region
    $region18: #{tpu_custom_call.1} parent=1 // pred_check
      _
    $region19: #{tpu_custom_call.1} parent=1 // pred_check_branch
      %29 = sbr.rel (0) target = $region21
    $region20: #{tpu_custom_call.1} parent=1 // pred_region
      _
    $region21: #{tpu_custom_call.1} parent=1 // pred_fallthru
      _
    // Predicated region
    $region22: #{tpu_custom_call.1} parent=1 // pred_check
      _
    $region23: #{tpu_custom_call.1} parent=1 // pred_check_branch
      %31 = sbr.rel (0) target = $region25
    $region24: #{tpu_custom_call.1} parent=1 // pred_region
      _
    $region25: #{tpu_custom_call.1} parent=1 // pred_fallthru
      _
    // Predicated region
    $region26: #{tpu_custom_call.1} parent=1 // pred_check
      _
    $region27: #{tpu_custom_call.1} parent=1 // pred_check_branch
      %33 = sbr.rel (0) target = $region29
    $region28: #{tpu_custom_call.1} parent=1 // pred_region
      _
    $region29: #{tpu_custom_call.1} parent=1 // pred_fallthru
      _
    // Predicated region
    $region30: #{tpu_custom_call.1} parent=1 // pred_check
      _
    $region31: #{tpu_custom_call.1} parent=1 // pred_check_branch
      %35 = sbr.rel (0) target = $region33
    $region32: #{tpu_custom_call.1} parent=1 // pred_region
      %s37 = ssub.s32 256, 256
      %38 = vsyncadd [#allocation5], %s37
      %s39 = sshll.u32 [#allocation4], 4
      %s40 = int_to_ptr.vmem [resolvable:$true] %s39
      %45 = dma.hbm_to_vmem [thread:$0]  %s7, 256, %s40, [#allocation5], 64, 64, 4
    $region33: #{tpu_custom_call.1} parent=1 // pred_fallthru
      _
    // Predicated region
    $region34: #{tpu_custom_call.1} parent=1 // pred_check
      _
    $region35: #{tpu_custom_call.1} parent=1 // pred_check_branch
      %47 = sbr.rel (0) target = $region37
    $region36: #{tpu_custom_call.1} parent=1 // pred_region
      _
    $region37: #{tpu_custom_call.1} parent=1 // pred_fallthru
      _
    // Predicated region
    $region38: #{tpu_custom_call.1} parent=1 // pred_check
      _
    $region39: #{tpu_custom_call.1} parent=1 // pred_check_branch
      %49 = sbr.rel (0) target = $region41
    $region40: #{tpu_custom_call.1} parent=1 // pred_region
      _
    $region41: #{tpu_custom_call.1} parent=1 // pred_fallthru
      _
    // Predicated region
    $region42: #{tpu_custom_call.1} parent=1 // pred_check
      _
    $region43: #{tpu_custom_call.1} parent=1 // pred_check_branch
      %51 = sbr.rel (0) target = $region45
    $region44: #{tpu_custom_call.1} parent=1 // pred_region
      _
    $region45: #{tpu_custom_call.1} parent=1 // pred_fallthru
      _
    // Predicated region
    $region46: #{tpu_custom_call.1} parent=1 // pred_check
      _
    $region47: #{tpu_custom_call.1} parent=1 // pred_check_branch
      %53 = sbr.rel (0) target = $region49
    $region48: #{tpu_custom_call.1} parent=1 // pred_region
      _
    $region49: #{tpu_custom_call.1} parent=1 // pred_fallthru
      _
    // Predicated region
    $region50: #{tpu_custom_call.1} parent=1 // pred_check
      _
    $region51: #{tpu_custom_call.1} parent=1 // pred_check_branch
      %55 = sbr.rel (0) target = $region53
    $region52: #{tpu_custom_call.1} parent=1 // pred_region
      _
    $region53: #{tpu_custom_call.1} parent=1 // pred_fallthru
      _
    // Predicated region
    $region54: #{tpu_custom_call.1} parent=1 // pred_check
      _
    $region55: #{tpu_custom_call.1} parent=1 // pred_check_branch
      %57 = sbr.rel (0) target = $region57
    $region56: #{tpu_custom_call.1} parent=1 // pred_region
      %58 = dma.done [#allocation5], 256
    $region57: #{tpu_custom_call.1} parent=1 // pred_fallthru
      _
    %v60 = vld [vmem:[%s0] sm:$0xff]
    %v61 = vld [vmem:[%s0 + $0x8] sm:$0xff]
    %v62 = vpack.c.bf16 %v61, %v60
    %v63 = vld [vmem:[%s1] sm:$0xf]
    %v64 = vld [vmem:[%s1 + $0x4] sm:$0xf]
    %v65 = vld [vmem:[%s1 + $0x8] sm:$0xf]
    %v66 = vld [vmem:[%s1 + $0xc] sm:$0xf]
    %v67 = vld [vmem:[%s2] sm:$0x1]
    %v69 = vlaneseq
    %v70 = vshrl.u32 %v69, 7
    %v71 = vsub.s32 0, %v70
    %v72 = vrot.slane %v67, %v71
    %v78 = vunpack.c.l.b16 %v63
    %v79 = vunpack.c.l.b16 %v64
    %v80 = vunpack.c.l.b16 %v65
    %v81 = vunpack.c.l.b16 %v66
    %v82 = vpack.c.b16 %v79, %v78
    %v83 = vpack.c.b16 %v81, %v80
    %vm86 = vcmask 261120
    %v88 = vsel %vm86, %v62, 0
    %90 = vmatprep.subr.bf16.mxu0 0
    %91 = vmatpush1.bf16.msra.mxu0 %v82
    %92 = vmatprep.subr.bf16.mxu0 0
    %93 = vmatpush1.bf16.msra.mxu0 %v83
    %94 = vmatprep.subr.bf16.mxu0 0
    %95 = vmatpush1.bf16.msra.mxu0 0
    %96 = vmatprep.subr.bf16.mxu0 0
    %97 = vmatpush1.bf16.msra.mxu0 0
    %98 = vmatprep.subr.bf16.mxu0 0
    %99 = vmatpush1.bf16.msra.mxu0 0
    %100 = vmatprep.subr.bf16.mxu0 0
    %101 = vmatpush1.bf16.msra.mxu0 0
    %102 = vmatprep.subr.bf16.mxu0 0
    %103 = vmatpush1.bf16.msra.mxu0 0
    %104 = vmatprep.subr.bf16.mxu0 0
    %105 = vmatpush1.bf16.msra.mxu0 0
    %106 = vmatprep.subr.bf16.mxu0 0
    %107 = vmatpush1.bf16.msra.mxu0 0
    %108 = vmatprep.subr.bf16.mxu0 0
    %109 = vmatpush1.bf16.msra.mxu0 0
    %110 = vmatprep.subr.bf16.mxu0 0
    %111 = vmatpush1.bf16.msra.mxu0 0
    %112 = vmatprep.subr.bf16.mxu0 0
    %113 = vmatpush1.bf16.msra.mxu0 0
    %114 = vmatprep.subr.bf16.mxu0 0
    %115 = vmatpush1.bf16.msra.mxu0 0
    %116 = vmatprep.subr.bf16.mxu0 0
    %117 = vmatpush1.bf16.msra.mxu0 0
    %118 = vmatprep.subr.bf16.mxu0 0
    %119 = vmatpush1.bf16.msra.mxu0 0
    %120 = vmatprep.subr.bf16.mxu0 0
    %121 = vmatpush1.bf16.msra.mxu0 0
    %122 = vmatprep.mubr.bf16.mxu0 0
    %123 = vmatmul.mubr.bf16.gmra.mrb[0].mxu0 %v88
    %v124 = vpop.f32.mrb[0].mxu0
    %v125 = vadd.f32 %v72, %v124
    %v126 = vpop.f32.mrb[0].mxu0
    %v127 = vpop.f32.mrb[0].mxu0
    %v128 = vadd.f32 %v72, %v127
    %v129 = vpop.f32.mrb[0].mxu0
    %130 = vdwg.mxu0
    %vm131 = vcmask 785408
    %132 = vst.msk [vmem:[#allocation2] sm:$0xff] %vm131, %v125
    %133 = vst.msk [vmem:[#allocation2 + $0x8] sm:$0xff] %vm131, %v128
    %v134 = vld [vmem:[#allocation2] sm:$0xff]
    %v135 = vmul.f32 %v134, 0.35355338
    %v136 = vpack.c.bf16 %v135, %v135
    %v137 = vpack.c.bf16 %v134, %v134
    %139 = vrot.lane.b32.xlu0 %v137, 96
    %v140 = vpop.permute.xlu0 %139
    %vm141 = vcmask 64512
    %v143 = vsel %vm141, %v136, 0
    %v146 = vsel %vm141, %v140, 0
    %148 = vmatprep.subr.bf16.mxu0 0
    %149 = vmatpush1.bf16.xpose.msra.mxu0 %v146
    %150 = vmatprep.subr.bf16.mxu0 0
    %151 = vmatpush1.bf16.xpose.msra.mxu0 0
    %152 = vmatprep.subr.bf16.mxu0 0
    %153 = vmatpush1.bf16.xpose.msra.mxu0 0
    %154 = vmatprep.subr.bf16.mxu0 0
    %155 = vmatpush1.bf16.xpose.msra.mxu0 0
    %156 = vmatprep.subr.bf16.mxu0 0
    %157 = vmatpush1.bf16.xpose.msra.mxu0 0
    %158 = vmatprep.subr.bf16.mxu0 0
    %159 = vmatpush1.bf16.xpose.msra.mxu0 0
    %160 = vmatprep.subr.bf16.mxu0 0
    %161 = vmatpush1.bf16.xpose.msra.mxu0 0
    %162 = vmatprep.subr.bf16.mxu0 0
    %163 = vmatpush1.bf16.xpose.msra.mxu0 0
    %164 = vmatprep.subr.bf16.mxu0 0
    %165 = vmatpush1.bf16.xpose.msra.mxu0 0
    %166 = vmatprep.subr.bf16.mxu0 0
    %167 = vmatpush1.bf16.xpose.msra.mxu0 0
    %168 = vmatprep.subr.bf16.mxu0 0
    %169 = vmatpush1.bf16.xpose.msra.mxu0 0
    %170 = vmatprep.subr.bf16.mxu0 0
    %171 = vmatpush1.bf16.xpose.msra.mxu0 0
    %172 = vmatprep.subr.bf16.mxu0 0
    %173 = vmatpush1.bf16.xpose.msra.mxu0 0
    %174 = vmatprep.subr.bf16.mxu0 0
    %175 = vmatpush1.bf16.xpose.msra.mxu0 0
    %176 = vmatprep.subr.bf16.mxu0 0
    %177 = vmatpush1.bf16.xpose.msra.mxu0 0
    %178 = vmatprep.subr.bf16.mxu0 0
    %179 = vmatpush1.bf16.xpose.msra.mxu0 0
    %180 = vmatprep.mubr.bf16.mxu0 0
    %181 = vmatmul.mubr.bf16.gmra.mrb[0].mxu0 %v143
    %v182 = vpop.f32.mrb[0].mxu0
    %v183 = vadd.f32 0.0, %v182
    %v184 = vpop.f32.mrb[0].mxu0
    %v185 = vpop.f32.mrb[0].mxu0
    %v186 = vpop.f32.mrb[0].mxu0
    %187 = vdwg.mxu0
    %v188 = vsel %vm141, %v183, -inf
    %189 = vmax.xlane.f32.xlu0 %v188
    %v190 = vpop.xlane.xlu0 %189
    %v191 = vsub.f32 %v183, %v190
    %v192 = vmul.f32 %v191, 1.442695
    %v193 = vpow.pop %v192
    %v194 = vsel %vm141, %v193, 0.0
    %195 = vadd.xlane.f32.xlu0 %v194
    %v196 = vpop.xlane.xlu0 %195
    %v197 = vrcp.pop %v196
    %v198 = vmul.f32 %v193, %v197
    %v199 = vpack.c.bf16 %v198, %v198
    %200 = vrot.lane.b32.xlu0 %v137, 64
    %v201 = vpop.permute.xlu0 %200
    %v203 = vsel %vm141, %v199, 0
    %vm205 = vcmask 1043456
    %v207 = vsel %vm205, %v201, 0
    %209 = vmatprep.subr.bf16.mxu0 0
    %210 = vmatpush1.bf16.msra.mxu0 %v207
    %211 = vmatprep.subr.bf16.mxu0 0
    %212 = vmatpush1.bf16.msra.mxu0 0
    %213 = vmatprep.subr.bf16.mxu0 0
    %214 = vmatpush1.bf16.msra.mxu0 0
    %215 = vmatprep.subr.bf16.mxu0 0
    %216 = vmatpush1.bf16.msra.mxu0 0
    %217 = vmatprep.subr.bf16.mxu0 0
    %218 = vmatpush1.bf16.msra.mxu0 0
    %219 = vmatprep.subr.bf16.mxu0 0
    %220 = vmatpush1.bf16.msra.mxu0 0
    %221 = vmatprep.subr.bf16.mxu0 0
    %222 = vmatpush1.bf16.msra.mxu0 0
    %223 = vmatprep.subr.bf16.mxu0 0
    %224 = vmatpush1.bf16.msra.mxu0 0
    %225 = vmatprep.subr.bf16.mxu0 0
    %226 = vmatpush1.bf16.msra.mxu0 0
    %227 = vmatprep.subr.bf16.mxu0 0
    %228 = vmatpush1.bf16.msra.mxu0 0
    %229 = vmatprep.subr.bf16.mxu0 0
    %230 = vmatpush1.bf16.msra.mxu0 0
    %231 = vmatprep.subr.bf16.mxu0 0
    %232 = vmatpush1.bf16.msra.mxu0 0
    %233 = vmatprep.subr.bf16.mxu0 0
    %234 = vmatpush1.bf16.msra.mxu0 0
    %235 = vmatprep.subr.bf16.mxu0 0
    %236 = vmatpush1.bf16.msra.mxu0 0
    %237 = vmatprep.subr.bf16.mxu0 0
    %238 = vmatpush1.bf16.msra.mxu0 0
    %239 = vmatprep.subr.bf16.mxu0 0
    %240 = vmatpush1.bf16.msra.mxu0 0
    %241 = vmatprep.mubr.bf16.mxu0 0
    %242 = vmatmul.mubr.bf16.gmra.mrb[0].mxu0 %v203
    %v243 = vpop.f32.mrb[0].mxu0
    %v244 = vadd.f32 0.0, %v243
    %v245 = vpop.f32.mrb[0].mxu0
    %v246 = vpop.f32.mrb[0].mxu0
    %v247 = vpop.f32.mrb[0].mxu0
    %248 = vdwg.mxu0
    %v249 = vpack.c.bf16 %v244, %v244
    %v250 = vld [vmem:[%s3] sm:$0xf]
    %252 = vrot.lane.b32.xlu0 %v136, 120
    %v253 = vpop.permute.xlu0 %252
    %254 = vrot.lane.b32.xlu0 %v137, 88
    %v255 = vpop.permute.xlu0 %254
    %v257 = vsel %vm141, %v253, 0
    %v260 = vsel %vm141, %v255, 0
    %262 = vmatprep.subr.bf16.mxu0 0
    %263 = vmatpush1.bf16.xpose.msra.mxu0 %v260
    %264 = vmatprep.subr.bf16.mxu0 0
    %265 = vmatpush1.bf16.xpose.msra.mxu0 0
    %266 = vmatprep.subr.bf16.mxu0 0
    %267 = vmatpush1.bf16.xpose.msra.mxu0 0
    %268 = vmatprep.subr.bf16.mxu0 0
    %269 = vmatpush1.bf16.xpose.msra.mxu0 0
    %270 = vmatprep.subr.bf16.mxu0 0
    %271 = vmatpush1.bf16.xpose.msra.mxu0 0
    %272 = vmatprep.subr.bf16.mxu0 0
    %273 = vmatpush1.bf16.xpose.msra.mxu0 0
    %274 = vmatprep.subr.bf16.mxu0 0
    %275 = vmatpush1.bf16.xpose.msra.mxu0 0
    %276 = vmatprep.subr.bf16.mxu0 0
    %277 = vmatpush1.bf16.xpose.msra.mxu0 0
    %278 = vmatprep.subr.bf16.mxu0 0
    %279 = vmatpush1.bf16.xpose.msra.mxu0 0
    %280 = vmatprep.subr.bf16.mxu0 0
    %281 = vmatpush1.bf16.xpose.msra.mxu0 0
    %282 = vmatprep.subr.bf16.mxu0 0
    %283 = vmatpush1.bf16.xpose.msra.mxu0 0
    %284 = vmatprep.subr.bf16.mxu0 0
    %285 = vmatpush1.bf16.xpose.msra.mxu0 0
    %286 = vmatprep.subr.bf16.mxu0 0
    %287 = vmatpush1.bf16.xpose.msra.mxu0 0
    %288 = vmatprep.subr.bf16.mxu0 0
    %289 = vmatpush1.bf16.xpose.msra.mxu0 0
    %290 = vmatprep.subr.bf16.mxu0 0
    %291 = vmatpush1.bf16.xpose.msra.mxu0 0
    %292 = vmatprep.subr.bf16.mxu0 0
    %293 = vmatpush1.bf16.xpose.msra.mxu0 0
    %294 = vmatprep.mubr.bf16.mxu0 0
    %295 = vmatmul.mubr.bf16.gmra.mrb[0].mxu0 %v257
    %v296 = vpop.f32.mrb[0].mxu0
    %v297 = vadd.f32 0.0, %v296
    %v298 = vpop.f32.mrb[0].mxu0
    %v299 = vpop.f32.mrb[0].mxu0
    %v300 = vpop.f32.mrb[0].mxu0
    %301 = vdwg.mxu0
    %v302 = vsel %vm141, %v297, -inf
    %303 = vmax.xlane.f32.xlu0 %v302
    %v304 = vpop.xlane.xlu0 %303
    %v305 = vsub.f32 %v297, %v304
    %v306 = vmul.f32 %v305, 1.442695
    %v307 = vpow.pop %v306
    %v308 = vsel %vm141, %v307, 0.0
    %309 = vadd.xlane.f32.xlu0 %v308
    %v310 = vpop.xlane.xlu0 %309
    %v311 = vrcp.pop %v310
    %v312 = vmul.f32 %v307, %v311
    %v313 = vpack.c.bf16 %v312, %v312
    %314 = vrot.lane.b32.xlu0 %v137, 56
    %v315 = vpop.permute.xlu0 %314
    %v317 = vsel %vm141, %v313, 0
    %v320 = vsel %vm205, %v315, 0
    %322 = vmatprep.subr.bf16.mxu0 0
    %323 = vmatpush1.bf16.msra.mxu0 %v320
    %324 = vmatprep.subr.bf16.mxu0 0
    %325 = vmatpush1.bf16.msra.mxu0 0
    %326 = vmatprep.subr.bf16.mxu0 0
    %327 = vmatpush1.bf16.msra.mxu0 0
    %328 = vmatprep.subr.bf16.mxu0 0
    %329 = vmatpush1.bf16.msra.mxu0 0
    %330 = vmatprep.subr.bf16.mxu0 0
    %331 = vmatpush1.bf16.msra.mxu0 0
    %332 = vmatprep.subr.bf16.mxu0 0
    %333 = vmatpush1.bf16.msra.mxu0 0
    %334 = vmatprep.subr.bf16.mxu0 0
    %335 = vmatpush1.bf16.msra.mxu0 0
    %336 = vmatprep.subr.bf16.mxu0 0
    %337 = vmatpush1.bf16.msra.mxu0 0
    %338 = vmatprep.subr.bf16.mxu0 0
    %339 = vmatpush1.bf16.msra.mxu0 0
    %340 = vmatprep.subr.bf16.mxu0 0
    %341 = vmatpush1.bf16.msra.mxu0 0
    %342 = vmatprep.subr.bf16.mxu0 0
    %343 = vmatpush1.bf16.msra.mxu0 0
    %344 = vmatprep.subr.bf16.mxu0 0
    %345 = vmatpush1.bf16.msra.mxu0 0
    %346 = vmatprep.subr.bf16.mxu0 0
    %347 = vmatpush1.bf16.msra.mxu0 0
    %348 = vmatprep.subr.bf16.mxu0 0
    %349 = vmatpush1.bf16.msra.mxu0 0
    %350 = vmatprep.subr.bf16.mxu0 0
    %351 = vmatpush1.bf16.msra.mxu0 0
    %352 = vmatprep.subr.bf16.mxu0 0
    %353 = vmatpush1.bf16.msra.mxu0 0
    %354 = vmatprep.mubr.bf16.mxu0 0
    %355 = vmatmul.mubr.bf16.gmra.mrb[0].mxu0 %v317
    %v356 = vpop.f32.mrb[0].mxu0
    %v357 = vadd.f32 0.0, %v356
    %v358 = vpop.f32.mrb[0].mxu0
    %v359 = vpop.f32.mrb[0].mxu0
    %v360 = vpop.f32.mrb[0].mxu0
    %361 = vdwg.mxu0
    %v362 = vpack.c.bf16 %v357, %v357
    %v363 = vld [vmem:[%s3 + $0x4] sm:$0xf]
    %v365 = vsel %vm141, %v362, 0
    %v368 = vsel %vm205, %v363, 0
    %370 = vmatprep.subr.bf16.mxu0 0
    %371 = vmatpush1.bf16.msra.mxu0 %v368
    %372 = vmatprep.subr.bf16.mxu0 0
    %373 = vmatpush1.bf16.msra.mxu0 0
    %374 = vmatprep.subr.bf16.mxu0 0
    %375 = vmatpush1.bf16.msra.mxu0 0
    %376 = vmatprep.subr.bf16.mxu0 0
    %377 = vmatpush1.bf16.msra.mxu0 0
    %378 = vmatprep.subr.bf16.mxu0 0
    %379 = vmatpush1.bf16.msra.mxu0 0
    %380 = vmatprep.subr.bf16.mxu0 0
    %381 = vmatpush1.bf16.msra.mxu0 0
    %382 = vmatprep.subr.bf16.mxu0 0
    %383 = vmatpush1.bf16.msra.mxu0 0
    %384 = vmatprep.subr.bf16.mxu0 0
    %385 = vmatpush1.bf16.msra.mxu0 0
    %386 = vmatprep.subr.bf16.mxu0 0
    %387 = vmatpush1.bf16.msra.mxu0 0
    %388 = vmatprep.subr.bf16.mxu0 0
    %389 = vmatpush1.bf16.msra.mxu0 0
    %390 = vmatprep.subr.bf16.mxu0 0
    %391 = vmatpush1.bf16.msra.mxu0 0
    %392 = vmatprep.subr.bf16.mxu0 0
    %393 = vmatpush1.bf16.msra.mxu0 0
    %394 = vmatprep.subr.bf16.mxu0 0
    %395 = vmatpush1.bf16.msra.mxu0 0
    %396 = vmatprep.subr.bf16.mxu0 0
    %397 = vmatpush1.bf16.msra.mxu0 0
    %398 = vmatprep.subr.bf16.mxu0 0
    %399 = vmatpush1.bf16.msra.mxu0 0
    %400 = vmatprep.subr.bf16.mxu0 0
    %401 = vmatpush1.bf16.msra.mxu0 0
    %402 = vmatprep.mubr.bf16.mxu0 0
    %403 = vmatmul.mubr.bf16.gmra.mrb[0].mxu0 %v365
    %v404 = vpop.f32.mrb[0].mxu0
    %v405 = vadd.f32 0.0, %v404
    %v406 = vpop.f32.mrb[0].mxu0
    %v407 = vpop.f32.mrb[0].mxu0
    %v408 = vpop.f32.mrb[0].mxu0
    %409 = vdwg.mxu0
    %v411 = vsel %vm141, %v249, 0
    %v414 = vsel %vm205, %v250, 0
    %416 = vmatprep.subr.bf16.mxu0 0
    %417 = vmatpush1.bf16.msra.mxu0 %v414
    %418 = vmatprep.subr.bf16.mxu0 0
    %419 = vmatpush1.bf16.msra.mxu0 0
    %420 = vmatprep.subr.bf16.mxu0 0
    %421 = vmatpush1.bf16.msra.mxu0 0
    %422 = vmatprep.subr.bf16.mxu0 0
    %423 = vmatpush1.bf16.msra.mxu0 0
    %424 = vmatprep.subr.bf16.mxu0 0
    %425 = vmatpush1.bf16.msra.mxu0 0
    %426 = vmatprep.subr.bf16.mxu0 0
    %427 = vmatpush1.bf16.msra.mxu0 0
    %428 = vmatprep.subr.bf16.mxu0 0
    %429 = vmatpush1.bf16.msra.mxu0 0
    %430 = vmatprep.subr.bf16.mxu0 0
    %431 = vmatpush1.bf16.msra.mxu0 0
    %432 = vmatprep.subr.bf16.mxu0 0
    %433 = vmatpush1.bf16.msra.mxu0 0
    %434 = vmatprep.subr.bf16.mxu0 0
    %435 = vmatpush1.bf16.msra.mxu0 0
    %436 = vmatprep.subr.bf16.mxu0 0
    %437 = vmatpush1.bf16.msra.mxu0 0
    %438 = vmatprep.subr.bf16.mxu0 0
    %439 = vmatpush1.bf16.msra.mxu0 0
    %440 = vmatprep.subr.bf16.mxu0 0
    %441 = vmatpush1.bf16.msra.mxu0 0
    %442 = vmatprep.subr.bf16.mxu0 0
    %443 = vmatpush1.bf16.msra.mxu0 0
    %444 = vmatprep.subr.bf16.mxu0 0
    %445 = vmatpush1.bf16.msra.mxu0 0
    %446 = vmatprep.subr.bf16.mxu0 0
    %447 = vmatpush1.bf16.msra.mxu0 0
    %448 = vmatprep.mubr.bf16.mxu0 0
    %449 = vmatmul.mubr.bf16.gmra.mrb[0].mxu0 %v411
    %v450 = vpop.f32.mrb[0].mxu0
    %v451 = vadd.f32 %v405, %v450
    %v452 = vpop.f32.mrb[0].mxu0
    %v453 = vpop.f32.mrb[0].mxu0
    %v454 = vpop.f32.mrb[0].mxu0
    %455 = vdwg.mxu0
    %456 = vrot.lane.b32.xlu0 %v136, 112
    %v457 = vpop.permute.xlu0 %456
    %458 = vrot.lane.b32.xlu0 %v137, 80
    %v459 = vpop.permute.xlu0 %458
    %v461 = vsel %vm141, %v457, 0
    %v464 = vsel %vm141, %v459, 0
    %466 = vmatprep.subr.bf16.mxu0 0
    %467 = vmatpush1.bf16.xpose.msra.mxu0 %v464
    %468 = vmatprep.subr.bf16.mxu0 0
    %469 = vmatpush1.bf16.xpose.msra.mxu0 0
    %470 = vmatprep.subr.bf16.mxu0 0
    %471 = vmatpush1.bf16.xpose.msra.mxu0 0
    %472 = vmatprep.subr.bf16.mxu0 0
    %473 = vmatpush1.bf16.xpose.msra.mxu0 0
    %474 = vmatprep.subr.bf16.mxu0 0
    %475 = vmatpush1.bf16.xpose.msra.mxu0 0
    %476 = vmatprep.subr.bf16.mxu0 0
    %477 = vmatpush1.bf16.xpose.msra.mxu0 0
    %478 = vmatprep.subr.bf16.mxu0 0
    %479 = vmatpush1.bf16.xpose.msra.mxu0 0
    %480 = vmatprep.subr.bf16.mxu0 0
    %481 = vmatpush1.bf16.xpose.msra.mxu0 0
    %482 = vmatprep.subr.bf16.mxu0 0
    %483 = vmatpush1.bf16.xpose.msra.mxu0 0
    %484 = vmatprep.subr.bf16.mxu0 0
    %485 = vmatpush1.bf16.xpose.msra.mxu0 0
    %486 = vmatprep.subr.bf16.mxu0 0
    %487 = vmatpush1.bf16.xpose.msra.mxu0 0
    %488 = vmatprep.subr.bf16.mxu0 0
    %489 = vmatpush1.bf16.xpose.msra.mxu0 0
    %490 = vmatprep.subr.bf16.mxu0 0
    %491 = vmatpush1.bf16.xpose.msra.mxu0 0
    %492 = vmatprep.subr.bf16.mxu0 0
    %493 = vmatpush1.bf16.xpose.msra.mxu0 0
    %494 = vmatprep.subr.bf16.mxu0 0
    %495 = vmatpush1.bf16.xpose.msra.mxu0 0
    %496 = vmatprep.subr.bf16.mxu0 0
    %497 = vmatpush1.bf16.xpose.msra.mxu0 0
    %498 = vmatprep.mubr.bf16.mxu0 0
    %499 = vmatmul.mubr.bf16.gmra.mrb[0].mxu0 %v461
    %v500 = vpop.f32.mrb[0].mxu0
    %v501 = vadd.f32 0.0, %v500
    %v502 = vpop.f32.mrb[0].mxu0
    %v503 = vpop.f32.mrb[0].mxu0
    %v504 = vpop.f32.mrb[0].mxu0
    %505 = vdwg.mxu0
    %v506 = vsel %vm141, %v501, -inf
    %507 = vmax.xlane.f32.xlu0 %v506
    %v508 = vpop.xlane.xlu0 %507
    %v509 = vsub.f32 %v501, %v508
    %v510 = vmul.f32 %v509, 1.442695
    %v511 = vpow.pop %v510
    %v512 = vsel %vm141, %v511, 0.0
    %513 = vadd.xlane.f32.xlu0 %v512
    %v514 = vpop.xlane.xlu0 %513
    %v515 = vrcp.pop %v514
    %v516 = vmul.f32 %v511, %v515
    %v517 = vpack.c.bf16 %v516, %v516
    %518 = vrot.lane.b32.xlu0 %v137, 48
    %v519 = vpop.permute.xlu0 %518
    %v521 = vsel %vm141, %v517, 0
    %v524 = vsel %vm205, %v519, 0
    %526 = vmatprep.subr.bf16.mxu0 0
    %527 = vmatpush1.bf16.msra.mxu0 %v524
    %528 = vmatprep.subr.bf16.mxu0 0
    %529 = vmatpush1.bf16.msra.mxu0 0
    %530 = vmatprep.subr.bf16.mxu0 0
    %531 = vmatpush1.bf16.msra.mxu0 0
    %532 = vmatprep.subr.bf16.mxu0 0
    %533 = vmatpush1.bf16.msra.mxu0 0
    %534 = vmatprep.subr.bf16.mxu0 0
    %535 = vmatpush1.bf16.msra.mxu0 0
    %536 = vmatprep.subr.bf16.mxu0 0
    %537 = vmatpush1.bf16.msra.mxu0 0
    %538 = vmatprep.subr.bf16.mxu0 0
    %539 = vmatpush1.bf16.msra.mxu0 0
    %540 = vmatprep.subr.bf16.mxu0 0
    %541 = vmatpush1.bf16.msra.mxu0 0
    %542 = vmatprep.subr.bf16.mxu0 0
    %543 = vmatpush1.bf16.msra.mxu0 0
    %544 = vmatprep.subr.bf16.mxu0 0
    %545 = vmatpush1.bf16.msra.mxu0 0
    %546 = vmatprep.subr.bf16.mxu0 0
    %547 = vmatpush1.bf16.msra.mxu0 0
    %548 = vmatprep.subr.bf16.mxu0 0
    %549 = vmatpush1.bf16.msra.mxu0 0
    %550 = vmatprep.subr.bf16.mxu0 0
    %551 = vmatpush1.bf16.msra.mxu0 0
    %552 = vmatprep.subr.bf16.mxu0 0
    %553 = vmatpush1.bf16.msra.mxu0 0
    %554 = vmatprep.subr.bf16.mxu0 0
    %555 = vmatpush1.bf16.msra.mxu0 0
    %556 = vmatprep.subr.bf16.mxu0 0
    %557 = vmatpush1.bf16.msra.mxu0 0
    %558 = vmatprep.mubr.bf16.mxu0 0
    %559 = vmatmul.mubr.bf16.gmra.mrb[0].mxu0 %v521
    %v560 = vpop.f32.mrb[0].mxu0
    %v561 = vadd.f32 0.0, %v560
    %v562 = vpop.f32.mrb[0].mxu0
    %v563 = vpop.f32.mrb[0].mxu0
    %v564 = vpop.f32.mrb[0].mxu0
    %565 = vdwg.mxu0
    %v566 = vpack.c.bf16 %v561, %v561
    %v567 = vld [vmem:[%s3 + $0x8] sm:$0xf]
    %v569 = vsel %vm141, %v566, 0
    %v572 = vsel %vm205, %v567, 0
    %574 = vmatprep.subr.bf16.mxu0 0
    %575 = vmatpush1.bf16.msra.mxu0 %v572
    %576 = vmatprep.subr.bf16.mxu0 0
    %577 = vmatpush1.bf16.msra.mxu0 0
    %578 = vmatprep.subr.bf16.mxu0 0
    %579 = vmatpush1.bf16.msra.mxu0 0
    %580 = vmatprep.subr.bf16.mxu0 0
    %581 = vmatpush1.bf16.msra.mxu0 0
    %582 = vmatprep.subr.bf16.mxu0 0
    %583 = vmatpush1.bf16.msra.mxu0 0
    %584 = vmatprep.subr.bf16.mxu0 0
    %585 = vmatpush1.bf16.msra.mxu0 0
    %586 = vmatprep.subr.bf16.mxu0 0
    %587 = vmatpush1.bf16.msra.mxu0 0
    %588 = vmatprep.subr.bf16.mxu0 0
    %589 = vmatpush1.bf16.msra.mxu0 0
    %590 = vmatprep.subr.bf16.mxu0 0
    %591 = vmatpush1.bf16.msra.mxu0 0
    %592 = vmatprep.subr.bf16.mxu0 0
    %593 = vmatpush1.bf16.msra.mxu0 0
    %594 = vmatprep.subr.bf16.mxu0 0
    %595 = vmatpush1.bf16.msra.mxu0 0
    %596 = vmatprep.subr.bf16.mxu0 0
    %597 = vmatpush1.bf16.msra.mxu0 0
    %598 = vmatprep.subr.bf16.mxu0 0
    %599 = vmatpush1.bf16.msra.mxu0 0
    %600 = vmatprep.subr.bf16.mxu0 0
    %601 = vmatpush1.bf16.msra.mxu0 0
    %602 = vmatprep.subr.bf16.mxu0 0
    %603 = vmatpush1.bf16.msra.mxu0 0
    %604 = vmatprep.subr.bf16.mxu0 0
    %605 = vmatpush1.bf16.msra.mxu0 0
    %606 = vmatprep.mubr.bf16.mxu0 0
    %607 = vmatmul.mubr.bf16.gmra.mrb[0].mxu0 %v569
    %v608 = vpop.f32.mrb[0].mxu0
    %v609 = vadd.f32 0.0, %v608
    %v610 = vpop.f32.mrb[0].mxu0
    %v611 = vpop.f32.mrb[0].mxu0
    %v612 = vpop.f32.mrb[0].mxu0
    %613 = vdwg.mxu0
    %v614 = vadd.f32 %v451, %v609
    %615 = vrot.lane.b32.xlu0 %v136, 104
    %v616 = vpop.permute.xlu0 %615
    %617 = vrot.lane.b32.xlu0 %v137, 72
    %v618 = vpop.permute.xlu0 %617
    %v620 = vsel %vm141, %v616, 0
    %v623 = vsel %vm141, %v618, 0
    %625 = vmatprep.subr.bf16.mxu0 0
    %626 = vmatpush1.bf16.xpose.msra.mxu0 %v623
    %627 = vmatprep.subr.bf16.mxu0 0
    %628 = vmatpush1.bf16.xpose.msra.mxu0 0
    %629 = vmatprep.subr.bf16.mxu0 0
    %630 = vmatpush1.bf16.xpose.msra.mxu0 0
    %631 = vmatprep.subr.bf16.mxu0 0
    %632 = vmatpush1.bf16.xpose.msra.mxu0 0
    %633 = vmatprep.subr.bf16.mxu0 0
    %634 = vmatpush1.bf16.xpose.msra.mxu0 0
    %635 = vmatprep.subr.bf16.mxu0 0
    %636 = vmatpush1.bf16.xpose.msra.mxu0 0
    %637 = vmatprep.subr.bf16.mxu0 0
    %638 = vmatpush1.bf16.xpose.msra.mxu0 0
    %639 = vmatprep.subr.bf16.mxu0 0
    %640 = vmatpush1.bf16.xpose.msra.mxu0 0
    %641 = vmatprep.subr.bf16.mxu0 0
    %642 = vmatpush1.bf16.xpose.msra.mxu0 0
    %643 = vmatprep.subr.bf16.mxu0 0
    %644 = vmatpush1.bf16.xpose.msra.mxu0 0
    %645 = vmatprep.subr.bf16.mxu0 0
    %646 = vmatpush1.bf16.xpose.msra.mxu0 0
    %647 = vmatprep.subr.bf16.mxu0 0
    %648 = vmatpush1.bf16.xpose.msra.mxu0 0
    %649 = vmatprep.subr.bf16.mxu0 0
    %650 = vmatpush1.bf16.xpose.msra.mxu0 0
    %651 = vmatprep.subr.bf16.mxu0 0
    %652 = vmatpush1.bf16.xpose.msra.mxu0 0
    %653 = vmatprep.subr.bf16.mxu0 0
    %654 = vmatpush1.bf16.xpose.msra.mxu0 0
    %655 = vmatprep.subr.bf16.mxu0 0
    %656 = vmatpush1.bf16.xpose.msra.mxu0 0
    %657 = vmatprep.mubr.bf16.mxu0 0
    %658 = vmatmul.mubr.bf16.gmra.mrb[0].mxu0 %v620
    %v659 = vpop.f32.mrb[0].mxu0
    %v660 = vadd.f32 0.0, %v659
    %v661 = vpop.f32.mrb[0].mxu0
    %v662 = vpop.f32.mrb[0].mxu0
    %v663 = vpop.f32.mrb[0].mxu0
    %664 = vdwg.mxu0
    %v665 = vsel %vm141, %v660, -inf
    %666 = vmax.xlane.f32.xlu0 %v665
    %v667 = vpop.xlane.xlu0 %666
    %v668 = vsub.f32 %v660, %v667
    %v669 = vmul.f32 %v668, 1.442695
    %v670 = vpow.pop %v669
    %v671 = vsel %vm141, %v670, 0.0
    %672 = vadd.xlane.f32.xlu0 %v671
    %v673 = vpop.xlane.xlu0 %672
    %v674 = vrcp.pop %v673
    %v675 = vmul.f32 %v670, %v674
    %v676 = vpack.c.bf16 %v675, %v675
    %677 = vrot.lane.b32.xlu0 %v137, 40
    %v678 = vpop.permute.xlu0 %677
    %v680 = vsel %vm141, %v676, 0
    %v683 = vsel %vm205, %v678, 0
    %685 = vmatprep.subr.bf16.mxu0 0
    %686 = vmatpush1.bf16.msra.mxu0 %v683
    %687 = vmatprep.subr.bf16.mxu0 0
    %688 = vmatpush1.bf16.msra.mxu0 0
    %689 = vmatprep.subr.bf16.mxu0 0
    %690 = vmatpush1.bf16.msra.mxu0 0
    %691 = vmatprep.subr.bf16.mxu0 0
    %692 = vmatpush1.bf16.msra.mxu0 0
    %693 = vmatprep.subr.bf16.mxu0 0
    %694 = vmatpush1.bf16.msra.mxu0 0
    %695 = vmatprep.subr.bf16.mxu0 0
    %696 = vmatpush1.bf16.msra.mxu0 0
    %697 = vmatprep.subr.bf16.mxu0 0
    %698 = vmatpush1.bf16.msra.mxu0 0
    %699 = vmatprep.subr.bf16.mxu0 0
    %700 = vmatpush1.bf16.msra.mxu0 0
    %701 = vmatprep.subr.bf16.mxu0 0
    %702 = vmatpush1.bf16.msra.mxu0 0
    %703 = vmatprep.subr.bf16.mxu0 0
    %704 = vmatpush1.bf16.msra.mxu0 0
    %705 = vmatprep.subr.bf16.mxu0 0
    %706 = vmatpush1.bf16.msra.mxu0 0
    %707 = vmatprep.subr.bf16.mxu0 0
    %708 = vmatpush1.bf16.msra.mxu0 0
    %709 = vmatprep.subr.bf16.mxu0 0
    %710 = vmatpush1.bf16.msra.mxu0 0
    %711 = vmatprep.subr.bf16.mxu0 0
    %712 = vmatpush1.bf16.msra.mxu0 0
    %713 = vmatprep.subr.bf16.mxu0 0
    %714 = vmatpush1.bf16.msra.mxu0 0
    %715 = vmatprep.subr.bf16.mxu0 0
    %716 = vmatpush1.bf16.msra.mxu0 0
    %717 = vmatprep.mubr.bf16.mxu0 0
    %718 = vmatmul.mubr.bf16.gmra.mrb[0].mxu0 %v680
    %v719 = vpop.f32.mrb[0].mxu0
    %v720 = vadd.f32 0.0, %v719
    %v721 = vpop.f32.mrb[0].mxu0
    %v722 = vpop.f32.mrb[0].mxu0
    %v723 = vpop.f32.mrb[0].mxu0
    %724 = vdwg.mxu0
    %v725 = vpack.c.bf16 %v720, %v720
    %v726 = vld [vmem:[%s3 + $0xc] sm:$0xf]
    %v728 = vsel %vm141, %v725, 0
    %v731 = vsel %vm205, %v726, 0
    %733 = vmatprep.subr.bf16.mxu0 0
    %734 = vmatpush1.bf16.msra.mxu0 %v731
    %735 = vmatprep.subr.bf16.mxu0 0
    %736 = vmatpush1.bf16.msra.mxu0 0
    %737 = vmatprep.subr.bf16.mxu0 0
    %738 = vmatpush1.bf16.msra.mxu0 0
    %739 = vmatprep.subr.bf16.mxu0 0
    %740 = vmatpush1.bf16.msra.mxu0 0
    %741 = vmatprep.subr.bf16.mxu0 0
    %742 = vmatpush1.bf16.msra.mxu0 0
    %743 = vmatprep.subr.bf16.mxu0 0
    %744 = vmatpush1.bf16.msra.mxu0 0
    %745 = vmatprep.subr.bf16.mxu0 0
    %746 = vmatpush1.bf16.msra.mxu0 0
    %747 = vmatprep.subr.bf16.mxu0 0
    %748 = vmatpush1.bf16.msra.mxu0 0
    %749 = vmatprep.subr.bf16.mxu0 0
    %750 = vmatpush1.bf16.msra.mxu0 0
    %751 = vmatprep.subr.bf16.mxu0 0
    %752 = vmatpush1.bf16.msra.mxu0 0
    %753 = vmatprep.subr.bf16.mxu0 0
    %754 = vmatpush1.bf16.msra.mxu0 0
    %755 = vmatprep.subr.bf16.mxu0 0
    %756 = vmatpush1.bf16.msra.mxu0 0
    %757 = vmatprep.subr.bf16.mxu0 0
    %758 = vmatpush1.bf16.msra.mxu0 0
    %759 = vmatprep.subr.bf16.mxu0 0
    %760 = vmatpush1.bf16.msra.mxu0 0
    %761 = vmatprep.subr.bf16.mxu0 0
    %762 = vmatpush1.bf16.msra.mxu0 0
    %763 = vmatprep.subr.bf16.mxu0 0
    %764 = vmatpush1.bf16.msra.mxu0 0
    %765 = vmatprep.mubr.bf16.mxu0 0
    %766 = vmatmul.mubr.bf16.gmra.mrb[0].mxu0 %v728
    %v767 = vpop.f32.mrb[0].mxu0
    %v768 = vadd.f32 0.0, %v767
    %v769 = vpop.f32.mrb[0].mxu0
    %v770 = vpop.f32.mrb[0].mxu0
    %v771 = vpop.f32.mrb[0].mxu0
    %772 = vdwg.mxu0
    %v773 = vadd.f32 %v614, %v768
    %774 = vst.msk [vmem:[#allocation3] sm:$0xff] %vm86, %v773
    %v775 = vld [vmem:[#allocation2 + $0x8] sm:$0xff]
    %v776 = vmul.f32 %v775, 0.35355338
    %v777 = vpack.c.bf16 %v776, %v776
    %v778 = vpack.c.bf16 %v775, %v775
    %780 = vrot.lane.b32.xlu0 %v778, 96
    %v781 = vpop.permute.xlu0 %780
    %v783 = vsel %vm141, %v777, 0
    %v786 = vsel %vm141, %v781, 0
    %788 = vmatprep.subr.bf16.mxu0 0
    %789 = vmatpush1.bf16.xpose.msra.mxu0 %v786
    %790 = vmatprep.subr.bf16.mxu0 0
    %791 = vmatpush1.bf16.xpose.msra.mxu0 0
    %792 = vmatprep.subr.bf16.mxu0 0
    %793 = vmatpush1.bf16.xpose.msra.mxu0 0
    %794 = vmatprep.subr.bf16.mxu0 0
    %795 = vmatpush1.bf16.xpose.msra.mxu0 0
    %796 = vmatprep.subr.bf16.mxu0 0
    %797 = vmatpush1.bf16.xpose.msra.mxu0 0
    %798 = vmatprep.subr.bf16.mxu0 0
    %799 = vmatpush1.bf16.xpose.msra.mxu0 0
    %800 = vmatprep.subr.bf16.mxu0 0
    %801 = vmatpush1.bf16.xpose.msra.mxu0 0
    %802 = vmatprep.subr.bf16.mxu0 0
    %803 = vmatpush1.bf16.xpose.msra.mxu0 0
    %804 = vmatprep.subr.bf16.mxu0 0
    %805 = vmatpush1.bf16.xpose.msra.mxu0 0
    %806 = vmatprep.subr.bf16.mxu0 0
    %807 = vmatpush1.bf16.xpose.msra.mxu0 0
    %808 = vmatprep.subr.bf16.mxu0 0
    %809 = vmatpush1.bf16.xpose.msra.mxu0 0
    %810 = vmatprep.subr.bf16.mxu0 0
    %811 = vmatpush1.bf16.xpose.msra.mxu0 0
    %812 = vmatprep.subr.bf16.mxu0 0
    %813 = vmatpush1.bf16.xpose.msra.mxu0 0
    %814 = vmatprep.subr.bf16.mxu0 0
    %815 = vmatpush1.bf16.xpose.msra.mxu0 0
    %816 = vmatprep.subr.bf16.mxu0 0
    %817 = vmatpush1.bf16.xpose.msra.mxu0 0
    %818 = vmatprep.subr.bf16.mxu0 0
    %819 = vmatpush1.bf16.xpose.msra.mxu0 0
    %820 = vmatprep.mubr.bf16.mxu0 0
    %821 = vmatmul.mubr.bf16.gmra.mrb[0].mxu0 %v783
    %v822 = vpop.f32.mrb[0].mxu0
    %v823 = vadd.f32 0.0, %v822
    %v824 = vpop.f32.mrb[0].mxu0
    %v825 = vpop.f32.mrb[0].mxu0
    %v826 = vpop.f32.mrb[0].mxu0
    %827 = vdwg.mxu0
    %v828 = vsel %vm141, %v823, -inf
    %829 = vmax.xlane.f32.xlu0 %v828
    %v830 = vpop.xlane.xlu0 %829
    %v831 = vsub.f32 %v823, %v830
    %v832 = vmul.f32 %v831, 1.442695
    %v833 = vpow.pop %v832
    %v834 = vsel %vm141, %v833, 0.0
    %835 = vadd.xlane.f32.xlu0 %v834
    %v836 = vpop.xlane.xlu0 %835
    %v837 = vrcp.pop %v836
    %v838 = vmul.f32 %v833, %v837
    %v839 = vpack.c.bf16 %v838, %v838
    %840 = vrot.lane.b32.xlu0 %v778, 64
    %v841 = vpop.permute.xlu0 %840
    %v843 = vsel %vm141, %v839, 0
    %v846 = vsel %vm205, %v841, 0
    %848 = vmatprep.subr.bf16.mxu0 0
    %849 = vmatpush1.bf16.msra.mxu0 %v846
    %850 = vmatprep.subr.bf16.mxu0 0
    %851 = vmatpush1.bf16.msra.mxu0 0
    %852 = vmatprep.subr.bf16.mxu0 0
    %853 = vmatpush1.bf16.msra.mxu0 0
    %854 = vmatprep.subr.bf16.mxu0 0
    %855 = vmatpush1.bf16.msra.mxu0 0
    %856 = vmatprep.subr.bf16.mxu0 0
    %857 = vmatpush1.bf16.msra.mxu0 0
    %858 = vmatprep.subr.bf16.mxu0 0
    %859 = vmatpush1.bf16.msra.mxu0 0
    %860 = vmatprep.subr.bf16.mxu0 0
    %861 = vmatpush1.bf16.msra.mxu0 0
    %862 = vmatprep.subr.bf16.mxu0 0
    %863 = vmatpush1.bf16.msra.mxu0 0
    %864 = vmatprep.subr.bf16.mxu0 0
    %865 = vmatpush1.bf16.msra.mxu0 0
    %866 = vmatprep.subr.bf16.mxu0 0
    %867 = vmatpush1.bf16.msra.mxu0 0
    %868 = vmatprep.subr.bf16.mxu0 0
    %869 = vmatpush1.bf16.msra.mxu0 0
    %870 = vmatprep.subr.bf16.mxu0 0
    %871 = vmatpush1.bf16.msra.mxu0 0
    %872 = vmatprep.subr.bf16.mxu0 0
    %873 = vmatpush1.bf16.msra.mxu0 0
    %874 = vmatprep.subr.bf16.mxu0 0
    %875 = vmatpush1.bf16.msra.mxu0 0
    %876 = vmatprep.subr.bf16.mxu0 0
    %877 = vmatpush1.bf16.msra.mxu0 0
    %878 = vmatprep.subr.bf16.mxu0 0
    %879 = vmatpush1.bf16.msra.mxu0 0
    %880 = vmatprep.mubr.bf16.mxu0 0
    %881 = vmatmul.mubr.bf16.gmra.mrb[0].mxu0 %v843
    %v882 = vpop.f32.mrb[0].mxu0
    %v883 = vadd.f32 0.0, %v882
    %v884 = vpop.f32.mrb[0].mxu0
    %v885 = vpop.f32.mrb[0].mxu0
    %v886 = vpop.f32.mrb[0].mxu0
    %887 = vdwg.mxu0
    %v888 = vpack.c.bf16 %v883, %v883
    %v889 = vld [vmem:[%s3] sm:$0xf]
    %891 = vrot.lane.b32.xlu0 %v777, 120
    %v892 = vpop.permute.xlu0 %891
    %893 = vrot.lane.b32.xlu0 %v778, 88
    %v894 = vpop.permute.xlu0 %893
    %v896 = vsel %vm141, %v892, 0
    %v899 = vsel %vm141, %v894, 0
    %901 = vmatprep.subr.bf16.mxu0 0
    %902 = vmatpush1.bf16.xpose.msra.mxu0 %v899
    %903 = vmatprep.subr.bf16.mxu0 0
    %904 = vmatpush1.bf16.xpose.msra.mxu0 0
    %905 = vmatprep.subr.bf16.mxu0 0
    %906 = vmatpush1.bf16.xpose.msra.mxu0 0
    %907 = vmatprep.subr.bf16.mxu0 0
    %908 = vmatpush1.bf16.xpose.msra.mxu0 0
    %909 = vmatprep.subr.bf16.mxu0 0
    %910 = vmatpush1.bf16.xpose.msra.mxu0 0
    %911 = vmatprep.subr.bf16.mxu0 0
    %912 = vmatpush1.bf16.xpose.msra.mxu0 0
    %913 = vmatprep.subr.bf16.mxu0 0
    %914 = vmatpush1.bf16.xpose.msra.mxu0 0
    %915 = vmatprep.subr.bf16.mxu0 0
    %916 = vmatpush1.bf16.xpose.msra.mxu0 0
    %917 = vmatprep.subr.bf16.mxu0 0
    %918 = vmatpush1.bf16.xpose.msra.mxu0 0
    %919 = vmatprep.subr.bf16.mxu0 0
    %920 = vmatpush1.bf16.xpose.msra.mxu0 0
    %921 = vmatprep.subr.bf16.mxu0 0
    %922 = vmatpush1.bf16.xpose.msra.mxu0 0
    %923 = vmatprep.subr.bf16.mxu0 0
    %924 = vmatpush1.bf16.xpose.msra.mxu0 0
    %925 = vmatprep.subr.bf16.mxu0 0
    %926 = vmatpush1.bf16.xpose.msra.mxu0 0
    %927 = vmatprep.subr.bf16.mxu0 0
    %928 = vmatpush1.bf16.xpose.msra.mxu0 0
    %929 = vmatprep.subr.bf16.mxu0 0
    %930 = vmatpush1.bf16.xpose.msra.mxu0 0
    %931 = vmatprep.subr.bf16.mxu0 0
    %932 = vmatpush1.bf16.xpose.msra.mxu0 0
    %933 = vmatprep.mubr.bf16.mxu0 0
    %934 = vmatmul.mubr.bf16.gmra.mrb[0].mxu0 %v896
    %v935 = vpop.f32.mrb[0].mxu0
    %v936 = vadd.f32 0.0, %v935
    %v937 = vpop.f32.mrb[0].mxu0
    %v938 = vpop.f32.mrb[0].mxu0
    %v939 = vpop.f32.mrb[0].mxu0
    %940 = vdwg.mxu0
    %v941 = vsel %vm141, %v936, -inf
    %942 = vmax.xlane.f32.xlu0 %v941
    %v943 = vpop.xlane.xlu0 %942
    %v944 = vsub.f32 %v936, %v943
    %v945 = vmul.f32 %v944, 1.442695
    %v946 = vpow.pop %v945
    %v947 = vsel %vm141, %v946, 0.0
    %948 = vadd.xlane.f32.xlu0 %v947
    %v949 = vpop.xlane.xlu0 %948
    %v950 = vrcp.pop %v949
    %v951 = vmul.f32 %v946, %v950
    %v952 = vpack.c.bf16 %v951, %v951
    %953 = vrot.lane.b32.xlu0 %v778, 56
    %v954 = vpop.permute.xlu0 %953
    %v956 = vsel %vm141, %v952, 0
    %v959 = vsel %vm205, %v954, 0
    %961 = vmatprep.subr.bf16.mxu0 0
    %962 = vmatpush1.bf16.msra.mxu0 %v959
    %963 = vmatprep.subr.bf16.mxu0 0
    %964 = vmatpush1.bf16.msra.mxu0 0
    %965 = vmatprep.subr.bf16.mxu0 0
    %966 = vmatpush1.bf16.msra.mxu0 0
    %967 = vmatprep.subr.bf16.mxu0 0
    %968 = vmatpush1.bf16.msra.mxu0 0
    %969 = vmatprep.subr.bf16.mxu0 0
    %970 = vmatpush1.bf16.msra.mxu0 0
    %971 = vmatprep.subr.bf16.mxu0 0
    %972 = vmatpush1.bf16.msra.mxu0 0
    %973 = vmatprep.subr.bf16.mxu0 0
    %974 = vmatpush1.bf16.msra.mxu0 0
    %975 = vmatprep.subr.bf16.mxu0 0
    %976 = vmatpush1.bf16.msra.mxu0 0
    %977 = vmatprep.subr.bf16.mxu0 0
    %978 = vmatpush1.bf16.msra.mxu0 0
    %979 = vmatprep.subr.bf16.mxu0 0
    %980 = vmatpush1.bf16.msra.mxu0 0
    %981 = vmatprep.subr.bf16.mxu0 0
    %982 = vmatpush1.bf16.msra.mxu0 0
    %983 = vmatprep.subr.bf16.mxu0 0
    %984 = vmatpush1.bf16.msra.mxu0 0
    %985 = vmatprep.subr.bf16.mxu0 0
    %986 = vmatpush1.bf16.msra.mxu0 0
    %987 = vmatprep.subr.bf16.mxu0 0
    %988 = vmatpush1.bf16.msra.mxu0 0
    %989 = vmatprep.subr.bf16.mxu0 0
    %990 = vmatpush1.bf16.msra.mxu0 0
    %991 = vmatprep.subr.bf16.mxu0 0
    %992 = vmatpush1.bf16.msra.mxu0 0
    %993 = vmatprep.mubr.bf16.mxu0 0
    %994 = vmatmul.mubr.bf16.gmra.mrb[0].mxu0 %v956
    %v995 = vpop.f32.mrb[0].mxu0
    %v996 = vadd.f32 0.0, %v995
    %v997 = vpop.f32.mrb[0].mxu0
    %v998 = vpop.f32.mrb[0].mxu0
    %v999 = vpop.f32.mrb[0].mxu0
    %1000 = vdwg.mxu0
    %v1001 = vpack.c.bf16 %v996, %v996
    %v1002 = vld [vmem:[%s3 + $0x4] sm:$0xf]
    %v1004 = vsel %vm141, %v1001, 0
    %v1007 = vsel %vm205, %v1002, 0
    %1009 = vmatprep.subr.bf16.mxu0 0
    %1010 = vmatpush1.bf16.msra.mxu0 %v1007
    %1011 = vmatprep.subr.bf16.mxu0 0
    %1012 = vmatpush1.bf16.msra.mxu0 0
    %1013 = vmatprep.subr.bf16.mxu0 0
    %1014 = vmatpush1.bf16.msra.mxu0 0
    %1015 = vmatprep.subr.bf16.mxu0 0
    %1016 = vmatpush1.bf16.msra.mxu0 0
    %1017 = vmatprep.subr.bf16.mxu0 0
    %1018 = vmatpush1.bf16.msra.mxu0 0
    %1019 = vmatprep.subr.bf16.mxu0 0
    %1020 = vmatpush1.bf16.msra.mxu0 0
    %1021 = vmatprep.subr.bf16.mxu0 0
    %1022 = vmatpush1.bf16.msra.mxu0 0
    %1023 = vmatprep.subr.bf16.mxu0 0
    %1024 = vmatpush1.bf16.msra.mxu0 0
    %1025 = vmatprep.subr.bf16.mxu0 0
    %1026 = vmatpush1.bf16.msra.mxu0 0
    %1027 = vmatprep.subr.bf16.mxu0 0
    %1028 = vmatpush1.bf16.msra.mxu0 0
    %1029 = vmatprep.subr.bf16.mxu0 0
    %1030 = vmatpush1.bf16.msra.mxu0 0
    %1031 = vmatprep.subr.bf16.mxu0 0
    %1032 = vmatpush1.bf16.msra.mxu0 0
    %1033 = vmatprep.subr.bf16.mxu0 0
    %1034 = vmatpush1.bf16.msra.mxu0 0
    %1035 = vmatprep.subr.bf16.mxu0 0
    %1036 = vmatpush1.bf16.msra.mxu0 0
    %1037 = vmatprep.subr.bf16.mxu0 0
    %1038 = vmatpush1.bf16.msra.mxu0 0
    %1039 = vmatprep.subr.bf16.mxu0 0
    %1040 = vmatpush1.bf16.msra.mxu0 0
    %1041 = vmatprep.mubr.bf16.mxu0 0
    %1042 = vmatmul.mubr.bf16.gmra.mrb[0].mxu0 %v1004
    %v1043 = vpop.f32.mrb[0].mxu0
    %v1044 = vadd.f32 0.0, %v1043
    %v1045 = vpop.f32.mrb[0].mxu0
    %v1046 = vpop.f32.mrb[0].mxu0
    %v1047 = vpop.f32.mrb[0].mxu0
    %1048 = vdwg.mxu0
    %v1050 = vsel %vm141, %v888, 0
    %v1053 = vsel %vm205, %v889, 0
    %1055 = vmatprep.subr.bf16.mxu0 0
    %1056 = vmatpush1.bf16.msra.mxu0 %v1053
    %1057 = vmatprep.subr.bf16.mxu0 0
    %1058 = vmatpush1.bf16.msra.mxu0 0
    %1059 = vmatprep.subr.bf16.mxu0 0
    %1060 = vmatpush1.bf16.msra.mxu0 0
    %1061 = vmatprep.subr.bf16.mxu0 0
    %1062 = vmatpush1.bf16.msra.mxu0 0
    %1063 = vmatprep.subr.bf16.mxu0 0
    %1064 = vmatpush1.bf16.msra.mxu0 0
    %1065 = vmatprep.subr.bf16.mxu0 0
    %1066 = vmatpush1.bf16.msra.mxu0 0
    %1067 = vmatprep.subr.bf16.mxu0 0
    %1068 = vmatpush1.bf16.msra.mxu0 0
    %1069 = vmatprep.subr.bf16.mxu0 0
    %1070 = vmatpush1.bf16.msra.mxu0 0
    %1071 = vmatprep.subr.bf16.mxu0 0
    %1072 = vmatpush1.bf16.msra.mxu0 0
    %1073 = vmatprep.subr.bf16.mxu0 0
    %1074 = vmatpush1.bf16.msra.mxu0 0
    %1075 = vmatprep.subr.bf16.mxu0 0
    %1076 = vmatpush1.bf16.msra.mxu0 0
    %1077 = vmatprep.subr.bf16.mxu0 0
    %1078 = vmatpush1.bf16.msra.mxu0 0
    %1079 = vmatprep.subr.bf16.mxu0 0
    %1080 = vmatpush1.bf16.msra.mxu0 0
    %1081 = vmatprep.subr.bf16.mxu0 0
    %1082 = vmatpush1.bf16.msra.mxu0 0
    %1083 = vmatprep.subr.bf16.mxu0 0
    %1084 = vmatpush1.bf16.msra.mxu0 0
    %1085 = vmatprep.subr.bf16.mxu0 0
    %1086 = vmatpush1.bf16.msra.mxu0 0
    %1087 = vmatprep.mubr.bf16.mxu0 0
    %1088 = vmatmul.mubr.bf16.gmra.mrb[0].mxu0 %v1050
    %v1089 = vpop.f32.mrb[0].mxu0
    %v1090 = vadd.f32 %v1044, %v1089
    %v1091 = vpop.f32.mrb[0].mxu0
    %v1092 = vpop.f32.mrb[0].mxu0
    %v1093 = vpop.f32.mrb[0].mxu0
    %1094 = vdwg.mxu0
    %1095 = vrot.lane.b32.xlu0 %v777, 112
    %v1096 = vpop.permute.xlu0 %1095
    %1097 = vrot.lane.b32.xlu0 %v778, 80
    %v1098 = vpop.permute.xlu0 %1097
    %v1100 = vsel %vm141, %v1096, 0
    %v1103 = vsel %vm141, %v1098, 0
    %1105 = vmatprep.subr.bf16.mxu0 0
    %1106 = vmatpush1.bf16.xpose.msra.mxu0 %v1103
    %1107 = vmatprep.subr.bf16.mxu0 0
    %1108 = vmatpush1.bf16.xpose.msra.mxu0 0
    %1109 = vmatprep.subr.bf16.mxu0 0
    %1110 = vmatpush1.bf16.xpose.msra.mxu0 0
    %1111 = vmatprep.subr.bf16.mxu0 0
    %1112 = vmatpush1.bf16.xpose.msra.mxu0 0
    %1113 = vmatprep.subr.bf16.mxu0 0
    %1114 = vmatpush1.bf16.xpose.msra.mxu0 0
    %1115 = vmatprep.subr.bf16.mxu0 0
    %1116 = vmatpush1.bf16.xpose.msra.mxu0 0
    %1117 = vmatprep.subr.bf16.mxu0 0
    %1118 = vmatpush1.bf16.xpose.msra.mxu0 0
    %1119 = vmatprep.subr.bf16.mxu0 0
    %1120 = vmatpush1.bf16.xpose.msra.mxu0 0
    %1121 = vmatprep.subr.bf16.mxu0 0
    %1122 = vmatpush1.bf16.xpose.msra.mxu0 0
    %1123 = vmatprep.subr.bf16.mxu0 0
    %1124 = vmatpush1.bf16.xpose.msra.mxu0 0
    %1125 = vmatprep.subr.bf16.mxu0 0
    %1126 = vmatpush1.bf16.xpose.msra.mxu0 0
    %1127 = vmatprep.subr.bf16.mxu0 0
    %1128 = vmatpush1.bf16.xpose.msra.mxu0 0
    %1129 = vmatprep.subr.bf16.mxu0 0
    %1130 = vmatpush1.bf16.xpose.msra.mxu0 0
    %1131 = vmatprep.subr.bf16.mxu0 0
    %1132 = vmatpush1.bf16.xpose.msra.mxu0 0
    %1133 = vmatprep.subr.bf16.mxu0 0
    %1134 = vmatpush1.bf16.xpose.msra.mxu0 0
    %1135 = vmatprep.subr.bf16.mxu0 0
    %1136 = vmatpush1.bf16.xpose.msra.mxu0 0
    %1137 = vmatprep.mubr.bf16.mxu0 0
    %1138 = vmatmul.mubr.bf16.gmra.mrb[0].mxu0 %v1100
    %v1139 = vpop.f32.mrb[0].mxu0
    %v1140 = vadd.f32 0.0, %v1139
    %v1141 = vpop.f32.mrb[0].mxu0
    %v1142 = vpop.f32.mrb[0].mxu0
    %v1143 = vpop.f32.mrb[0].mxu0
    %1144 = vdwg.mxu0
    %v1145 = vsel %vm141, %v1140, -inf
    %1146 = vmax.xlane.f32.xlu0 %v1145
    %v1147 = vpop.xlane.xlu0 %1146
    %v1148 = vsub.f32 %v1140, %v1147
    %v1149 = vmul.f32 %v1148, 1.442695
    %v1150 = vpow.pop %v1149
    %v1151 = vsel %vm141, %v1150, 0.0
    %1152 = vadd.xlane.f32.xlu0 %v1151
    %v1153 = vpop.xlane.xlu0 %1152
    %v1154 = vrcp.pop %v1153
    %v1155 = vmul.f32 %v1150, %v1154
    %v1156 = vpack.c.bf16 %v1155, %v1155
    %1157 = vrot.lane.b32.xlu0 %v778, 48
    %v1158 = vpop.permute.xlu0 %1157
    %v1160 = vsel %vm141, %v1156, 0
    %v1163 = vsel %vm205, %v1158, 0
    %1165 = vmatprep.subr.bf16.mxu0 0
    %1166 = vmatpush1.bf16.msra.mxu0 %v1163
    %1167 = vmatprep.subr.bf16.mxu0 0
    %1168 = vmatpush1.bf16.msra.mxu0 0
    %1169 = vmatprep.subr.bf16.mxu0 0
    %1170 = vmatpush1.bf16.msra.mxu0 0
    %1171 = vmatprep.subr.bf16.mxu0 0
    %1172 = vmatpush1.bf16.msra.mxu0 0
    %1173 = vmatprep.subr.bf16.mxu0 0
    %1174 = vmatpush1.bf16.msra.mxu0 0
    %1175 = vmatprep.subr.bf16.mxu0 0
    %1176 = vmatpush1.bf16.msra.mxu0 0
    %1177 = vmatprep.subr.bf16.mxu0 0
    %1178 = vmatpush1.bf16.msra.mxu0 0
    %1179 = vmatprep.subr.bf16.mxu0 0
    %1180 = vmatpush1.bf16.msra.mxu0 0
    %1181 = vmatprep.subr.bf16.mxu0 0
    %1182 = vmatpush1.bf16.msra.mxu0 0
    %1183 = vmatprep.subr.bf16.mxu0 0
    %1184 = vmatpush1.bf16.msra.mxu0 0
    %1185 = vmatprep.subr.bf16.mxu0 0
    %1186 = vmatpush1.bf16.msra.mxu0 0
    %1187 = vmatprep.subr.bf16.mxu0 0
    %1188 = vmatpush1.bf16.msra.mxu0 0
    %1189 = vmatprep.subr.bf16.mxu0 0
    %1190 = vmatpush1.bf16.msra.mxu0 0
    %1191 = vmatprep.subr.bf16.mxu0 0
    %1192 = vmatpush1.bf16.msra.mxu0 0
    %1193 = vmatprep.subr.bf16.mxu0 0
    %1194 = vmatpush1.bf16.msra.mxu0 0
    %1195 = vmatprep.subr.bf16.mxu0 0
    %1196 = vmatpush1.bf16.msra.mxu0 0
    %1197 = vmatprep.mubr.bf16.mxu0 0
    %1198 = vmatmul.mubr.bf16.gmra.mrb[0].mxu0 %v1160
    %v1199 = vpop.f32.mrb[0].mxu0
    %v1200 = vadd.f32 0.0, %v1199
    %v1201 = vpop.f32.mrb[0].mxu0
    %v1202 = vpop.f32.mrb[0].mxu0
    %v1203 = vpop.f32.mrb[0].mxu0
    %1204 = vdwg.mxu0
    %v1205 = vpack.c.bf16 %v1200, %v1200
    %v1206 = vld [vmem:[%s3 + $0x8] sm:$0xf]
    %v1208 = vsel %vm141, %v1205, 0
    %v1211 = vsel %vm205, %v1206, 0
    %1213 = vmatprep.subr.bf16.mxu0 0
    %1214 = vmatpush1.bf16.msra.mxu0 %v1211
    %1215 = vmatprep.subr.bf16.mxu0 0
    %1216 = vmatpush1.bf16.msra.mxu0 0
    %1217 = vmatprep.subr.bf16.mxu0 0
    %1218 = vmatpush1.bf16.msra.mxu0 0
    %1219 = vmatprep.subr.bf16.mxu0 0
    %1220 = vmatpush1.bf16.msra.mxu0 0
    %1221 = vmatprep.subr.bf16.mxu0 0
    %1222 = vmatpush1.bf16.msra.mxu0 0
    %1223 = vmatprep.subr.bf16.mxu0 0
    %1224 = vmatpush1.bf16.msra.mxu0 0
    %1225 = vmatprep.subr.bf16.mxu0 0
    %1226 = vmatpush1.bf16.msra.mxu0 0
    %1227 = vmatprep.subr.bf16.mxu0 0
    %1228 = vmatpush1.bf16.msra.mxu0 0
    %1229 = vmatprep.subr.bf16.mxu0 0
    %1230 = vmatpush1.bf16.msra.mxu0 0
    %1231 = vmatprep.subr.bf16.mxu0 0
    %1232 = vmatpush1.bf16.msra.mxu0 0
    %1233 = vmatprep.subr.bf16.mxu0 0
    %1234 = vmatpush1.bf16.msra.mxu0 0
    %1235 = vmatprep.subr.bf16.mxu0 0
    %1236 = vmatpush1.bf16.msra.mxu0 0
    %1237 = vmatprep.subr.bf16.mxu0 0
    %1238 = vmatpush1.bf16.msra.mxu0 0
    %1239 = vmatprep.subr.bf16.mxu0 0
    %1240 = vmatpush1.bf16.msra.mxu0 0
    %1241 = vmatprep.subr.bf16.mxu0 0
    %1242 = vmatpush1.bf16.msra.mxu0 0
    %1243 = vmatprep.subr.bf16.mxu0 0
    %1244 = vmatpush1.bf16.msra.mxu0 0
    %1245 = vmatprep.mubr.bf16.mxu0 0
    %1246 = vmatmul.mubr.bf16.gmra.mrb[0].mxu0 %v1208
    %v1247 = vpop.f32.mrb[0].mxu0
    %v1248 = vadd.f32 0.0, %v1247
    %v1249 = vpop.f32.mrb[0].mxu0
    %v1250 = vpop.f32.mrb[0].mxu0
    %v1251 = vpop.f32.mrb[0].mxu0
    %1252 = vdwg.mxu0
    %v1253 = vadd.f32 %v1090, %v1248
    %1254 = vrot.lane.b32.xlu0 %v777, 104
    %v1255 = vpop.permute.xlu0 %1254
    %1256 = vrot.lane.b32.xlu0 %v778, 72
    %v1257 = vpop.permute.xlu0 %1256
    %v1259 = vsel %vm141, %v1255, 0
    %v1262 = vsel %vm141, %v1257, 0
    %1264 = vmatprep.subr.bf16.mxu0 0
    %1265 = vmatpush1.bf16.xpose.msra.mxu0 %v1262
    %1266 = vmatprep.subr.bf16.mxu0 0
    %1267 = vmatpush1.bf16.xpose.msra.mxu0 0
    %1268 = vmatprep.subr.bf16.mxu0 0
    %1269 = vmatpush1.bf16.xpose.msra.mxu0 0
    %1270 = vmatprep.subr.bf16.mxu0 0
    %1271 = vmatpush1.bf16.xpose.msra.mxu0 0
    %1272 = vmatprep.subr.bf16.mxu0 0
    %1273 = vmatpush1.bf16.xpose.msra.mxu0 0
    %1274 = vmatprep.subr.bf16.mxu0 0
    %1275 = vmatpush1.bf16.xpose.msra.mxu0 0
    %1276 = vmatprep.subr.bf16.mxu0 0
    %1277 = vmatpush1.bf16.xpose.msra.mxu0 0
    %1278 = vmatprep.subr.bf16.mxu0 0
    %1279 = vmatpush1.bf16.xpose.msra.mxu0 0
    %1280 = vmatprep.subr.bf16.mxu0 0
    %1281 = vmatpush1.bf16.xpose.msra.mxu0 0
    %1282 = vmatprep.subr.bf16.mxu0 0
    %1283 = vmatpush1.bf16.xpose.msra.mxu0 0
    %1284 = vmatprep.subr.bf16.mxu0 0
    %1285 = vmatpush1.bf16.xpose.msra.mxu0 0
    %1286 = vmatprep.subr.bf16.mxu0 0
    %1287 = vmatpush1.bf16.xpose.msra.mxu0 0
    %1288 = vmatprep.subr.bf16.mxu0 0
    %1289 = vmatpush1.bf16.xpose.msra.mxu0 0
    %1290 = vmatprep.subr.bf16.mxu0 0
    %1291 = vmatpush1.bf16.xpose.msra.mxu0 0
    %1292 = vmatprep.subr.bf16.mxu0 0
    %1293 = vmatpush1.bf16.xpose.msra.mxu0 0
    %1294 = vmatprep.subr.bf16.mxu0 0
    %1295 = vmatpush1.bf16.xpose.msra.mxu0 0
    %1296 = vmatprep.mubr.bf16.mxu0 0
    %1297 = vmatmul.mubr.bf16.gmra.mrb[0].mxu0 %v1259
    %v1298 = vpop.f32.mrb[0].mxu0
    %v1299 = vadd.f32 0.0, %v1298
    %v1300 = vpop.f32.mrb[0].mxu0
    %v1301 = vpop.f32.mrb[0].mxu0
    %v1302 = vpop.f32.mrb[0].mxu0
    %1303 = vdwg.mxu0
    %v1304 = vsel %vm141, %v1299, -inf
    %1305 = vmax.xlane.f32.xlu0 %v1304
    %v1306 = vpop.xlane.xlu0 %1305
    %v1307 = vsub.f32 %v1299, %v1306
    %v1308 = vmul.f32 %v1307, 1.442695
    %v1309 = vpow.pop %v1308
    %v1310 = vsel %vm141, %v1309, 0.0
    %1311 = vadd.xlane.f32.xlu0 %v1310
    %v1312 = vpop.xlane.xlu0 %1311
    %v1313 = vrcp.pop %v1312
    %v1314 = vmul.f32 %v1309, %v1313
    %v1315 = vpack.c.bf16 %v1314, %v1314
    %1316 = vrot.lane.b32.xlu0 %v778, 40
    %v1317 = vpop.permute.xlu0 %1316
    %v1319 = vsel %vm141, %v1315, 0
    %v1322 = vsel %vm205, %v1317, 0
    %1324 = vmatprep.subr.bf16.mxu0 0
    %1325 = vmatpush1.bf16.msra.mxu0 %v1322
    %1326 = vmatprep.subr.bf16.mxu0 0
    %1327 = vmatpush1.bf16.msra.mxu0 0
    %1328 = vmatprep.subr.bf16.mxu0 0
    %1329 = vmatpush1.bf16.msra.mxu0 0
    %1330 = vmatprep.subr.bf16.mxu0 0
    %1331 = vmatpush1.bf16.msra.mxu0 0
    %1332 = vmatprep.subr.bf16.mxu0 0
    %1333 = vmatpush1.bf16.msra.mxu0 0
    %1334 = vmatprep.subr.bf16.mxu0 0
    %1335 = vmatpush1.bf16.msra.mxu0 0
    %1336 = vmatprep.subr.bf16.mxu0 0
    %1337 = vmatpush1.bf16.msra.mxu0 0
    %1338 = vmatprep.subr.bf16.mxu0 0
    %1339 = vmatpush1.bf16.msra.mxu0 0
    %1340 = vmatprep.subr.bf16.mxu0 0
    %1341 = vmatpush1.bf16.msra.mxu0 0
    %1342 = vmatprep.subr.bf16.mxu0 0
    %1343 = vmatpush1.bf16.msra.mxu0 0
    %1344 = vmatprep.subr.bf16.mxu0 0
    %1345 = vmatpush1.bf16.msra.mxu0 0
    %1346 = vmatprep.subr.bf16.mxu0 0
    %1347 = vmatpush1.bf16.msra.mxu0 0
    %1348 = vmatprep.subr.bf16.mxu0 0
    %1349 = vmatpush1.bf16.msra.mxu0 0
    %1350 = vmatprep.subr.bf16.mxu0 0
    %1351 = vmatpush1.bf16.msra.mxu0 0
    %1352 = vmatprep.subr.bf16.mxu0 0
    %1353 = vmatpush1.bf16.msra.mxu0 0
    %1354 = vmatprep.subr.bf16.mxu0 0
    %1355 = vmatpush1.bf16.msra.mxu0 0
    %1356 = vmatprep.mubr.bf16.mxu0 0
    %1357 = vmatmul.mubr.bf16.gmra.mrb[0].mxu0 %v1319
    %v1358 = vpop.f32.mrb[0].mxu0
    %v1359 = vadd.f32 0.0, %v1358
    %v1360 = vpop.f32.mrb[0].mxu0
    %v1361 = vpop.f32.mrb[0].mxu0
    %v1362 = vpop.f32.mrb[0].mxu0
    %1363 = vdwg.mxu0
    %v1364 = vpack.c.bf16 %v1359, %v1359
    %v1365 = vld [vmem:[%s3 + $0xc] sm:$0xf]
    %v1367 = vsel %vm141, %v1364, 0
    %v1370 = vsel %vm205, %v1365, 0
    %1372 = vmatprep.subr.bf16.mxu0 0
    %1373 = vmatpush1.bf16.msra.mxu0 %v1370
    %1374 = vmatprep.subr.bf16.mxu0 0
    %1375 = vmatpush1.bf16.msra.mxu0 0
    %1376 = vmatprep.subr.bf16.mxu0 0
    %1377 = vmatpush1.bf16.msra.mxu0 0
    %1378 = vmatprep.subr.bf16.mxu0 0
    %1379 = vmatpush1.bf16.msra.mxu0 0
    %1380 = vmatprep.subr.bf16.mxu0 0
    %1381 = vmatpush1.bf16.msra.mxu0 0
    %1382 = vmatprep.subr.bf16.mxu0 0
    %1383 = vmatpush1.bf16.msra.mxu0 0
    %1384 = vmatprep.subr.bf16.mxu0 0
    %1385 = vmatpush1.bf16.msra.mxu0 0
    %1386 = vmatprep.subr.bf16.mxu0 0
    %1387 = vmatpush1.bf16.msra.mxu0 0
    %1388 = vmatprep.subr.bf16.mxu0 0
    %1389 = vmatpush1.bf16.msra.mxu0 0
    %1390 = vmatprep.subr.bf16.mxu0 0
    %1391 = vmatpush1.bf16.msra.mxu0 0
    %1392 = vmatprep.subr.bf16.mxu0 0
    %1393 = vmatpush1.bf16.msra.mxu0 0
    %1394 = vmatprep.subr.bf16.mxu0 0
    %1395 = vmatpush1.bf16.msra.mxu0 0
    %1396 = vmatprep.subr.bf16.mxu0 0
    %1397 = vmatpush1.bf16.msra.mxu0 0
    %1398 = vmatprep.subr.bf16.mxu0 0
    %1399 = vmatpush1.bf16.msra.mxu0 0
    %1400 = vmatprep.subr.bf16.mxu0 0
    %1401 = vmatpush1.bf16.msra.mxu0 0
    %1402 = vmatprep.subr.bf16.mxu0 0
    %1403 = vmatpush1.bf16.msra.mxu0 0
    %1404 = vmatprep.mubr.bf16.mxu0 0
    %1405 = vmatmul.mubr.bf16.gmra.mrb[0].mxu0 %v1367
    %v1406 = vpop.f32.mrb[0].mxu0
    %v1407 = vadd.f32 0.0, %v1406
    %v1408 = vpop.f32.mrb[0].mxu0
    %v1409 = vpop.f32.mrb[0].mxu0
    %v1410 = vpop.f32.mrb[0].mxu0
    %1411 = vdwg.mxu0
    %v1412 = vadd.f32 %v1253, %v1407
    %1413 = vst.msk [vmem:[#allocation3 + $0x8] sm:$0xff] %vm86, %v1412
    %v1414 = vld [vmem:[#allocation3] sm:$0xff]
    %v1415 = vld [vmem:[#allocation3 + $0x8] sm:$0xff]
    %v1416 = vld [vmem:[%s4] sm:$0x1]
    %v1418 = vlaneseq
    %v1419 = vshrl.u32 %v1418, 7
    %v1420 = vsub.s32 0, %v1419
    %v1421 = vrot.slane %v1416, %v1420
    %v1423 = vadd.f32 %v1414, %v1421
    %v1424 = vadd.f32 %v1415, %v1421
    %v1425 = vadd.f32 %v1423, %v60
    %v1426 = vadd.f32 %v1424, %v61
    %v1427 = vsel %vm86, %v1425, 0.0
    %1428 = vadd.xlane.f32.xlu0 %v1427
    %v1429 = vpop.xlane.xlu0 %1428
    %v1430 = vsel %vm86, %v1426, 0.0
    %1431 = vadd.xlane.f32.xlu0 %v1430
    %v1432 = vpop.xlane.xlu0 %1431
    %v1433 = vrcp.pop 32.0
    %v1434 = vmul.f32 %v1429, %v1433
    %v1435 = vmul.f32 %v1432, %v1433
    %v1436 = vsub.f32 %v1425, %v1434
    %v1437 = vsub.f32 %v1426, %v1435
    %v1438 = vmul.f32 %v1436, %v1436
    %v1439 = vmul.f32 %v1437, %v1437
    %v1440 = vsel %vm86, %v1438, 0.0
    %1441 = vadd.xlane.f32.xlu0 %v1440
    %v1442 = vpop.xlane.xlu0 %1441
    %v1443 = vsel %vm86, %v1439, 0.0
    %1444 = vadd.xlane.f32.xlu0 %v1443
    %v1445 = vpop.xlane.xlu0 %1444
    %v1446 = vmul.f32 %v1442, %v1433
    %v1447 = vmul.f32 %v1445, %v1433
    %v1448 = vadd.f32 %v1446, 1e-05
    %v1449 = vadd.f32 %v1447, 1e-05
    %v1450 = vrsqrt.pop %v1448
    %v1451 = vrsqrt.pop %v1449
    %v1452 = vmul.f32 %v1436, %v1450
    %v1453 = vmul.f32 %v1437, %v1451
    %v1454 = vld [vmem:[%s5] sm:$0x1]
    %v1456 = vlaneseq
    %v1457 = vshrl.u32 %v1456, 7
    %v1458 = vsub.s32 0, %v1457
    %v1459 = vrot.slane %v1454, %v1458
    %v1461 = vmul.f32 %v1459, %v1452
    %v1462 = vmul.f32 %v1459, %v1453
    %v1463 = vld [vmem:[%s6] sm:$0x1]
    %v1465 = vlaneseq
    %v1466 = vshrl.u32 %v1465, 7
    %v1467 = vsub.s32 0, %v1466
    %v1468 = vrot.slane %v1463, %v1467
    %v1470 = vadd.f32 %v1461, %v1468
    %v1471 = vadd.f32 %v1462, %v1468
    %v1472 = vpack.c.bf16 %v1471, %v1470
    %v1473 = vld [vmem:[#allocation4] sm:$0xf]
    %v1474 = vld [vmem:[#allocation4 + $0x4] sm:$0xf]
    %v1475 = vld [vmem:[#allocation4 + $0x8] sm:$0xf]
    %v1476 = vld [vmem:[#allocation4 + $0xc] sm:$0xf]
    %v1477 = vld [vmem:[%s8] sm:$0x1]
    %v1479 = vlaneseq
    %v1480 = vshrl.u32 %v1479, 7
    %v1481 = vsub.s32 0, %v1480
    %v1482 = vrot.slane %v1477, %v1481
    %v1488 = vunpack.c.l.b16 %v1473
    %v1489 = vunpack.c.l.b16 %v1474
    %v1490 = vunpack.c.l.b16 %v1475
    %v1491 = vunpack.c.l.b16 %v1476
    %v1492 = vpack.c.b16 %v1489, %v1488
    %v1493 = vpack.c.b16 %v1491, %v1490
    %v1497 = vsel %vm86, %v1472, 0
    %1499 = vmatprep.subr.bf16.mxu0 0
    %1500 = vmatpush1.bf16.msra.mxu0 %v1492
    %1501 = vmatprep.subr.bf16.mxu0 0
    %1502 = vmatpush1.bf16.msra.mxu0 %v1493
    %1503 = vmatprep.subr.bf16.mxu0 0
    %1504 = vmatpush1.bf16.msra.mxu0 0
    %1505 = vmatprep.subr.bf16.mxu0 0
    %1506 = vmatpush1.bf16.msra.mxu0 0
    %1507 = vmatprep.subr.bf16.mxu0 0
    %1508 = vmatpush1.bf16.msra.mxu0 0
    %1509 = vmatprep.subr.bf16.mxu0 0
    %1510 = vmatpush1.bf16.msra.mxu0 0
    %1511 = vmatprep.subr.bf16.mxu0 0
    %1512 = vmatpush1.bf16.msra.mxu0 0
    %1513 = vmatprep.subr.bf16.mxu0 0
    %1514 = vmatpush1.bf16.msra.mxu0 0
    %1515 = vmatprep.subr.bf16.mxu0 0
    %1516 = vmatpush1.bf16.msra.mxu0 0
    %1517 = vmatprep.subr.bf16.mxu0 0
    %1518 = vmatpush1.bf16.msra.mxu0 0
    %1519 = vmatprep.subr.bf16.mxu0 0
    %1520 = vmatpush1.bf16.msra.mxu0 0
    %1521 = vmatprep.subr.bf16.mxu0 0
    %1522 = vmatpush1.bf16.msra.mxu0 0
    %1523 = vmatprep.subr.bf16.mxu0 0
    %1524 = vmatpush1.bf16.msra.mxu0 0
    %1525 = vmatprep.subr.bf16.mxu0 0
    %1526 = vmatpush1.bf16.msra.mxu0 0
    %1527 = vmatprep.subr.bf16.mxu0 0
    %1528 = vmatpush1.bf16.msra.mxu0 0
    %1529 = vmatprep.subr.bf16.mxu0 0
    %1530 = vmatpush1.bf16.msra.mxu0 0
    %1531 = vmatprep.mubr.bf16.mxu0 0
    %1532 = vmatmul.mubr.bf16.gmra.mrb[0].mxu0 %v1497
    %v1533 = vpop.f32.mrb[0].mxu0
    %v1534 = vadd.f32 %v1482, %v1533
    %v1535 = vpop.f32.mrb[0].mxu0
    %v1536 = vpop.f32.mrb[0].mxu0
    %v1537 = vadd.f32 %v1482, %v1536
    %v1538 = vpop.f32.mrb[0].mxu0
    %1539 = vdwg.mxu0
    %v1540 = vmax.f32 %v1534, 0.0
    %v1541 = vmax.f32 %v1537, 0.0
    %v1542 = vpack.c.bf16 %v1541, %v1540
    %v1543 = vld [vmem:[%s9] sm:$0xf]
    %v1544 = vld [vmem:[%s9 + $0x4] sm:$0xf]
    %v1545 = vld [vmem:[%s9 + $0x8] sm:$0xf]
    %v1546 = vld [vmem:[%s9 + $0xc] sm:$0xf]
    %v1547 = vld [vmem:[%s9 + $0x10] sm:$0xf]
    %v1548 = vld [vmem:[%s9 + $0x14] sm:$0xf]
    %v1549 = vld [vmem:[%s9 + $0x18] sm:$0xf]
    %v1550 = vld [vmem:[%s9 + $0x1c] sm:$0xf]
    %v1551 = vld [vmem:[%s10] sm:$0x1]
    %v1553 = vlaneseq
    %v1554 = vshrl.u32 %v1553, 7
    %v1555 = vsub.s32 0, %v1554
    %v1556 = vrot.slane %v1551, %v1555
    %v1566 = vunpack.c.l.b16 %v1543
    %v1567 = vunpack.c.l.b16 %v1544
    %v1568 = vunpack.c.l.b16 %v1545
    %v1569 = vunpack.c.l.b16 %v1546
    %v1570 = vunpack.c.l.b16 %v1547
    %v1571 = vunpack.c.l.b16 %v1548
    %v1572 = vunpack.c.l.b16 %v1549
    %v1573 = vunpack.c.l.b16 %v1550
    %v1574 = vpack.c.b16 %v1567, %v1566
    %v1575 = vpack.c.b16 %v1569, %v1568
    %v1576 = vpack.c.b16 %v1571, %v1570
    %v1577 = vpack.c.b16 %v1573, %v1572
    %vm1582 = vcmask 523264
    %v1584 = vsel %vm1582, %v1542, 0
    %1586 = vmatprep.subr.bf16.mxu0 0
    %1587 = vmatpush1.bf16.msra.mxu0 %v1574
    %1588 = vmatprep.subr.bf16.mxu0 0
    %1589 = vmatpush1.bf16.msra.mxu0 %v1575
    %1590 = vmatprep.subr.bf16.mxu0 0
    %1591 = vmatpush1.bf16.msra.mxu0 %v1576
    %1592 = vmatprep.subr.bf16.mxu0 0
    %1593 = vmatpush1.bf16.msra.mxu0 %v1577
    %1594 = vmatprep.subr.bf16.mxu0 0
    %1595 = vmatpush1.bf16.msra.mxu0 0
    %1596 = vmatprep.subr.bf16.mxu0 0
    %1597 = vmatpush1.bf16.msra.mxu0 0
    %1598 = vmatprep.subr.bf16.mxu0 0
    %1599 = vmatpush1.bf16.msra.mxu0 0
    %1600 = vmatprep.subr.bf16.mxu0 0
    %1601 = vmatpush1.bf16.msra.mxu0 0
    %1602 = vmatprep.subr.bf16.mxu0 0
    %1603 = vmatpush1.bf16.msra.mxu0 0
    %1604 = vmatprep.subr.bf16.mxu0 0
    %1605 = vmatpush1.bf16.msra.mxu0 0
    %1606 = vmatprep.subr.bf16.mxu0 0
    %1607 = vmatpush1.bf16.msra.mxu0 0
    %1608 = vmatprep.subr.bf16.mxu0 0
    %1609 = vmatpush1.bf16.msra.mxu0 0
    %1610 = vmatprep.subr.bf16.mxu0 0
    %1611 = vmatpush1.bf16.msra.mxu0 0
    %1612 = vmatprep.subr.bf16.mxu0 0
    %1613 = vmatpush1.bf16.msra.mxu0 0
    %1614 = vmatprep.subr.bf16.mxu0 0
    %1615 = vmatpush1.bf16.msra.mxu0 0
    %1616 = vmatprep.subr.bf16.mxu0 0
    %1617 = vmatpush1.bf16.msra.mxu0 0
    %1618 = vmatprep.mubr.bf16.mxu0 0
    %1619 = vmatmul.mubr.bf16.gmra.mrb[0].mxu0 %v1584
    %v1620 = vpop.f32.mrb[0].mxu0
    %v1621 = vadd.f32 %v1556, %v1620
    %v1622 = vpop.f32.mrb[0].mxu0
    %v1623 = vpop.f32.mrb[0].mxu0
    %v1624 = vadd.f32 %v1556, %v1623
    %v1625 = vpop.f32.mrb[0].mxu0
    %1626 = vdwg.mxu0
    %v1627 = vadd.f32 %v1621, %v1470
    %v1628 = vadd.f32 %v1624, %v1471
    %v1629 = vsel %vm86, %v1627, 0.0
    %1630 = vadd.xlane.f32.xlu0 %v1629
    %v1631 = vpop.xlane.xlu0 %1630
    %v1632 = vsel %vm86, %v1628, 0.0
    %1633 = vadd.xlane.f32.xlu0 %v1632
    %v1634 = vpop.xlane.xlu0 %1633
    %v1635 = vmul.f32 %v1631, %v1433
    %v1636 = vmul.f32 %v1634, %v1433
    %v1637 = vsub.f32 %v1627, %v1635
    %v1638 = vsub.f32 %v1628, %v1636
    %v1639 = vmul.f32 %v1637, %v1637
    %v1640 = vmul.f32 %v1638, %v1638
    %v1641 = vsel %vm86, %v1639, 0.0
    %1642 = vadd.xlane.f32.xlu0 %v1641
    %v1643 = vpop.xlane.xlu0 %1642
    %v1644 = vsel %vm86, %v1640, 0.0
    %1645 = vadd.xlane.f32.xlu0 %v1644
    %v1646 = vpop.xlane.xlu0 %1645
    %v1647 = vmul.f32 %v1643, %v1433
    %v1648 = vmul.f32 %v1646, %v1433
    %v1649 = vadd.f32 %v1647, 1e-05
    %v1650 = vadd.f32 %v1648, 1e-05
    %v1651 = vrsqrt.pop %v1649
    %v1652 = vrsqrt.pop %v1650
    %v1653 = vmul.f32 %v1637, %v1651
    %v1654 = vmul.f32 %v1638, %v1652
    %v1655 = vld [vmem:[%s11] sm:$0x1]
    %v1657 = vlaneseq
    %v1658 = vshrl.u32 %v1657, 7
    %v1659 = vsub.s32 0, %v1658
    %v1660 = vrot.slane %v1655, %v1659
    %v1662 = vmul.f32 %v1660, %v1653
    %v1663 = vmul.f32 %v1660, %v1654
    %v1664 = vld [vmem:[%s12] sm:$0x1]
    %v1666 = vlaneseq
    %v1667 = vshrl.u32 %v1666, 7
    %v1668 = vsub.s32 0, %v1667
    %v1669 = vrot.slane %v1664, %v1668
    %v1671 = vadd.f32 %v1662, %v1669
    %v1672 = vadd.f32 %v1663, %v1669
    %1673 = vst.msk [vmem:[#allocation7] sm:$0xff] %vm86, %v1671
    %1674 = vst.msk [vmem:[#allocation7 + $0x8] sm:$0xff] %vm86, %v1672
    // Predicated region
    $region58: #{tpu_custom_call.1} parent=1 // pred_check
      _
    $region59: #{tpu_custom_call.1} parent=1 // pred_check_branch
      %1676 = sbr.rel (0) target = $region61
    $region60: #{tpu_custom_call.1} parent=1 // pred_region
      %s1678 = ssub.s32 256, 256
      %1679 = vsyncadd [#allocation6], %s1678
      %s1680 = sshll.u32 [#allocation7], 4
      %s1681 = int_to_ptr.vmem [resolvable:$true] %s1680
      %1686 = dma.vmem_to_hbm [thread:$0]  %s1681, 256, %s13, [#allocation6], 128, 128, 8
    $region61: #{tpu_custom_call.1} parent=1 // pred_fallthru
      _
    // Predicated region
    $region62: #{tpu_custom_call.1} parent=1 // pred_check
      _
    $region63: #{tpu_custom_call.1} parent=1 // pred_check_branch
      %1688 = sbr.rel (0) target = $region65
    $region64: #{tpu_custom_call.1} parent=1 // pred_region
      %1689 = dma.done [#allocation6], 256
    $region65: #{tpu_custom_call.1} parent=1 // pred_fallthru
      _
    %1690 = vsyncpa [#allocation5], 1
    %1691 = vsyncpa [#allocation6], 1

</llo_original>
